<compile_context>
chip_gen: v5e
topology: v5e:2x2
jax: 0.10.0
libtpu: 0.0.40
codegen_flags: <defaults>
</compile_context>

<pallas_src>
import functools
import math

import jax
import jax.numpy as jnp
from jax.experimental import pallas as pl
from jax.experimental.pallas import tpu as pltpu


def _round_up(x, m):
    return (x + m - 1) // m * m


def _cdiv(a, b):
    return -(-a // b)


def _pack_factor(c_in, c_out, n_rows):
    """Smallest p in {1,2,4,8} with p*c_out lane-dense (multiple of 128) and p | n_rows,
    preferring a p that also makes p*c_in lane-dense. Returns 1 if none qualifies."""
    candidates = [p for p in (1, 2, 4, 8)
                  if (p * c_out) % 128 == 0 and n_rows % p == 0]
    if not candidates:
        return 1
    both = [p for p in candidates if (p * c_in) % 128 == 0]
    return both[0] if both else candidates[0]


def _linear_kernel(x_ref, w_ref, b_ref, o_ref):
    # x_ref: (tm_p, p*c_in)   w_ref: (p*c_out, p*c_in)   b_ref: (1, p*c_out) f32
    # NT contraction: the MXU handles the transposed RHS natively (no W.T copy).
    acc = jax.lax.dot_general(
        x_ref[...],
        w_ref[...],
        dimension_numbers=(((1,), (1,)), ((), ())),
        preferred_element_type=jnp.float32,
    )
    o_ref[...] = (acc + b_ref[...]).astype(o_ref.dtype)


@functools.partial(jax.jit, static_argnames=("tile_m", "min_pallas_rows", "io_dtype"))
def template_pair_embedder(f, weight, bias, *, tile_m=8192, min_pallas_rows=4096,
                           io_dtype=None):
    """f: (..., c_in); weight: (c_out, c_in) [PyTorch convention]; bias: (c_out,).

    io_dtype: optional dtype (e.g. jnp.bfloat16) for the activation/weight loads and the
    output store; accumulation stays f32. Default None keeps f.dtype end to end.
    """
    lead = f.shape[:-1]
    c_in = f.shape[-1]
    c_out = weight.shape[0]
    M = math.prod(lead) if lead else 1

    in_dtype = jnp.dtype(io_dtype) if io_dtype is not None else f.dtype
    out_dtype = in_dtype

    # Tiny problem: a 1-step Pallas grid is pure overhead; let XLA fuse it.
    if M < min_pallas_rows:
        out = jnp.einsum("...c,oc->...o", f.astype(in_dtype), weight.astype(in_dtype),
                         preferred_element_type=jnp.float32)
        return (out + bias.astype(jnp.float32)).astype(out_dtype)

    x = f.reshape(M, c_in).astype(in_dtype)
    w = weight.astype(in_dtype)
    b32 = bias.astype(jnp.float32)     # pre-cast: no per-step VPU cast in the kernel

    # Row-packing factor for lane-dense loads/stores (must also divide M: no padding).
    p = _pack_factor(c_in, c_out, M)
    rows = M // p                      # packed row count
    row_align = 8                      # sublane alignment for the packed-row block dim

    # Row tile (in packed rows): as large as tile_m allows, capped at the problem size.
    tm_p = min(max(row_align, (tile_m // p) // row_align * row_align),
               _round_up(rows, row_align))
    steps = _cdiv(rows, tm_p)
    # v7x megacore: prefer an even number of "parallel" steps so both TCs stay busy.
    if steps > 1 and steps % 2 == 1:
        tm_p = max(row_align, _round_up(_cdiv(rows, steps + 1), row_align))
        steps = _cdiv(rows, tm_p)

    # Pack p consecutive rows into the channel axis (free: contiguous row-major reshape).
    x_packed = x.reshape(rows, p * c_in)
    if p == 1:
        w_packed = w                              # (c_out, c_in): no transpose copy
        b_packed = b32.reshape(1, c_out)
    else:
        # Block-diagonal weight kron(I_p, W): (p*c_out, p*c_in), kept in NT orientation.
        w_packed = jnp.kron(jnp.eye(p, dtype=w.dtype), w)
        b_packed = jnp.tile(b32, p).reshape(1, p * c_out)

    # VMEM limit: actual footprint (3 input bufs, 2 output bufs, 2 weight bufs) + margin,
    # capped well below v7x's 64 MiB physical VMEM.
    in_bytes = tm_p * p * c_in * jnp.dtype(in_dtype).itemsize
    out_bytes = tm_p * p * c_out * jnp.dtype(out_dtype).itemsize
    w_bytes = (p * c_out) * (p * c_in) * jnp.dtype(in_dtype).itemsize
    need = 3 * in_bytes + 2 * out_bytes + 2 * w_bytes + (4 << 20)
    vmem_limit = int(min(32 << 20, max(need, 16 << 20)))

    # Deeper pipelining on the streamed activation only (weight/bias are fetched once).
    if steps >= 3:
        act_spec = pl.BlockSpec((tm_p, p * c_in), lambda m: (m, 0),
                                pipeline_mode=pl.Buffered(3))
    else:
        act_spec = pl.BlockSpec((tm_p, p * c_in), lambda m: (m, 0))

    out_packed = pl.pallas_call(
        _linear_kernel,
        out_shape=jax.ShapeDtypeStruct((rows, p * c_out), out_dtype),
        grid_spec=pltpu.PrefetchScalarGridSpec(
            num_scalar_prefetch=0,
            grid=(steps,),
            in_specs=[
                act_spec,                                                # activation tile
                pl.BlockSpec((p * c_out, p * c_in), lambda m: (0, 0)),   # full weight
                pl.BlockSpec((1, p * c_out), lambda m: (0, 0)),          # bias (f32)
            ],
            out_specs=pl.BlockSpec((tm_p, p * c_out), lambda m: (m, 0)),
        ),
        compiler_params=pltpu.CompilerParams(
            dimension_semantics=("parallel",),
            vmem_limit_bytes=vmem_limit,
        ),
    )(x_packed, w_packed, b_packed)

    # (rows, p*c_out) row-major is exactly (M, c_out) row-major -> free reshape.
    return out_packed.reshape(*lead, c_out)


def init_linear_params(key, c_in, c_out, dtype=jnp.float32):
    """Deterministic init matching torch.nn.Linear's default (uniform +/- 1/sqrt(c_in))."""
    k_w, k_b = jax.random.split(key)
    bound = 1.0 / jnp.sqrt(jnp.asarray(c_in, dtype=jnp.float32))
    weight = jax.random.uniform(k_w, (c_out, c_in), dtype=dtype, minval=-bound, maxval=bound)
    bias = jax.random.uniform(k_b, (c_out,), dtype=dtype, minval=-bound, maxval=bound)
    return weight, bias


if __name__ == "__main__":
    key = jax.random.PRNGKey(0)
    k_p, k1, k2, k3, k4 = jax.random.split(key, 5)

    c_in, c_out = 32, 64
    weight, bias = init_linear_params(k_p, c_in, c_out)

    def check(f, atol=1e-4, rtol=1e-4, **kw):
        out = template_pair_embedder(f, weight, bias, **kw)
        jax.block_until_ready(out)
        ref = f @ weight.T + bias
        assert out.shape == f.shape[:-1] + (c_out,), out.shape
        out32 = out.astype(jnp.float32)
        err = float(jnp.max(jnp.abs(out32 - ref)))
        assert jnp.allclose(out32, ref, atol=atol, rtol=rtol), err

    # 1) Main Pallas path: M = 2*16*320 = 10240 rows, p=4 lane-dense packing,
    #    2 even "parallel" grid steps, masked ragged edge block (no pad/slice).
    f1 = jax.random.normal(k1, (2, 16, 320, c_in), dtype=jnp.float32)
    check(f1)

    # 2) Ragged multi-step grid: M = 4200 (p=4, 6 steps with a partial edge block).
    f2 = jax.random.normal(k2, (2, 3, 700, c_in), dtype=jnp.float32)
    check(f2, tile_m=1024)

    # 3) Tiny shape (M = 128): falls back to the fused XLA linear.
    f3 = jax.random.normal(k3, (2, 4, 16, c_in), dtype=jnp.float32)
    check(f3)

    # 4) Odd M (= 4361): lane-sparse p=1 path, single-step grid, no padding needed.
    f4 = jax.random.normal(k4, (1, 7, 623, c_in), dtype=jnp.float32)
    check(f4)

    # 5) Optional bf16 I/O path (halves HBM traffic; f32 MXU accumulation + f32 bias add).
    check(f1, atol=5e-2, rtol=5e-2, io_dtype=jnp.bfloat16)

    print("KERNEL_OK")
</pallas_src>

<mosaic_0001>
module attributes {stable_mosaic.version = 11 : i64} {
  func.func @_linear_kernel(%arg0: i32, %arg1: memref<2048x128xf32, #tpu.memory_space<vmem>>, %arg2: memref<256x128xf32, #tpu.memory_space<vmem>>, %arg3: memref<1x256xf32, #tpu.memory_space<vmem>>, %arg4: memref<2048x256xf32, #tpu.memory_space<vmem>>) attributes {dimension_semantics = [#tpu.dimension_semantics<parallel>], iteration_bounds = array<i64: 2>, scalar_prefetch = 0 : i64, scratch_operands = 0 : i64, tpu.core_type = #tpu.core_type<tc>, window_params = [{transform_indices = @transform_0, window_bounds = array<i64: 2048, 128>}, {pipeline_mode = #tpu.pipeline_mode<synchronous>, transform_indices = @transform_1, window_bounds = array<i64: 256, 128>}, {pipeline_mode = #tpu.pipeline_mode<synchronous>, transform_indices = @transform_2, window_bounds = array<i64: 1, 256>}, {transform_indices = @transform_3, window_bounds = array<i64: 2048, 256>}]} {
    %c0 = arith.constant 0 : index
    %c0_0 = arith.constant 0 : index
    %0 = vector.load %arg1[%c0, %c0_0] : memref<2048x128xf32, #tpu.memory_space<vmem>>, vector<2048x128xf32>
    %c0_1 = arith.constant 0 : index
    %c0_2 = arith.constant 0 : index
    %1 = vector.load %arg2[%c0_1, %c0_2] : memref<256x128xf32, #tpu.memory_space<vmem>>, vector<256x128xf32>
    %cst = arith.constant dense<0.000000e+00> : vector<2048x256xf32>
    %2 = tpu.matmul %0, %1, %cst {dimension_numbers = #tpu.dot_dimension_numbers<[1], [1], [0], [0], [0, 0, 1, 0], [], []>} : vector<2048x128xf32>, vector<256x128xf32>, vector<2048x256xf32> -> vector<2048x256xf32>
    %c0_3 = arith.constant 0 : index
    %c0_4 = arith.constant 0 : index
    %3 = vector.load %arg3[%c0_3, %c0_4] : memref<1x256xf32, #tpu.memory_space<vmem>>, vector<1x256xf32>
    %4 = vector.broadcast %3 : vector<1x256xf32> to vector<2048x256xf32>
    %5 = arith.addf %2, %4 : vector<2048x256xf32>
    %c0_5 = arith.constant 0 : index
    %c0_6 = arith.constant 0 : index
    %6 = vector.load %arg4[%c0_5, %c0_6] : memref<2048x256xf32, #tpu.memory_space<vmem>>, vector<2048x256xf32>
    tpu.vector_store %arg4[%c0_5, %c0_6], %5 {strides = array<i32>} : memref<2048x256xf32, #tpu.memory_space<vmem>>, vector<2048x256xf32>,
    return
  }
  func.func @transform_0(%arg0: i32) -> (i32, i32) {
    %c0_i32 = arith.constant 0 : i32
    %c0_i32_0 = arith.constant 0 : i32
    return %arg0, %c0_i32 : i32, i32
  }
  func.func @transform_1(%arg0: i32) -> (i32, i32) {
    %c0_i32 = arith.constant 0 : i32
    %c0_i32_0 = arith.constant 0 : i32
    %c0_i32_1 = arith.constant 0 : i32
    return %c0_i32, %c0_i32_0 : i32, i32
  }
  func.func @transform_2(%arg0: i32) -> (i32, i32) {
    %c0_i32 = arith.constant 0 : i32
    %c0_i32_0 = arith.constant 0 : i32
    %c0_i32_1 = arith.constant 0 : i32
    return %c0_i32, %c0_i32_0 : i32, i32
  }
  func.func @transform_3(%arg0: i32) -> (i32, i32) {
    %c0_i32 = arith.constant 0 : i32
    %c0_i32_0 = arith.constant 0 : i32
    return %arg0, %c0_i32 : i32, i32
  }
}

</mosaic_0001>

<llo_original>
// kernel: tile.9
$region0: #{tile.9}
  %s0 = inlined_call_operand.vmem [shape: f32[4,64], index: 0, kind: input, shape index: {}]
  %s1 = inlined_call_operand.vmem [shape: f32[1,256], index: 1, kind: output, shape index: {}]
  $region1: #{tile.9} parent=0
    #allocation0 [shape = 'u8[8192]{0}', space=vmem, size = 0x2000, scoped, tag = 'scoped mem for output reshape']
    #allocation1 [shape = 'u8[4096]{0}', space=vmem, size = 0x1000, scoped, tag = 'scoped mem for input reshape']
    %s3 = ssub.s32 16, 1
    %v4 = vld [vmem:[%s0] sm:%s3]
    %5 = vst [vmem:[#allocation1] sm:%s3] %v4
    %s6 = smov 3
    %v7 = vld [vmem:[#allocation1] ss:$2 sm:%s6]
    %vm8 = vcmask 523264
    %9 = vst.msk [vmem:[#allocation0] ss:$8 sm:$0x3] %vm8, %v7
    %s10 = scalar_lea.vmem [#allocation1], 1
    %s11 = smov 3
    %v12 = vld [vmem:[%s10] ss:$2 sm:%s11]
    %13 = vrot.lane.b32.xlu0 %v12, 64
    %v14 = vpop.permute.xlu0 %13
    %vm15 = vcmask 1048064
    %16 = vst.msk [vmem:[#allocation0] ss:$8 sm:$0x3] %vm15, %v14
    %s18 = ssub.s32 2, 1
    %v19 = vld [vmem:[#allocation0] sm:%s18]
    %s21 = ssub.s32 2, 1
    %22 = vst [vmem:[%s1] sm:%s21] %v19
    %s23 = scalar_lea.vmem [#allocation0], 8
    %v24 = vld [vmem:[%s23] sm:%s18]
    %s26 = ssub.s32 2, 1
    %s27 = scalar_lea.vmem %s1, 1
    %28 = vst [vmem:[%s27] sm:%s26] %v24

// kernel: tile.8
$region0: #{tile.8}
  #allocation2 [shape = 's32[1]{0}', space=sflag, size = 0x4, scoped, tag = 'scoped memory for tile.8']
  %s0 = inlined_call_operand.hbm [shape: f32[64], index: 0, kind: input, shape index: {}]
  %s1 = inlined_call_operand.vmem [shape: f32[4,64], index: 1, kind: output, shape index: {}]
  $region1: #{tile.8} parent=0
    #allocation0 [shape = 'u8[512]{0}', space=vmem, size = 0x400, scoped, tag = 'operand span for operand 0']
    #allocation1 [shape = 's32[1]{0}', space=sflag, size = 0x4, scoped, tag = 'scoped memory for tile.8']
    %2 = vsyncpa [#allocation1], 0
    // Predicated region
    $region2: #{tile.8} parent=1 // pred_check
      _
    $region3: #{tile.8} parent=1 // pred_check_branch
      %4 = sbr.rel (0) target = $region5
    $region4: #{tile.8} parent=1 // pred_region
      %6 = vsyncadd [#allocation1], 0
      %s8 = sshll.u32 %s0, 4
      %s9 = int_to_ptr.hbm [resolvable:$true] %s8
      %s10 = sshll.u32 [#allocation0], 4
      %s11 = int_to_ptr.vmem [resolvable:$true] %s10
      %13 = dma.hbm_to_vmem [thread:$0]  %s9, 16, %s11, [#allocation1]
    $region5: #{tile.8} parent=1 // pred_fallthru
      _
    // Predicated region
    $region6: #{tile.8} parent=1 // pred_check
      _
    $region7: #{tile.8} parent=1 // pred_check_branch
      %15 = sbr.rel (0) target = $region9
    $region8: #{tile.8} parent=1 // pred_region
      %17 = dma.done [#allocation1], 16
    $region9: #{tile.8} parent=1 // pred_fallthru
      _
    %v18 = vld [vmem:[#allocation0] ss:$0 sm:$0xff]
    %19 = vst [vmem:[%s1] sm:$0xf] %v18
    %20 = vsyncpa [#allocation1], 1

// kernel: template_pair_embedder.1
$region0: #{template_pair_embedder.1}
  #allocation0 [shape = 'u32[]', space=smem, size = 0x4, offset = 0x4, fixed_abs, tag = 'smem constant byte address 0x4 - core index']
  #allocation1 [shape = 'u32[72,128]{1,0:T(1,128)}', space=vmem, size = 0x9000, scoped, tag = 'internal scratch']
  %s0 = inlined_call_operand.vmem [shape: f32[2560,128], index: 0, kind: input, shape index: {}]
  %s1 = inlined_call_operand.vmem [shape: f32[256,128], index: 1, kind: input, shape index: {}]
  %s2 = inlined_call_operand.vmem [shape: f32[1,256], index: 2, kind: input, shape index: {}]
  %s3 = inlined_call_operand.vmem [shape: f32[2560,256], index: 3, kind: output, shape index: {}]
  %s4 = sld [smem:[#allocation0]]
  $region71: #{template_pair_embedder.1} parent=0
    _
  %s6 = ssub.s32 1, %s4
  %s7 = scalar_select 0, %s6, %s4
  $region1: #{template_pair_embedder.1} parent=0
    #allocation2 [shape = 'u8[4194304]{0}', space=vmem, size = 0x400000, scoped, tag = 'output window, operand 0']
    loop: start=0, step=1, limit=4
    $region2: #{template_pair_embedder.1} parent=1 // loop_pre_header
      _
    $region3: #{template_pair_embedder.1} parent=1 // loop_header
      %s9 = sphi 0, %s13
      %p10 = scmp.ge.s32.totalorder %s9, 4
      %s19 = sphi 0, %s21
      %s22 = sphi 0, %s19
      %s23 = sphi 0, %s22
      %s39 = sphi 0, %s23
      %s43 = sphi 0, %s43
      %s45 = sphi 0, %s43
      %s46 = sphi 0, %s45
      %s60 = sphi 0, %s46
      %s64 = sphi 0, %s64
      %s66 = sphi 0, %s64
      %s67 = sphi 0, %s66
      %s81 = sphi 0, %s67
      %s87 = sphi 0, %s89
      %s90 = sphi 0, %s87
      %s91 = sphi 0, %s90
      %s107 = sphi 0, %s91
    $region4: #{template_pair_embedder.1} parent=1 // loop_header_branch
      %12 = sbr.rel (%p10) target = $region8
    $region5: #{template_pair_embedder.1} parent=1 // loop_body
      %s14 = ssub.s32 %s9, 1
      %s15 = ssub.s32 %s9, 2
      %s16 = sadd.s32 %s9, 1
      %s17 = ssub.s32 %s9, %s16
      %p18 = scmp.eq.s32.totalorder %s17, 0
      %s20 = sadd.s32 %s19, 1
      %s21 = scalar_select %p18, %s19, %s20
      %p24 = pneg %p18
      %p25 = scmp.eq.s32.totalorder %s9, 1
      %p26 = por %p24, %p25
      %p27 = scmp.ne.s32.totalorder %s19, %s22
      %p28 = scmp.eq.s32.totalorder %s9, 0
      %p29 = por %p27, %p28
      %p30 = scmp.ne.s32.totalorder %s19, %s22
      %p31 = scmp.eq.s32.totalorder %s14, 1
      %p32 = por %p30, %p31
      %p33 = scmp.ne.s32.totalorder %s22, %s23
      %p34 = scmp.eq.s32.totalorder %s14, 0
      %p35 = por %p33, %p34
      %p36 = scmp.ne.s32.totalorder %s22, %s23
      %p37 = scmp.eq.s32.totalorder %s15, 1
      %p38 = por %p36, %p37
      %p40 = scmp.ne.s32.totalorder %s23, %s39
      %p41 = scmp.eq.s32.totalorder %s15, 0
      %p42 = por %p40, %p41
      %s44 = sadd.s32 %s43, 1
      %p47 = scmp.eq.s32.totalorder %s9, 1
      %p48 = scmp.ne.s32.totalorder %s43, %s45
      %p49 = scmp.eq.s32.totalorder %s9, 0
      %p50 = por %p48, %p49
      %p51 = scmp.ne.s32.totalorder %s43, %s45
      %p52 = scmp.eq.s32.totalorder %s14, 1
      %p53 = por %p51, %p52
      %p54 = scmp.ne.s32.totalorder %s45, %s46
      %p55 = scmp.eq.s32.totalorder %s14, 0
      %p56 = por %p54, %p55
      %p57 = scmp.ne.s32.totalorder %s45, %s46
      %p58 = scmp.eq.s32.totalorder %s15, 1
      %p59 = por %p57, %p58
      %p61 = scmp.ne.s32.totalorder %s46, %s60
      %p62 = scmp.eq.s32.totalorder %s15, 0
      %p63 = por %p61, %p62
      %s65 = sadd.s32 %s64, 1
      %p68 = scmp.eq.s32.totalorder %s9, 1
      %p69 = scmp.ne.s32.totalorder %s64, %s66
      %p70 = scmp.eq.s32.totalorder %s9, 0
      %p71 = por %p69, %p70
      %p72 = scmp.ne.s32.totalorder %s64, %s66
      %p73 = scmp.eq.s32.totalorder %s14, 1
      %p74 = por %p72, %p73
      %p75 = scmp.ne.s32.totalorder %s66, %s67
      %p76 = scmp.eq.s32.totalorder %s14, 0
      %p77 = por %p75, %p76
      %p78 = scmp.ne.s32.totalorder %s66, %s67
      %p79 = scmp.eq.s32.totalorder %s15, 1
      %p80 = por %p78, %p79
      %p82 = scmp.ne.s32.totalorder %s67, %s81
      %p83 = scmp.eq.s32.totalorder %s15, 0
      %p84 = por %p82, %p83
      %s85 = ssub.s32 %s9, %s16
      %p86 = scmp.eq.s32.totalorder %s85, 0
      %s88 = sadd.s32 %s87, 1
      %s89 = scalar_select %p86, %s87, %s88
      %p92 = pneg %p86
      %p93 = scmp.eq.s32.totalorder %s9, 1
      %p94 = por %p92, %p93
      %p95 = scmp.ne.s32.totalorder %s87, %s90
      %p96 = scmp.eq.s32.totalorder %s9, 0
      %p97 = por %p95, %p96
      %p98 = scmp.ne.s32.totalorder %s87, %s90
      %p99 = scmp.eq.s32.totalorder %s14, 1
      %p100 = por %p98, %p99
      %p101 = scmp.ne.s32.totalorder %s90, %s91
      %p102 = scmp.eq.s32.totalorder %s14, 0
      %p103 = por %p101, %p102
      %p104 = scmp.ne.s32.totalorder %s90, %s91
      %p105 = scmp.eq.s32.totalorder %s15, 1
      %p106 = por %p104, %p105
      %p108 = scmp.ne.s32.totalorder %s91, %s107
      %p109 = scmp.eq.s32.totalorder %s15, 0
      %p110 = por %p108, %p109
      %p111 = scmp.le.s32.totalorder 1, %s9
      %p112 = scmp.lt.s32.totalorder %s9, 3
      %p113 = pnand %p111, %p112
      %p114 = pneg %p113
      // Predicated region
      $region9: #{template_pair_embedder.1} parent=5 // pred_check
        _
      $region10: #{template_pair_embedder.1} parent=5 // pred_check_branch
        %116 = sbr.rel (%p113) target = $region12
      $region11: #{template_pair_embedder.1} parent=5 // pred_region
        %s117 = ssub.s32 %s9, 1
        // Predicated region
        $region13: #{template_pair_embedder.1} parent=11 // pred_check
          %p118 = pneg %p56
        $region14: #{template_pair_embedder.1} parent=11 // pred_check_branch
          %120 = sbr.rel (%p118) target = $region16
        $region15: #{template_pair_embedder.1} parent=11 // pred_region
          _
        $region16: #{template_pair_embedder.1} parent=11 // pred_fallthru
          _
        // Predicated region
        $region17: #{template_pair_embedder.1} parent=11 // pred_check
          %p121 = pneg %p77
        $region18: #{template_pair_embedder.1} parent=11 // pred_check_branch
          %123 = sbr.rel (%p121) target = $region20
        $region19: #{template_pair_embedder.1} parent=11 // pred_region
          _
        $region20: #{template_pair_embedder.1} parent=11 // pred_fallthru
          _
      $region12: #{template_pair_embedder.1} parent=5 // pred_fallthru
        _
      %p124 = scmp.lt.s32.totalorder %s9, 2
      // Predicated region
      $region21: #{template_pair_embedder.1} parent=5 // pred_check
        %p125 = pneg %p124
      $region22: #{template_pair_embedder.1} parent=5 // pred_check_branch
        %127 = sbr.rel (%p125) target = $region24
      $region23: #{template_pair_embedder.1} parent=5 // pred_region
        // Predicated region
        $region25: #{template_pair_embedder.1} parent=23 // pred_check
          %p128 = pneg %p29
        $region26: #{template_pair_embedder.1} parent=23 // pred_check_branch
          %130 = sbr.rel (%p128) target = $region28
        $region27: #{template_pair_embedder.1} parent=23 // pred_region
          %s131 = smul.u32 256, %s9
          %s132 = ssub.s32 320, %s131
          %p133 = scmp.lt.s32.totalorder %s132, 256
          %s134 = scalar_select %p133, %s132, 256
          %s135 = smul.u32 8, %s134
          %p136 = scmp.lt.s32.totalorder %s131, 319
          %s137 = scalar_select %p136, %s131, 319
          %s138 = smul.addr %s137, 8
          %s139 = scalar_lea.vmem %s0, %s138
          %s140 = smul.u32 256, %s9
          %s141 = ssub.s32 320, %s140
          %p142 = scmp.lt.s32.totalorder %s141, 256
          %s143 = scalar_select %p142, %s141, 256
          %s144 = smul.u32 8, %s143
        $region28: #{template_pair_embedder.1} parent=23 // pred_fallthru
          _
      $region24: #{template_pair_embedder.1} parent=5 // pred_fallthru
        _
      %p145 = scmp.le.s32.totalorder 1, %s9
      %p146 = scmp.lt.s32.totalorder %s9, 3
      %p147 = pnand %p145, %p146
      %p148 = pneg %p147
      // Predicated region
      $region29: #{template_pair_embedder.1} parent=5 // pred_check
        _
      $region30: #{template_pair_embedder.1} parent=5 // pred_check_branch
        %150 = sbr.rel (%p147) target = $region32
      $region31: #{template_pair_embedder.1} parent=5 // pred_region
        %s151 = ssub.s32 %s9, 1
        %s152 = smul.u32 256, %s14
        %s153 = ssub.s32 320, %s152
        %p154 = scmp.lt.s32.totalorder %s153, 256
        %s155 = scalar_select %p154, %s153, 256
        %s156 = smul.u32 8, %s155
        %p157 = scmp.lt.s32.totalorder %s152, 319
        %s158 = scalar_select %p157, %s152, 319
        %s159 = smul.addr %s158, 8
        %s160 = scalar_lea.vmem %s0, %s159
        %p161 = pneg %p35
        %p162 = pneg %p32
        %p163 = pneg %p56
        %p164 = pneg %p53
        %p165 = pneg %p77
        %p166 = pneg %p74
        %p167 = pneg %p103
        %p168 = pneg %p100
        %s169 = sand.u32 %s90, 1
        %s170 = sand.u32 %s90, 1
        %s171 = smul.addr %s170, 4096
        %s172 = scalar_lea.vmem [#allocation2], %s171
        %s173 = smul.u32 256, %s14
        %s174 = ssub.s32 320, %s173
        %p175 = scmp.lt.s32.totalorder %s174, 256
        %s176 = scalar_select %p175, %s174, 256
        %s177 = smul.u32 8, %s176
        %p178 = scmp.lt.s32.totalorder %s173, 319
        %s179 = scalar_select %p178, %s173, 319
        %s180 = smul.addr %s179, 8
        %s181 = scalar_lea.vmem %s0, %s180
        %s182 = smul.u32 256, %s14
        %s183 = ssub.s32 320, %s182
        %p184 = scmp.lt.s32.totalorder %s183, 256
        %s185 = scalar_select %p184, %s183, 256
        %s186 = smul.u32 8, %s185
        %s187 = smul.u32 256, %s14
        %s188 = ssub.s32 320, %s187
        %p189 = scmp.lt.s32.totalorder %s188, 256
        %s190 = scalar_select %p189, %s188, 256
        %s191 = smul.u32 8, %s190
        %s192 = smul.u32 %s191, 2
        %v193 = vld [vmem:[%s181] sm:$0xff]
        %v194 = vld [vmem:[%s181 + $0x8] sm:$0xff]
        %v195 = vld [vmem:[%s181 + $0x10] sm:$0xff]
        %v196 = vld [vmem:[%s181 + $0x18] sm:$0xff]
        %v197 = vld [vmem:[%s181 + $0x20] sm:$0xff]
        %v198 = vld [vmem:[%s181 + $0x28] sm:$0xff]
        %v199 = vld [vmem:[%s181 + $0x30] sm:$0xff]
        %v200 = vld [vmem:[%s181 + $0x38] sm:$0xff]
        %v201 = vld [vmem:[%s181 + $0x40] sm:$0xff]
        %v202 = vld [vmem:[%s181 + $0x48] sm:$0xff]
        %v203 = vld [vmem:[%s181 + $0x50] sm:$0xff]
        %v204 = vld [vmem:[%s181 + $0x58] sm:$0xff]
        %v205 = vld [vmem:[%s181 + $0x60] sm:$0xff]
        %v206 = vld [vmem:[%s181 + $0x68] sm:$0xff]
        %v207 = vld [vmem:[%s181 + $0x70] sm:$0xff]
        %v208 = vld [vmem:[%s181 + $0x78] sm:$0xff]
        %v209 = vld [vmem:[%s181 + $0x80] sm:$0xff]
        %v210 = vld [vmem:[%s181 + $0x88] sm:$0xff]
        %v211 = vld [vmem:[%s181 + $0x90] sm:$0xff]
        %v212 = vld [vmem:[%s181 + $0x98] sm:$0xff]
        %v213 = vld [vmem:[%s181 + $0xa0] sm:$0xff]
        %v214 = vld [vmem:[%s181 + $0xa8] sm:$0xff]
        %v215 = vld [vmem:[%s181 + $0xb0] sm:$0xff]
        %v216 = vld [vmem:[%s181 + $0xb8] sm:$0xff]
        %v217 = vld [vmem:[%s181 + $0xc0] sm:$0xff]
        %v218 = vld [vmem:[%s181 + $0xc8] sm:$0xff]
        %v219 = vld [vmem:[%s181 + $0xd0] sm:$0xff]
        %v220 = vld [vmem:[%s181 + $0xd8] sm:$0xff]
        %v221 = vld [vmem:[%s181 + $0xe0] sm:$0xff]
        %v222 = vld [vmem:[%s181 + $0xe8] sm:$0xff]
        %v223 = vld [vmem:[%s181 + $0xf0] sm:$0xff]
        %v224 = vld [vmem:[%s181 + $0xf8] sm:$0xff]
        %v225 = vld [vmem:[%s181 + $0x100] sm:$0xff]
        %v226 = vld [vmem:[%s181 + $0x108] sm:$0xff]
        %v227 = vld [vmem:[%s181 + $0x110] sm:$0xff]
        %v228 = vld [vmem:[%s181 + $0x118] sm:$0xff]
        %v229 = vld [vmem:[%s181 + $0x120] sm:$0xff]
        %v230 = vld [vmem:[%s181 + $0x128] sm:$0xff]
        %v231 = vld [vmem:[%s181 + $0x130] sm:$0xff]
        %v232 = vld [vmem:[%s181 + $0x138] sm:$0xff]
        %v233 = vld [vmem:[%s181 + $0x140] sm:$0xff]
        %v234 = vld [vmem:[%s181 + $0x148] sm:$0xff]
        %v235 = vld [vmem:[%s181 + $0x150] sm:$0xff]
        %v236 = vld [vmem:[%s181 + $0x158] sm:$0xff]
        %v237 = vld [vmem:[%s181 + $0x160] sm:$0xff]
        %v238 = vld [vmem:[%s181 + $0x168] sm:$0xff]
        %v239 = vld [vmem:[%s181 + $0x170] sm:$0xff]
        %v240 = vld [vmem:[%s181 + $0x178] sm:$0xff]
        %v241 = vld [vmem:[%s181 + $0x180] sm:$0xff]
        %v242 = vld [vmem:[%s181 + $0x188] sm:$0xff]
        %v243 = vld [vmem:[%s181 + $0x190] sm:$0xff]
        %v244 = vld [vmem:[%s181 + $0x198] sm:$0xff]
        %v245 = vld [vmem:[%s181 + $0x1a0] sm:$0xff]
        %v246 = vld [vmem:[%s181 + $0x1a8] sm:$0xff]
        %v247 = vld [vmem:[%s181 + $0x1b0] sm:$0xff]
        %v248 = vld [vmem:[%s181 + $0x1b8] sm:$0xff]
        %v249 = vld [vmem:[%s181 + $0x1c0] sm:$0xff]
        %v250 = vld [vmem:[%s181 + $0x1c8] sm:$0xff]
        %v251 = vld [vmem:[%s181 + $0x1d0] sm:$0xff]
        %v252 = vld [vmem:[%s181 + $0x1d8] sm:$0xff]
        %v253 = vld [vmem:[%s181 + $0x1e0] sm:$0xff]
        %v254 = vld [vmem:[%s181 + $0x1e8] sm:$0xff]
        %v255 = vld [vmem:[%s181 + $0x1f0] sm:$0xff]
        %v256 = vld [vmem:[%s181 + $0x1f8] sm:$0xff]
        %v257 = vld [vmem:[%s181 + $0x200] sm:$0xff]
        %v258 = vld [vmem:[%s181 + $0x208] sm:$0xff]
        %v259 = vld [vmem:[%s181 + $0x210] sm:$0xff]
        %v260 = vld [vmem:[%s181 + $0x218] sm:$0xff]
        %v261 = vld [vmem:[%s181 + $0x220] sm:$0xff]
        %v262 = vld [vmem:[%s181 + $0x228] sm:$0xff]
        %v263 = vld [vmem:[%s181 + $0x230] sm:$0xff]
        %v264 = vld [vmem:[%s181 + $0x238] sm:$0xff]
        %v265 = vld [vmem:[%s181 + $0x240] sm:$0xff]
        %v266 = vld [vmem:[%s181 + $0x248] sm:$0xff]
        %v267 = vld [vmem:[%s181 + $0x250] sm:$0xff]
        %v268 = vld [vmem:[%s181 + $0x258] sm:$0xff]
        %v269 = vld [vmem:[%s181 + $0x260] sm:$0xff]
        %v270 = vld [vmem:[%s181 + $0x268] sm:$0xff]
        %v271 = vld [vmem:[%s181 + $0x270] sm:$0xff]
        %v272 = vld [vmem:[%s181 + $0x278] sm:$0xff]
        %v273 = vld [vmem:[%s181 + $0x280] sm:$0xff]
        %v274 = vld [vmem:[%s181 + $0x288] sm:$0xff]
        %v275 = vld [vmem:[%s181 + $0x290] sm:$0xff]
        %v276 = vld [vmem:[%s181 + $0x298] sm:$0xff]
        %v277 = vld [vmem:[%s181 + $0x2a0] sm:$0xff]
        %v278 = vld [vmem:[%s181 + $0x2a8] sm:$0xff]
        %v279 = vld [vmem:[%s181 + $0x2b0] sm:$0xff]
        %v280 = vld [vmem:[%s181 + $0x2b8] sm:$0xff]
        %v281 = vld [vmem:[%s181 + $0x2c0] sm:$0xff]
        %v282 = vld [vmem:[%s181 + $0x2c8] sm:$0xff]
        %v283 = vld [vmem:[%s181 + $0x2d0] sm:$0xff]
        %v284 = vld [vmem:[%s181 + $0x2d8] sm:$0xff]
        %v285 = vld [vmem:[%s181 + $0x2e0] sm:$0xff]
        %v286 = vld [vmem:[%s181 + $0x2e8] sm:$0xff]
        %v287 = vld [vmem:[%s181 + $0x2f0] sm:$0xff]
        %v288 = vld [vmem:[%s181 + $0x2f8] sm:$0xff]
        %v289 = vld [vmem:[%s181 + $0x300] sm:$0xff]
        %v290 = vld [vmem:[%s181 + $0x308] sm:$0xff]
        %v291 = vld [vmem:[%s181 + $0x310] sm:$0xff]
        %v292 = vld [vmem:[%s181 + $0x318] sm:$0xff]
        %v293 = vld [vmem:[%s181 + $0x320] sm:$0xff]
        %v294 = vld [vmem:[%s181 + $0x328] sm:$0xff]
        %v295 = vld [vmem:[%s181 + $0x330] sm:$0xff]
        %v296 = vld [vmem:[%s181 + $0x338] sm:$0xff]
        %v297 = vld [vmem:[%s181 + $0x340] sm:$0xff]
        %v298 = vld [vmem:[%s181 + $0x348] sm:$0xff]
        %v299 = vld [vmem:[%s181 + $0x350] sm:$0xff]
        %v300 = vld [vmem:[%s181 + $0x358] sm:$0xff]
        %v301 = vld [vmem:[%s181 + $0x360] sm:$0xff]
        %v302 = vld [vmem:[%s181 + $0x368] sm:$0xff]
        %v303 = vld [vmem:[%s181 + $0x370] sm:$0xff]
        %v304 = vld [vmem:[%s181 + $0x378] sm:$0xff]
        %v305 = vld [vmem:[%s181 + $0x380] sm:$0xff]
        %v306 = vld [vmem:[%s181 + $0x388] sm:$0xff]
        %v307 = vld [vmem:[%s181 + $0x390] sm:$0xff]
        %v308 = vld [vmem:[%s181 + $0x398] sm:$0xff]
        %v309 = vld [vmem:[%s181 + $0x3a0] sm:$0xff]
        %v310 = vld [vmem:[%s181 + $0x3a8] sm:$0xff]
        %v311 = vld [vmem:[%s181 + $0x3b0] sm:$0xff]
        %v312 = vld [vmem:[%s181 + $0x3b8] sm:$0xff]
        %v313 = vld [vmem:[%s181 + $0x3c0] sm:$0xff]
        %v314 = vld [vmem:[%s181 + $0x3c8] sm:$0xff]
        %v315 = vld [vmem:[%s181 + $0x3d0] sm:$0xff]
        %v316 = vld [vmem:[%s181 + $0x3d8] sm:$0xff]
        %v317 = vld [vmem:[%s181 + $0x3e0] sm:$0xff]
        %v318 = vld [vmem:[%s181 + $0x3e8] sm:$0xff]
        %v319 = vld [vmem:[%s181 + $0x3f0] sm:$0xff]
        %v320 = vld [vmem:[%s181 + $0x3f8] sm:$0xff]
        %v321 = vld [vmem:[%s181 + $0x400] sm:$0xff]
        %v322 = vld [vmem:[%s181 + $0x408] sm:$0xff]
        %v323 = vld [vmem:[%s181 + $0x410] sm:$0xff]
        %v324 = vld [vmem:[%s181 + $0x418] sm:$0xff]
        %v325 = vld [vmem:[%s181 + $0x420] sm:$0xff]
        %v326 = vld [vmem:[%s181 + $0x428] sm:$0xff]
        %v327 = vld [vmem:[%s181 + $0x430] sm:$0xff]
        %v328 = vld [vmem:[%s181 + $0x438] sm:$0xff]
        %v329 = vld [vmem:[%s181 + $0x440] sm:$0xff]
        %v330 = vld [vmem:[%s181 + $0x448] sm:$0xff]
        %v331 = vld [vmem:[%s181 + $0x450] sm:$0xff]
        %v332 = vld [vmem:[%s181 + $0x458] sm:$0xff]
        %v333 = vld [vmem:[%s181 + $0x460] sm:$0xff]
        %v334 = vld [vmem:[%s181 + $0x468] sm:$0xff]
        %v335 = vld [vmem:[%s181 + $0x470] sm:$0xff]
        %v336 = vld [vmem:[%s181 + $0x478] sm:$0xff]
        %v337 = vld [vmem:[%s181 + $0x480] sm:$0xff]
        %v338 = vld [vmem:[%s181 + $0x488] sm:$0xff]
        %v339 = vld [vmem:[%s181 + $0x490] sm:$0xff]
        %v340 = vld [vmem:[%s181 + $0x498] sm:$0xff]
        %v341 = vld [vmem:[%s181 + $0x4a0] sm:$0xff]
        %v342 = vld [vmem:[%s181 + $0x4a8] sm:$0xff]
        %v343 = vld [vmem:[%s181 + $0x4b0] sm:$0xff]
        %v344 = vld [vmem:[%s181 + $0x4b8] sm:$0xff]
        %v345 = vld [vmem:[%s181 + $0x4c0] sm:$0xff]
        %v346 = vld [vmem:[%s181 + $0x4c8] sm:$0xff]
        %v347 = vld [vmem:[%s181 + $0x4d0] sm:$0xff]
        %v348 = vld [vmem:[%s181 + $0x4d8] sm:$0xff]
        %v349 = vld [vmem:[%s181 + $0x4e0] sm:$0xff]
        %v350 = vld [vmem:[%s181 + $0x4e8] sm:$0xff]
        %v351 = vld [vmem:[%s181 + $0x4f0] sm:$0xff]
        %v352 = vld [vmem:[%s181 + $0x4f8] sm:$0xff]
        %v353 = vld [vmem:[%s181 + $0x500] sm:$0xff]
        %v354 = vld [vmem:[%s181 + $0x508] sm:$0xff]
        %v355 = vld [vmem:[%s181 + $0x510] sm:$0xff]
        %v356 = vld [vmem:[%s181 + $0x518] sm:$0xff]
        %v357 = vld [vmem:[%s181 + $0x520] sm:$0xff]
        %v358 = vld [vmem:[%s181 + $0x528] sm:$0xff]
        %v359 = vld [vmem:[%s181 + $0x530] sm:$0xff]
        %v360 = vld [vmem:[%s181 + $0x538] sm:$0xff]
        %v361 = vld [vmem:[%s181 + $0x540] sm:$0xff]
        %v362 = vld [vmem:[%s181 + $0x548] sm:$0xff]
        %v363 = vld [vmem:[%s181 + $0x550] sm:$0xff]
        %v364 = vld [vmem:[%s181 + $0x558] sm:$0xff]
        %v365 = vld [vmem:[%s181 + $0x560] sm:$0xff]
        %v366 = vld [vmem:[%s181 + $0x568] sm:$0xff]
        %v367 = vld [vmem:[%s181 + $0x570] sm:$0xff]
        %v368 = vld [vmem:[%s181 + $0x578] sm:$0xff]
        %v369 = vld [vmem:[%s181 + $0x580] sm:$0xff]
        %v370 = vld [vmem:[%s181 + $0x588] sm:$0xff]
        %v371 = vld [vmem:[%s181 + $0x590] sm:$0xff]
        %v372 = vld [vmem:[%s181 + $0x598] sm:$0xff]
        %v373 = vld [vmem:[%s181 + $0x5a0] sm:$0xff]
        %v374 = vld [vmem:[%s181 + $0x5a8] sm:$0xff]
        %v375 = vld [vmem:[%s181 + $0x5b0] sm:$0xff]
        %v376 = vld [vmem:[%s181 + $0x5b8] sm:$0xff]
        %v377 = vld [vmem:[%s181 + $0x5c0] sm:$0xff]
        %v378 = vld [vmem:[%s181 + $0x5c8] sm:$0xff]
        %v379 = vld [vmem:[%s181 + $0x5d0] sm:$0xff]
        %v380 = vld [vmem:[%s181 + $0x5d8] sm:$0xff]
        %v381 = vld [vmem:[%s181 + $0x5e0] sm:$0xff]
        %v382 = vld [vmem:[%s181 + $0x5e8] sm:$0xff]
        %v383 = vld [vmem:[%s181 + $0x5f0] sm:$0xff]
        %v384 = vld [vmem:[%s181 + $0x5f8] sm:$0xff]
        %v385 = vld [vmem:[%s181 + $0x600] sm:$0xff]
        %v386 = vld [vmem:[%s181 + $0x608] sm:$0xff]
        %v387 = vld [vmem:[%s181 + $0x610] sm:$0xff]
        %v388 = vld [vmem:[%s181 + $0x618] sm:$0xff]
        %v389 = vld [vmem:[%s181 + $0x620] sm:$0xff]
        %v390 = vld [vmem:[%s181 + $0x628] sm:$0xff]
        %v391 = vld [vmem:[%s181 + $0x630] sm:$0xff]
        %v392 = vld [vmem:[%s181 + $0x638] sm:$0xff]
        %v393 = vld [vmem:[%s181 + $0x640] sm:$0xff]
        %v394 = vld [vmem:[%s181 + $0x648] sm:$0xff]
        %v395 = vld [vmem:[%s181 + $0x650] sm:$0xff]
        %v396 = vld [vmem:[%s181 + $0x658] sm:$0xff]
        %v397 = vld [vmem:[%s181 + $0x660] sm:$0xff]
        %v398 = vld [vmem:[%s181 + $0x668] sm:$0xff]
        %v399 = vld [vmem:[%s181 + $0x670] sm:$0xff]
        %v400 = vld [vmem:[%s181 + $0x678] sm:$0xff]
        %v401 = vld [vmem:[%s181 + $0x680] sm:$0xff]
        %v402 = vld [vmem:[%s181 + $0x688] sm:$0xff]
        %v403 = vld [vmem:[%s181 + $0x690] sm:$0xff]
        %v404 = vld [vmem:[%s181 + $0x698] sm:$0xff]
        %v405 = vld [vmem:[%s181 + $0x6a0] sm:$0xff]
        %v406 = vld [vmem:[%s181 + $0x6a8] sm:$0xff]
        %v407 = vld [vmem:[%s181 + $0x6b0] sm:$0xff]
        %v408 = vld [vmem:[%s181 + $0x6b8] sm:$0xff]
        %v409 = vld [vmem:[%s181 + $0x6c0] sm:$0xff]
        %v410 = vld [vmem:[%s181 + $0x6c8] sm:$0xff]
        %v411 = vld [vmem:[%s181 + $0x6d0] sm:$0xff]
        %v412 = vld [vmem:[%s181 + $0x6d8] sm:$0xff]
        %v413 = vld [vmem:[%s181 + $0x6e0] sm:$0xff]
        %v414 = vld [vmem:[%s181 + $0x6e8] sm:$0xff]
        %v415 = vld [vmem:[%s181 + $0x6f0] sm:$0xff]
        %v416 = vld [vmem:[%s181 + $0x6f8] sm:$0xff]
        %v417 = vld [vmem:[%s181 + $0x700] sm:$0xff]
        %v418 = vld [vmem:[%s181 + $0x708] sm:$0xff]
        %v419 = vld [vmem:[%s181 + $0x710] sm:$0xff]
        %v420 = vld [vmem:[%s181 + $0x718] sm:$0xff]
        %v421 = vld [vmem:[%s181 + $0x720] sm:$0xff]
        %v422 = vld [vmem:[%s181 + $0x728] sm:$0xff]
        %v423 = vld [vmem:[%s181 + $0x730] sm:$0xff]
        %v424 = vld [vmem:[%s181 + $0x738] sm:$0xff]
        %v425 = vld [vmem:[%s181 + $0x740] sm:$0xff]
        %v426 = vld [vmem:[%s181 + $0x748] sm:$0xff]
        %v427 = vld [vmem:[%s181 + $0x750] sm:$0xff]
        %v428 = vld [vmem:[%s181 + $0x758] sm:$0xff]
        %v429 = vld [vmem:[%s181 + $0x760] sm:$0xff]
        %v430 = vld [vmem:[%s181 + $0x768] sm:$0xff]
        %v431 = vld [vmem:[%s181 + $0x770] sm:$0xff]
        %v432 = vld [vmem:[%s181 + $0x778] sm:$0xff]
        %v433 = vld [vmem:[%s181 + $0x780] sm:$0xff]
        %v434 = vld [vmem:[%s181 + $0x788] sm:$0xff]
        %v435 = vld [vmem:[%s181 + $0x790] sm:$0xff]
        %v436 = vld [vmem:[%s181 + $0x798] sm:$0xff]
        %v437 = vld [vmem:[%s181 + $0x7a0] sm:$0xff]
        %v438 = vld [vmem:[%s181 + $0x7a8] sm:$0xff]
        %v439 = vld [vmem:[%s181 + $0x7b0] sm:$0xff]
        %v440 = vld [vmem:[%s181 + $0x7b8] sm:$0xff]
        %v441 = vld [vmem:[%s181 + $0x7c0] sm:$0xff]
        %v442 = vld [vmem:[%s181 + $0x7c8] sm:$0xff]
        %v443 = vld [vmem:[%s181 + $0x7d0] sm:$0xff]
        %v444 = vld [vmem:[%s181 + $0x7d8] sm:$0xff]
        %v445 = vld [vmem:[%s181 + $0x7e0] sm:$0xff]
        %v446 = vld [vmem:[%s181 + $0x7e8] sm:$0xff]
        %v447 = vld [vmem:[%s181 + $0x7f0] sm:$0xff]
        %v448 = vld [vmem:[%s181 + $0x7f8] sm:$0xff]
        %v449 = vld [vmem:[%s1] sm:$0xff]
        %v450 = vld [vmem:[%s1 + $0x8] sm:$0xff]
        %v451 = vld [vmem:[%s1 + $0x10] sm:$0xff]
        %v452 = vld [vmem:[%s1 + $0x18] sm:$0xff]
        %v453 = vld [vmem:[%s1 + $0x20] sm:$0xff]
        %v454 = vld [vmem:[%s1 + $0x28] sm:$0xff]
        %v455 = vld [vmem:[%s1 + $0x30] sm:$0xff]
        %v456 = vld [vmem:[%s1 + $0x38] sm:$0xff]
        %v457 = vld [vmem:[%s1 + $0x40] sm:$0xff]
        %v458 = vld [vmem:[%s1 + $0x48] sm:$0xff]
        %v459 = vld [vmem:[%s1 + $0x50] sm:$0xff]
        %v460 = vld [vmem:[%s1 + $0x58] sm:$0xff]
        %v461 = vld [vmem:[%s1 + $0x60] sm:$0xff]
        %v462 = vld [vmem:[%s1 + $0x68] sm:$0xff]
        %v463 = vld [vmem:[%s1 + $0x70] sm:$0xff]
        %v464 = vld [vmem:[%s1 + $0x78] sm:$0xff]
        %v465 = vld [vmem:[%s1 + $0x80] sm:$0xff]
        %v466 = vld [vmem:[%s1 + $0x88] sm:$0xff]
        %v467 = vld [vmem:[%s1 + $0x90] sm:$0xff]
        %v468 = vld [vmem:[%s1 + $0x98] sm:$0xff]
        %v469 = vld [vmem:[%s1 + $0xa0] sm:$0xff]
        %v470 = vld [vmem:[%s1 + $0xa8] sm:$0xff]
        %v471 = vld [vmem:[%s1 + $0xb0] sm:$0xff]
        %v472 = vld [vmem:[%s1 + $0xb8] sm:$0xff]
        %v473 = vld [vmem:[%s1 + $0xc0] sm:$0xff]
        %v474 = vld [vmem:[%s1 + $0xc8] sm:$0xff]
        %v475 = vld [vmem:[%s1 + $0xd0] sm:$0xff]
        %v476 = vld [vmem:[%s1 + $0xd8] sm:$0xff]
        %v477 = vld [vmem:[%s1 + $0xe0] sm:$0xff]
        %v478 = vld [vmem:[%s1 + $0xe8] sm:$0xff]
        %v479 = vld [vmem:[%s1 + $0xf0] sm:$0xff]
        %v480 = vld [vmem:[%s1 + $0xf8] sm:$0xff]
        %v481 = vld [vmem:[%s2] sm:$0x3]
        %v483 = vperm.slane %v481, 0
        %v484 = vperm.slane %v481, 1
        %487 = vmatpush.xpose.msra.mxu0 %v464
        %488 = vmatpush.xpose.msra.mxu0 %v463
        %489 = vmatpush.xpose.msra.mxu0 %v462
        %490 = vmatpush.xpose.msra.mxu0 %v461
        %491 = vmatpush.xpose.msra.mxu0 %v460
        %492 = vmatpush.xpose.msra.mxu0 %v459
        %493 = vmatpush.xpose.msra.mxu0 %v458
        %494 = vmatpush.xpose.msra.mxu0 %v457
        %495 = vmatpush.xpose.msra.mxu0 %v456
        %496 = vmatpush.xpose.msra.mxu0 %v455
        %497 = vmatpush.xpose.msra.mxu0 %v454
        %498 = vmatpush.xpose.msra.mxu0 %v453
        %499 = vmatpush.xpose.msra.mxu0 %v452
        %500 = vmatpush.xpose.msra.mxu0 %v451
        %501 = vmatpush.xpose.msra.mxu0 %v450
        %502 = vmatpush.xpose.msra.mxu0 %v449
        %503 = vmatmul.f32.gmra.mxu0 %v193
        %v504 = vpop.f32.mrf.mxu0
        %v505 = vadd.f32 %v483, %v504
        %506 = vmatmul.f32.gmra.mxu0 %v194
        %v507 = vpop.f32.mrf.mxu0
        %v508 = vadd.f32 %v483, %v507
        %509 = vmatmul.f32.gmra.mxu0 %v195
        %v510 = vpop.f32.mrf.mxu0
        %v511 = vadd.f32 %v483, %v510
        %512 = vmatmul.f32.gmra.mxu0 %v196
        %v513 = vpop.f32.mrf.mxu0
        %v514 = vadd.f32 %v483, %v513
        %515 = vmatmul.f32.gmra.mxu0 %v197
        %v516 = vpop.f32.mrf.mxu0
        %v517 = vadd.f32 %v483, %v516
        %518 = vmatmul.f32.gmra.mxu0 %v198
        %v519 = vpop.f32.mrf.mxu0
        %v520 = vadd.f32 %v483, %v519
        %521 = vmatmul.f32.gmra.mxu0 %v199
        %v522 = vpop.f32.mrf.mxu0
        %v523 = vadd.f32 %v483, %v522
        %524 = vmatmul.f32.gmra.mxu0 %v200
        %v525 = vpop.f32.mrf.mxu0
        %v526 = vadd.f32 %v483, %v525
        %527 = vmatmul.f32.gmra.mxu0 %v201
        %v528 = vpop.f32.mrf.mxu0
        %v529 = vadd.f32 %v483, %v528
        %530 = vmatmul.f32.gmra.mxu0 %v202
        %v531 = vpop.f32.mrf.mxu0
        %v532 = vadd.f32 %v483, %v531
        %533 = vmatmul.f32.gmra.mxu0 %v203
        %v534 = vpop.f32.mrf.mxu0
        %v535 = vadd.f32 %v483, %v534
        %536 = vmatmul.f32.gmra.mxu0 %v204
        %v537 = vpop.f32.mrf.mxu0
        %v538 = vadd.f32 %v483, %v537
        %539 = vmatmul.f32.gmra.mxu0 %v205
        %v540 = vpop.f32.mrf.mxu0
        %v541 = vadd.f32 %v483, %v540
        %542 = vmatmul.f32.gmra.mxu0 %v206
        %v543 = vpop.f32.mrf.mxu0
        %v544 = vadd.f32 %v483, %v543
        %545 = vmatmul.f32.gmra.mxu0 %v207
        %v546 = vpop.f32.mrf.mxu0
        %v547 = vadd.f32 %v483, %v546
        %548 = vmatmul.f32.gmra.mxu0 %v208
        %v549 = vpop.f32.mrf.mxu0
        %v550 = vadd.f32 %v483, %v549
        %551 = vmatmul.f32.gmra.mxu0 %v209
        %v552 = vpop.f32.mrf.mxu0
        %v553 = vadd.f32 %v483, %v552
        %554 = vmatmul.f32.gmra.mxu0 %v210
        %v555 = vpop.f32.mrf.mxu0
        %v556 = vadd.f32 %v483, %v555
        %557 = vmatmul.f32.gmra.mxu0 %v211
        %v558 = vpop.f32.mrf.mxu0
        %v559 = vadd.f32 %v483, %v558
        %560 = vmatmul.f32.gmra.mxu0 %v212
        %v561 = vpop.f32.mrf.mxu0
        %v562 = vadd.f32 %v483, %v561
        %563 = vmatmul.f32.gmra.mxu0 %v213
        %v564 = vpop.f32.mrf.mxu0
        %v565 = vadd.f32 %v483, %v564
        %566 = vmatmul.f32.gmra.mxu0 %v214
        %v567 = vpop.f32.mrf.mxu0
        %v568 = vadd.f32 %v483, %v567
        %569 = vmatmul.f32.gmra.mxu0 %v215
        %v570 = vpop.f32.mrf.mxu0
        %v571 = vadd.f32 %v483, %v570
        %572 = vmatmul.f32.gmra.mxu0 %v216
        %v573 = vpop.f32.mrf.mxu0
        %v574 = vadd.f32 %v483, %v573
        %575 = vmatmul.f32.gmra.mxu0 %v217
        %v576 = vpop.f32.mrf.mxu0
        %v577 = vadd.f32 %v483, %v576
        %578 = vmatmul.f32.gmra.mxu0 %v218
        %v579 = vpop.f32.mrf.mxu0
        %v580 = vadd.f32 %v483, %v579
        %581 = vmatmul.f32.gmra.mxu0 %v219
        %v582 = vpop.f32.mrf.mxu0
        %v583 = vadd.f32 %v483, %v582
        %584 = vmatmul.f32.gmra.mxu0 %v220
        %v585 = vpop.f32.mrf.mxu0
        %v586 = vadd.f32 %v483, %v585
        %587 = vmatmul.f32.gmra.mxu0 %v221
        %v588 = vpop.f32.mrf.mxu0
        %v589 = vadd.f32 %v483, %v588
        %590 = vmatmul.f32.gmra.mxu0 %v222
        %v591 = vpop.f32.mrf.mxu0
        %v592 = vadd.f32 %v483, %v591
        %593 = vmatmul.f32.gmra.mxu0 %v223
        %v594 = vpop.f32.mrf.mxu0
        %v595 = vadd.f32 %v483, %v594
        %596 = vmatmul.f32.gmra.mxu0 %v224
        %v597 = vpop.f32.mrf.mxu0
        %v598 = vadd.f32 %v483, %v597
        %599 = vmatmul.f32.gmra.mxu0 %v225
        %v600 = vpop.f32.mrf.mxu0
        %v601 = vadd.f32 %v483, %v600
        %602 = vmatmul.f32.gmra.mxu0 %v226
        %v603 = vpop.f32.mrf.mxu0
        %v604 = vadd.f32 %v483, %v603
        %605 = vmatmul.f32.gmra.mxu0 %v227
        %v606 = vpop.f32.mrf.mxu0
        %v607 = vadd.f32 %v483, %v606
        %608 = vmatmul.f32.gmra.mxu0 %v228
        %v609 = vpop.f32.mrf.mxu0
        %v610 = vadd.f32 %v483, %v609
        %611 = vmatmul.f32.gmra.mxu0 %v229
        %v612 = vpop.f32.mrf.mxu0
        %v613 = vadd.f32 %v483, %v612
        %614 = vmatmul.f32.gmra.mxu0 %v230
        %v615 = vpop.f32.mrf.mxu0
        %v616 = vadd.f32 %v483, %v615
        %617 = vmatmul.f32.gmra.mxu0 %v231
        %v618 = vpop.f32.mrf.mxu0
        %v619 = vadd.f32 %v483, %v618
        %620 = vmatmul.f32.gmra.mxu0 %v232
        %v621 = vpop.f32.mrf.mxu0
        %v622 = vadd.f32 %v483, %v621
        %623 = vmatmul.f32.gmra.mxu0 %v233
        %v624 = vpop.f32.mrf.mxu0
        %v625 = vadd.f32 %v483, %v624
        %626 = vmatmul.f32.gmra.mxu0 %v234
        %v627 = vpop.f32.mrf.mxu0
        %v628 = vadd.f32 %v483, %v627
        %629 = vmatmul.f32.gmra.mxu0 %v235
        %v630 = vpop.f32.mrf.mxu0
        %v631 = vadd.f32 %v483, %v630
        %632 = vmatmul.f32.gmra.mxu0 %v236
        %v633 = vpop.f32.mrf.mxu0
        %v634 = vadd.f32 %v483, %v633
        %635 = vmatmul.f32.gmra.mxu0 %v237
        %v636 = vpop.f32.mrf.mxu0
        %v637 = vadd.f32 %v483, %v636
        %638 = vmatmul.f32.gmra.mxu0 %v238
        %v639 = vpop.f32.mrf.mxu0
        %v640 = vadd.f32 %v483, %v639
        %641 = vmatmul.f32.gmra.mxu0 %v239
        %v642 = vpop.f32.mrf.mxu0
        %v643 = vadd.f32 %v483, %v642
        %644 = vmatmul.f32.gmra.mxu0 %v240
        %v645 = vpop.f32.mrf.mxu0
        %v646 = vadd.f32 %v483, %v645
        %647 = vmatmul.f32.gmra.mxu0 %v241
        %v648 = vpop.f32.mrf.mxu0
        %v649 = vadd.f32 %v483, %v648
        %650 = vmatmul.f32.gmra.mxu0 %v242
        %v651 = vpop.f32.mrf.mxu0
        %v652 = vadd.f32 %v483, %v651
        %653 = vmatmul.f32.gmra.mxu0 %v243
        %v654 = vpop.f32.mrf.mxu0
        %v655 = vadd.f32 %v483, %v654
        %656 = vmatmul.f32.gmra.mxu0 %v244
        %v657 = vpop.f32.mrf.mxu0
        %v658 = vadd.f32 %v483, %v657
        %659 = vmatmul.f32.gmra.mxu0 %v245
        %v660 = vpop.f32.mrf.mxu0
        %v661 = vadd.f32 %v483, %v660
        %662 = vmatmul.f32.gmra.mxu0 %v246
        %v663 = vpop.f32.mrf.mxu0
        %v664 = vadd.f32 %v483, %v663
        %665 = vmatmul.f32.gmra.mxu0 %v247
        %v666 = vpop.f32.mrf.mxu0
        %v667 = vadd.f32 %v483, %v666
        %668 = vmatmul.f32.gmra.mxu0 %v248
        %v669 = vpop.f32.mrf.mxu0
        %v670 = vadd.f32 %v483, %v669
        %671 = vmatmul.f32.gmra.mxu0 %v249
        %v672 = vpop.f32.mrf.mxu0
        %v673 = vadd.f32 %v483, %v672
        %674 = vmatmul.f32.gmra.mxu0 %v250
        %v675 = vpop.f32.mrf.mxu0
        %v676 = vadd.f32 %v483, %v675
        %677 = vmatmul.f32.gmra.mxu0 %v251
        %v678 = vpop.f32.mrf.mxu0
        %v679 = vadd.f32 %v483, %v678
        %680 = vmatmul.f32.gmra.mxu0 %v252
        %v681 = vpop.f32.mrf.mxu0
        %v682 = vadd.f32 %v483, %v681
        %683 = vmatmul.f32.gmra.mxu0 %v253
        %v684 = vpop.f32.mrf.mxu0
        %v685 = vadd.f32 %v483, %v684
        %686 = vmatmul.f32.gmra.mxu0 %v254
        %v687 = vpop.f32.mrf.mxu0
        %v688 = vadd.f32 %v483, %v687
        %689 = vmatmul.f32.gmra.mxu0 %v255
        %v690 = vpop.f32.mrf.mxu0
        %v691 = vadd.f32 %v483, %v690
        %692 = vmatmul.f32.gmra.mxu0 %v256
        %v693 = vpop.f32.mrf.mxu0
        %v694 = vadd.f32 %v483, %v693
        %695 = vmatmul.f32.gmra.mxu0 %v257
        %v696 = vpop.f32.mrf.mxu0
        %v697 = vadd.f32 %v483, %v696
        %698 = vmatmul.f32.gmra.mxu0 %v258
        %v699 = vpop.f32.mrf.mxu0
        %v700 = vadd.f32 %v483, %v699
        %701 = vmatmul.f32.gmra.mxu0 %v259
        %v702 = vpop.f32.mrf.mxu0
        %v703 = vadd.f32 %v483, %v702
        %704 = vmatmul.f32.gmra.mxu0 %v260
        %v705 = vpop.f32.mrf.mxu0
        %v706 = vadd.f32 %v483, %v705
        %707 = vmatmul.f32.gmra.mxu0 %v261
        %v708 = vpop.f32.mrf.mxu0
        %v709 = vadd.f32 %v483, %v708
        %710 = vmatmul.f32.gmra.mxu0 %v262
        %v711 = vpop.f32.mrf.mxu0
        %v712 = vadd.f32 %v483, %v711
        %713 = vmatmul.f32.gmra.mxu0 %v263
        %v714 = vpop.f32.mrf.mxu0
        %v715 = vadd.f32 %v483, %v714
        %716 = vmatmul.f32.gmra.mxu0 %v264
        %v717 = vpop.f32.mrf.mxu0
        %v718 = vadd.f32 %v483, %v717
        %719 = vmatmul.f32.gmra.mxu0 %v265
        %v720 = vpop.f32.mrf.mxu0
        %v721 = vadd.f32 %v483, %v720
        %722 = vmatmul.f32.gmra.mxu0 %v266
        %v723 = vpop.f32.mrf.mxu0
        %v724 = vadd.f32 %v483, %v723
        %725 = vmatmul.f32.gmra.mxu0 %v267
        %v726 = vpop.f32.mrf.mxu0
        %v727 = vadd.f32 %v483, %v726
        %728 = vmatmul.f32.gmra.mxu0 %v268
        %v729 = vpop.f32.mrf.mxu0
        %v730 = vadd.f32 %v483, %v729
        %731 = vmatmul.f32.gmra.mxu0 %v269
        %v732 = vpop.f32.mrf.mxu0
        %v733 = vadd.f32 %v483, %v732
        %734 = vmatmul.f32.gmra.mxu0 %v270
        %v735 = vpop.f32.mrf.mxu0
        %v736 = vadd.f32 %v483, %v735
        %737 = vmatmul.f32.gmra.mxu0 %v271
        %v738 = vpop.f32.mrf.mxu0
        %v739 = vadd.f32 %v483, %v738
        %740 = vmatmul.f32.gmra.mxu0 %v272
        %v741 = vpop.f32.mrf.mxu0
        %v742 = vadd.f32 %v483, %v741
        %743 = vmatmul.f32.gmra.mxu0 %v273
        %v744 = vpop.f32.mrf.mxu0
        %v745 = vadd.f32 %v483, %v744
        %746 = vmatmul.f32.gmra.mxu0 %v274
        %v747 = vpop.f32.mrf.mxu0
        %v748 = vadd.f32 %v483, %v747
        %749 = vmatmul.f32.gmra.mxu0 %v275
        %v750 = vpop.f32.mrf.mxu0
        %v751 = vadd.f32 %v483, %v750
        %752 = vmatmul.f32.gmra.mxu0 %v276
        %v753 = vpop.f32.mrf.mxu0
        %v754 = vadd.f32 %v483, %v753
        %755 = vmatmul.f32.gmra.mxu0 %v277
        %v756 = vpop.f32.mrf.mxu0
        %v757 = vadd.f32 %v483, %v756
        %758 = vmatmul.f32.gmra.mxu0 %v278
        %v759 = vpop.f32.mrf.mxu0
        %v760 = vadd.f32 %v483, %v759
        %761 = vmatmul.f32.gmra.mxu0 %v279
        %v762 = vpop.f32.mrf.mxu0
        %v763 = vadd.f32 %v483, %v762
        %764 = vmatmul.f32.gmra.mxu0 %v280
        %v765 = vpop.f32.mrf.mxu0
        %v766 = vadd.f32 %v483, %v765
        %767 = vmatmul.f32.gmra.mxu0 %v281
        %v768 = vpop.f32.mrf.mxu0
        %v769 = vadd.f32 %v483, %v768
        %770 = vmatmul.f32.gmra.mxu0 %v282
        %v771 = vpop.f32.mrf.mxu0
        %v772 = vadd.f32 %v483, %v771
        %773 = vmatmul.f32.gmra.mxu0 %v283
        %v774 = vpop.f32.mrf.mxu0
        %v775 = vadd.f32 %v483, %v774
        %776 = vmatmul.f32.gmra.mxu0 %v284
        %v777 = vpop.f32.mrf.mxu0
        %v778 = vadd.f32 %v483, %v777
        %779 = vmatmul.f32.gmra.mxu0 %v285
        %v780 = vpop.f32.mrf.mxu0
        %v781 = vadd.f32 %v483, %v780
        %782 = vmatmul.f32.gmra.mxu0 %v286
        %v783 = vpop.f32.mrf.mxu0
        %v784 = vadd.f32 %v483, %v783
        %785 = vmatmul.f32.gmra.mxu0 %v287
        %v786 = vpop.f32.mrf.mxu0
        %v787 = vadd.f32 %v483, %v786
        %788 = vmatmul.f32.gmra.mxu0 %v288
        %v789 = vpop.f32.mrf.mxu0
        %v790 = vadd.f32 %v483, %v789
        %791 = vmatmul.f32.gmra.mxu0 %v289
        %v792 = vpop.f32.mrf.mxu0
        %v793 = vadd.f32 %v483, %v792
        %794 = vmatmul.f32.gmra.mxu0 %v290
        %v795 = vpop.f32.mrf.mxu0
        %v796 = vadd.f32 %v483, %v795
        %797 = vmatmul.f32.gmra.mxu0 %v291
        %v798 = vpop.f32.mrf.mxu0
        %v799 = vadd.f32 %v483, %v798
        %800 = vmatmul.f32.gmra.mxu0 %v292
        %v801 = vpop.f32.mrf.mxu0
        %v802 = vadd.f32 %v483, %v801
        %803 = vmatmul.f32.gmra.mxu0 %v293
        %v804 = vpop.f32.mrf.mxu0
        %v805 = vadd.f32 %v483, %v804
        %806 = vmatmul.f32.gmra.mxu0 %v294
        %v807 = vpop.f32.mrf.mxu0
        %v808 = vadd.f32 %v483, %v807
        %809 = vmatmul.f32.gmra.mxu0 %v295
        %v810 = vpop.f32.mrf.mxu0
        %v811 = vadd.f32 %v483, %v810
        %812 = vmatmul.f32.gmra.mxu0 %v296
        %v813 = vpop.f32.mrf.mxu0
        %v814 = vadd.f32 %v483, %v813
        %815 = vmatmul.f32.gmra.mxu0 %v297
        %v816 = vpop.f32.mrf.mxu0
        %v817 = vadd.f32 %v483, %v816
        %818 = vmatmul.f32.gmra.mxu0 %v298
        %v819 = vpop.f32.mrf.mxu0
        %v820 = vadd.f32 %v483, %v819
        %821 = vmatmul.f32.gmra.mxu0 %v299
        %v822 = vpop.f32.mrf.mxu0
        %v823 = vadd.f32 %v483, %v822
        %824 = vmatmul.f32.gmra.mxu0 %v300
        %v825 = vpop.f32.mrf.mxu0
        %v826 = vadd.f32 %v483, %v825
        %827 = vmatmul.f32.gmra.mxu0 %v301
        %v828 = vpop.f32.mrf.mxu0
        %v829 = vadd.f32 %v483, %v828
        %830 = vmatmul.f32.gmra.mxu0 %v302
        %v831 = vpop.f32.mrf.mxu0
        %v832 = vadd.f32 %v483, %v831
        %833 = vmatmul.f32.gmra.mxu0 %v303
        %v834 = vpop.f32.mrf.mxu0
        %v835 = vadd.f32 %v483, %v834
        %836 = vmatmul.f32.gmra.mxu0 %v304
        %v837 = vpop.f32.mrf.mxu0
        %v838 = vadd.f32 %v483, %v837
        %839 = vmatmul.f32.gmra.mxu0 %v305
        %v840 = vpop.f32.mrf.mxu0
        %v841 = vadd.f32 %v483, %v840
        %842 = vmatmul.f32.gmra.mxu0 %v306
        %v843 = vpop.f32.mrf.mxu0
        %v844 = vadd.f32 %v483, %v843
        %845 = vmatmul.f32.gmra.mxu0 %v307
        %v846 = vpop.f32.mrf.mxu0
        %v847 = vadd.f32 %v483, %v846
        %848 = vmatmul.f32.gmra.mxu0 %v308
        %v849 = vpop.f32.mrf.mxu0
        %v850 = vadd.f32 %v483, %v849
        %851 = vmatmul.f32.gmra.mxu0 %v309
        %v852 = vpop.f32.mrf.mxu0
        %v853 = vadd.f32 %v483, %v852
        %854 = vmatmul.f32.gmra.mxu0 %v310
        %v855 = vpop.f32.mrf.mxu0
        %v856 = vadd.f32 %v483, %v855
        %857 = vmatmul.f32.gmra.mxu0 %v311
        %v858 = vpop.f32.mrf.mxu0
        %v859 = vadd.f32 %v483, %v858
        %860 = vmatmul.f32.gmra.mxu0 %v312
        %v861 = vpop.f32.mrf.mxu0
        %v862 = vadd.f32 %v483, %v861
        %863 = vmatmul.f32.gmra.mxu0 %v313
        %v864 = vpop.f32.mrf.mxu0
        %v865 = vadd.f32 %v483, %v864
        %866 = vmatmul.f32.gmra.mxu0 %v314
        %v867 = vpop.f32.mrf.mxu0
        %v868 = vadd.f32 %v483, %v867
        %869 = vmatmul.f32.gmra.mxu0 %v315
        %v870 = vpop.f32.mrf.mxu0
        %v871 = vadd.f32 %v483, %v870
        %872 = vmatmul.f32.gmra.mxu0 %v316
        %v873 = vpop.f32.mrf.mxu0
        %v874 = vadd.f32 %v483, %v873
        %875 = vmatmul.f32.gmra.mxu0 %v317
        %v876 = vpop.f32.mrf.mxu0
        %v877 = vadd.f32 %v483, %v876
        %878 = vmatmul.f32.gmra.mxu0 %v318
        %v879 = vpop.f32.mrf.mxu0
        %v880 = vadd.f32 %v483, %v879
        %881 = vmatmul.f32.gmra.mxu0 %v319
        %v882 = vpop.f32.mrf.mxu0
        %v883 = vadd.f32 %v483, %v882
        %884 = vmatmul.f32.gmra.mxu0 %v320
        %v885 = vpop.f32.mrf.mxu0
        %v886 = vadd.f32 %v483, %v885
        %887 = vmatmul.f32.gmra.mxu0 %v321
        %v888 = vpop.f32.mrf.mxu0
        %v889 = vadd.f32 %v483, %v888
        %890 = vmatmul.f32.gmra.mxu0 %v322
        %v891 = vpop.f32.mrf.mxu0
        %v892 = vadd.f32 %v483, %v891
        %893 = vmatmul.f32.gmra.mxu0 %v323
        %v894 = vpop.f32.mrf.mxu0
        %v895 = vadd.f32 %v483, %v894
        %896 = vmatmul.f32.gmra.mxu0 %v324
        %v897 = vpop.f32.mrf.mxu0
        %v898 = vadd.f32 %v483, %v897
        %899 = vmatmul.f32.gmra.mxu0 %v325
        %v900 = vpop.f32.mrf.mxu0
        %v901 = vadd.f32 %v483, %v900
        %902 = vmatmul.f32.gmra.mxu0 %v326
        %v903 = vpop.f32.mrf.mxu0
        %v904 = vadd.f32 %v483, %v903
        %905 = vmatmul.f32.gmra.mxu0 %v327
        %v906 = vpop.f32.mrf.mxu0
        %v907 = vadd.f32 %v483, %v906
        %908 = vmatmul.f32.gmra.mxu0 %v328
        %v909 = vpop.f32.mrf.mxu0
        %v910 = vadd.f32 %v483, %v909
        %911 = vmatmul.f32.gmra.mxu0 %v329
        %v912 = vpop.f32.mrf.mxu0
        %v913 = vadd.f32 %v483, %v912
        %914 = vmatmul.f32.gmra.mxu0 %v330
        %v915 = vpop.f32.mrf.mxu0
        %v916 = vadd.f32 %v483, %v915
        %917 = vmatmul.f32.gmra.mxu0 %v331
        %v918 = vpop.f32.mrf.mxu0
        %v919 = vadd.f32 %v483, %v918
        %920 = vmatmul.f32.gmra.mxu0 %v332
        %v921 = vpop.f32.mrf.mxu0
        %v922 = vadd.f32 %v483, %v921
        %923 = vmatmul.f32.gmra.mxu0 %v333
        %v924 = vpop.f32.mrf.mxu0
        %v925 = vadd.f32 %v483, %v924
        %926 = vmatmul.f32.gmra.mxu0 %v334
        %v927 = vpop.f32.mrf.mxu0
        %v928 = vadd.f32 %v483, %v927
        %929 = vmatmul.f32.gmra.mxu0 %v335
        %v930 = vpop.f32.mrf.mxu0
        %v931 = vadd.f32 %v483, %v930
        %932 = vmatmul.f32.gmra.mxu0 %v336
        %v933 = vpop.f32.mrf.mxu0
        %v934 = vadd.f32 %v483, %v933
        %935 = vmatmul.f32.gmra.mxu0 %v337
        %v936 = vpop.f32.mrf.mxu0
        %v937 = vadd.f32 %v483, %v936
        %938 = vmatmul.f32.gmra.mxu0 %v338
        %v939 = vpop.f32.mrf.mxu0
        %v940 = vadd.f32 %v483, %v939
        %941 = vmatmul.f32.gmra.mxu0 %v339
        %v942 = vpop.f32.mrf.mxu0
        %v943 = vadd.f32 %v483, %v942
        %944 = vmatmul.f32.gmra.mxu0 %v340
        %v945 = vpop.f32.mrf.mxu0
        %v946 = vadd.f32 %v483, %v945
        %947 = vmatmul.f32.gmra.mxu0 %v341
        %v948 = vpop.f32.mrf.mxu0
        %v949 = vadd.f32 %v483, %v948
        %950 = vmatmul.f32.gmra.mxu0 %v342
        %v951 = vpop.f32.mrf.mxu0
        %v952 = vadd.f32 %v483, %v951
        %953 = vmatmul.f32.gmra.mxu0 %v343
        %v954 = vpop.f32.mrf.mxu0
        %v955 = vadd.f32 %v483, %v954
        %956 = vmatmul.f32.gmra.mxu0 %v344
        %v957 = vpop.f32.mrf.mxu0
        %v958 = vadd.f32 %v483, %v957
        %959 = vmatmul.f32.gmra.mxu0 %v345
        %v960 = vpop.f32.mrf.mxu0
        %v961 = vadd.f32 %v483, %v960
        %962 = vmatmul.f32.gmra.mxu0 %v346
        %v963 = vpop.f32.mrf.mxu0
        %v964 = vadd.f32 %v483, %v963
        %965 = vmatmul.f32.gmra.mxu0 %v347
        %v966 = vpop.f32.mrf.mxu0
        %v967 = vadd.f32 %v483, %v966
        %968 = vmatmul.f32.gmra.mxu0 %v348
        %v969 = vpop.f32.mrf.mxu0
        %v970 = vadd.f32 %v483, %v969
        %971 = vmatmul.f32.gmra.mxu0 %v349
        %v972 = vpop.f32.mrf.mxu0
        %v973 = vadd.f32 %v483, %v972
        %974 = vmatmul.f32.gmra.mxu0 %v350
        %v975 = vpop.f32.mrf.mxu0
        %v976 = vadd.f32 %v483, %v975
        %977 = vmatmul.f32.gmra.mxu0 %v351
        %v978 = vpop.f32.mrf.mxu0
        %v979 = vadd.f32 %v483, %v978
        %980 = vmatmul.f32.gmra.mxu0 %v352
        %v981 = vpop.f32.mrf.mxu0
        %v982 = vadd.f32 %v483, %v981
        %983 = vmatmul.f32.gmra.mxu0 %v353
        %v984 = vpop.f32.mrf.mxu0
        %v985 = vadd.f32 %v483, %v984
        %986 = vmatmul.f32.gmra.mxu0 %v354
        %v987 = vpop.f32.mrf.mxu0
        %v988 = vadd.f32 %v483, %v987
        %989 = vmatmul.f32.gmra.mxu0 %v355
        %v990 = vpop.f32.mrf.mxu0
        %v991 = vadd.f32 %v483, %v990
        %992 = vmatmul.f32.gmra.mxu0 %v356
        %v993 = vpop.f32.mrf.mxu0
        %v994 = vadd.f32 %v483, %v993
        %995 = vmatmul.f32.gmra.mxu0 %v357
        %v996 = vpop.f32.mrf.mxu0
        %v997 = vadd.f32 %v483, %v996
        %998 = vmatmul.f32.gmra.mxu0 %v358
        %v999 = vpop.f32.mrf.mxu0
        %v1000 = vadd.f32 %v483, %v999
        %1001 = vmatmul.f32.gmra.mxu0 %v359
        %v1002 = vpop.f32.mrf.mxu0
        %v1003 = vadd.f32 %v483, %v1002
        %1004 = vmatmul.f32.gmra.mxu0 %v360
        %v1005 = vpop.f32.mrf.mxu0
        %v1006 = vadd.f32 %v483, %v1005
        %1007 = vmatmul.f32.gmra.mxu0 %v361
        %v1008 = vpop.f32.mrf.mxu0
        %v1009 = vadd.f32 %v483, %v1008
        %1010 = vmatmul.f32.gmra.mxu0 %v362
        %v1011 = vpop.f32.mrf.mxu0
        %v1012 = vadd.f32 %v483, %v1011
        %1013 = vmatmul.f32.gmra.mxu0 %v363
        %v1014 = vpop.f32.mrf.mxu0
        %v1015 = vadd.f32 %v483, %v1014
        %1016 = vmatmul.f32.gmra.mxu0 %v364
        %v1017 = vpop.f32.mrf.mxu0
        %v1018 = vadd.f32 %v483, %v1017
        %1019 = vmatmul.f32.gmra.mxu0 %v365
        %v1020 = vpop.f32.mrf.mxu0
        %v1021 = vadd.f32 %v483, %v1020
        %1022 = vmatmul.f32.gmra.mxu0 %v366
        %v1023 = vpop.f32.mrf.mxu0
        %v1024 = vadd.f32 %v483, %v1023
        %1025 = vmatmul.f32.gmra.mxu0 %v367
        %v1026 = vpop.f32.mrf.mxu0
        %v1027 = vadd.f32 %v483, %v1026
        %1028 = vmatmul.f32.gmra.mxu0 %v368
        %v1029 = vpop.f32.mrf.mxu0
        %v1030 = vadd.f32 %v483, %v1029
        %1031 = vmatmul.f32.gmra.mxu0 %v369
        %v1032 = vpop.f32.mrf.mxu0
        %v1033 = vadd.f32 %v483, %v1032
        %1034 = vmatmul.f32.gmra.mxu0 %v370
        %v1035 = vpop.f32.mrf.mxu0
        %v1036 = vadd.f32 %v483, %v1035
        %1037 = vmatmul.f32.gmra.mxu0 %v371
        %v1038 = vpop.f32.mrf.mxu0
        %v1039 = vadd.f32 %v483, %v1038
        %1040 = vmatmul.f32.gmra.mxu0 %v372
        %v1041 = vpop.f32.mrf.mxu0
        %v1042 = vadd.f32 %v483, %v1041
        %1043 = vmatmul.f32.gmra.mxu0 %v373
        %v1044 = vpop.f32.mrf.mxu0
        %v1045 = vadd.f32 %v483, %v1044
        %1046 = vmatmul.f32.gmra.mxu0 %v374
        %v1047 = vpop.f32.mrf.mxu0
        %v1048 = vadd.f32 %v483, %v1047
        %1049 = vmatmul.f32.gmra.mxu0 %v375
        %v1050 = vpop.f32.mrf.mxu0
        %v1051 = vadd.f32 %v483, %v1050
        %1052 = vmatmul.f32.gmra.mxu0 %v376
        %v1053 = vpop.f32.mrf.mxu0
        %v1054 = vadd.f32 %v483, %v1053
        %1055 = vmatmul.f32.gmra.mxu0 %v377
        %v1056 = vpop.f32.mrf.mxu0
        %v1057 = vadd.f32 %v483, %v1056
        %1058 = vmatmul.f32.gmra.mxu0 %v378
        %v1059 = vpop.f32.mrf.mxu0
        %v1060 = vadd.f32 %v483, %v1059
        %1061 = vmatmul.f32.gmra.mxu0 %v379
        %v1062 = vpop.f32.mrf.mxu0
        %v1063 = vadd.f32 %v483, %v1062
        %1064 = vmatmul.f32.gmra.mxu0 %v380
        %v1065 = vpop.f32.mrf.mxu0
        %v1066 = vadd.f32 %v483, %v1065
        %1067 = vmatmul.f32.gmra.mxu0 %v381
        %v1068 = vpop.f32.mrf.mxu0
        %v1069 = vadd.f32 %v483, %v1068
        %1070 = vmatmul.f32.gmra.mxu0 %v382
        %v1071 = vpop.f32.mrf.mxu0
        %v1072 = vadd.f32 %v483, %v1071
        %1073 = vmatmul.f32.gmra.mxu0 %v383
        %v1074 = vpop.f32.mrf.mxu0
        %v1075 = vadd.f32 %v483, %v1074
        %1076 = vmatmul.f32.gmra.mxu0 %v384
        %v1077 = vpop.f32.mrf.mxu0
        %v1078 = vadd.f32 %v483, %v1077
        %1079 = vmatmul.f32.gmra.mxu0 %v385
        %v1080 = vpop.f32.mrf.mxu0
        %v1081 = vadd.f32 %v483, %v1080
        %1082 = vmatmul.f32.gmra.mxu0 %v386
        %v1083 = vpop.f32.mrf.mxu0
        %v1084 = vadd.f32 %v483, %v1083
        %1085 = vmatmul.f32.gmra.mxu0 %v387
        %v1086 = vpop.f32.mrf.mxu0
        %v1087 = vadd.f32 %v483, %v1086
        %1088 = vmatmul.f32.gmra.mxu0 %v388
        %v1089 = vpop.f32.mrf.mxu0
        %v1090 = vadd.f32 %v483, %v1089
        %1091 = vmatmul.f32.gmra.mxu0 %v389
        %v1092 = vpop.f32.mrf.mxu0
        %v1093 = vadd.f32 %v483, %v1092
        %1094 = vmatmul.f32.gmra.mxu0 %v390
        %v1095 = vpop.f32.mrf.mxu0
        %v1096 = vadd.f32 %v483, %v1095
        %1097 = vmatmul.f32.gmra.mxu0 %v391
        %v1098 = vpop.f32.mrf.mxu0
        %v1099 = vadd.f32 %v483, %v1098
        %1100 = vmatmul.f32.gmra.mxu0 %v392
        %v1101 = vpop.f32.mrf.mxu0
        %v1102 = vadd.f32 %v483, %v1101
        %1103 = vmatmul.f32.gmra.mxu0 %v393
        %v1104 = vpop.f32.mrf.mxu0
        %v1105 = vadd.f32 %v483, %v1104
        %1106 = vmatmul.f32.gmra.mxu0 %v394
        %v1107 = vpop.f32.mrf.mxu0
        %v1108 = vadd.f32 %v483, %v1107
        %1109 = vmatmul.f32.gmra.mxu0 %v395
        %v1110 = vpop.f32.mrf.mxu0
        %v1111 = vadd.f32 %v483, %v1110
        %1112 = vmatmul.f32.gmra.mxu0 %v396
        %v1113 = vpop.f32.mrf.mxu0
        %v1114 = vadd.f32 %v483, %v1113
        %1115 = vmatmul.f32.gmra.mxu0 %v397
        %v1116 = vpop.f32.mrf.mxu0
        %v1117 = vadd.f32 %v483, %v1116
        %1118 = vmatmul.f32.gmra.mxu0 %v398
        %v1119 = vpop.f32.mrf.mxu0
        %v1120 = vadd.f32 %v483, %v1119
        %1121 = vmatmul.f32.gmra.mxu0 %v399
        %v1122 = vpop.f32.mrf.mxu0
        %v1123 = vadd.f32 %v483, %v1122
        %1124 = vmatmul.f32.gmra.mxu0 %v400
        %v1125 = vpop.f32.mrf.mxu0
        %v1126 = vadd.f32 %v483, %v1125
        %1127 = vmatmul.f32.gmra.mxu0 %v401
        %v1128 = vpop.f32.mrf.mxu0
        %v1129 = vadd.f32 %v483, %v1128
        %1130 = vmatmul.f32.gmra.mxu0 %v402
        %v1131 = vpop.f32.mrf.mxu0
        %v1132 = vadd.f32 %v483, %v1131
        %1133 = vmatmul.f32.gmra.mxu0 %v403
        %v1134 = vpop.f32.mrf.mxu0
        %v1135 = vadd.f32 %v483, %v1134
        %1136 = vmatmul.f32.gmra.mxu0 %v404
        %v1137 = vpop.f32.mrf.mxu0
        %v1138 = vadd.f32 %v483, %v1137
        %1139 = vmatmul.f32.gmra.mxu0 %v405
        %v1140 = vpop.f32.mrf.mxu0
        %v1141 = vadd.f32 %v483, %v1140
        %1142 = vmatmul.f32.gmra.mxu0 %v406
        %v1143 = vpop.f32.mrf.mxu0
        %v1144 = vadd.f32 %v483, %v1143
        %1145 = vmatmul.f32.gmra.mxu0 %v407
        %v1146 = vpop.f32.mrf.mxu0
        %v1147 = vadd.f32 %v483, %v1146
        %1148 = vmatmul.f32.gmra.mxu0 %v408
        %v1149 = vpop.f32.mrf.mxu0
        %v1150 = vadd.f32 %v483, %v1149
        %1151 = vmatmul.f32.gmra.mxu0 %v409
        %v1152 = vpop.f32.mrf.mxu0
        %v1153 = vadd.f32 %v483, %v1152
        %1154 = vmatmul.f32.gmra.mxu0 %v410
        %v1155 = vpop.f32.mrf.mxu0
        %v1156 = vadd.f32 %v483, %v1155
        %1157 = vmatmul.f32.gmra.mxu0 %v411
        %v1158 = vpop.f32.mrf.mxu0
        %v1159 = vadd.f32 %v483, %v1158
        %1160 = vmatmul.f32.gmra.mxu0 %v412
        %v1161 = vpop.f32.mrf.mxu0
        %v1162 = vadd.f32 %v483, %v1161
        %1163 = vmatmul.f32.gmra.mxu0 %v413
        %v1164 = vpop.f32.mrf.mxu0
        %v1165 = vadd.f32 %v483, %v1164
        %1166 = vmatmul.f32.gmra.mxu0 %v414
        %v1167 = vpop.f32.mrf.mxu0
        %v1168 = vadd.f32 %v483, %v1167
        %1169 = vmatmul.f32.gmra.mxu0 %v415
        %v1170 = vpop.f32.mrf.mxu0
        %v1171 = vadd.f32 %v483, %v1170
        %1172 = vmatmul.f32.gmra.mxu0 %v416
        %v1173 = vpop.f32.mrf.mxu0
        %v1174 = vadd.f32 %v483, %v1173
        %1175 = vmatmul.f32.gmra.mxu0 %v417
        %v1176 = vpop.f32.mrf.mxu0
        %v1177 = vadd.f32 %v483, %v1176
        %1178 = vmatmul.f32.gmra.mxu0 %v418
        %v1179 = vpop.f32.mrf.mxu0
        %v1180 = vadd.f32 %v483, %v1179
        %1181 = vmatmul.f32.gmra.mxu0 %v419
        %v1182 = vpop.f32.mrf.mxu0
        %v1183 = vadd.f32 %v483, %v1182
        %1184 = vmatmul.f32.gmra.mxu0 %v420
        %v1185 = vpop.f32.mrf.mxu0
        %v1186 = vadd.f32 %v483, %v1185
        %1187 = vmatmul.f32.gmra.mxu0 %v421
        %v1188 = vpop.f32.mrf.mxu0
        %v1189 = vadd.f32 %v483, %v1188
        %1190 = vmatmul.f32.gmra.mxu0 %v422
        %v1191 = vpop.f32.mrf.mxu0
        %v1192 = vadd.f32 %v483, %v1191
        %1193 = vmatmul.f32.gmra.mxu0 %v423
        %v1194 = vpop.f32.mrf.mxu0
        %v1195 = vadd.f32 %v483, %v1194
        %1196 = vmatmul.f32.gmra.mxu0 %v424
        %v1197 = vpop.f32.mrf.mxu0
        %v1198 = vadd.f32 %v483, %v1197
        %1199 = vmatmul.f32.gmra.mxu0 %v425
        %v1200 = vpop.f32.mrf.mxu0
        %v1201 = vadd.f32 %v483, %v1200
        %1202 = vmatmul.f32.gmra.mxu0 %v426
        %v1203 = vpop.f32.mrf.mxu0
        %v1204 = vadd.f32 %v483, %v1203
        %1205 = vmatmul.f32.gmra.mxu0 %v427
        %v1206 = vpop.f32.mrf.mxu0
        %v1207 = vadd.f32 %v483, %v1206
        %1208 = vmatmul.f32.gmra.mxu0 %v428
        %v1209 = vpop.f32.mrf.mxu0
        %v1210 = vadd.f32 %v483, %v1209
        %1211 = vmatmul.f32.gmra.mxu0 %v429
        %v1212 = vpop.f32.mrf.mxu0
        %v1213 = vadd.f32 %v483, %v1212
        %1214 = vmatmul.f32.gmra.mxu0 %v430
        %v1215 = vpop.f32.mrf.mxu0
        %v1216 = vadd.f32 %v483, %v1215
        %1217 = vmatmul.f32.gmra.mxu0 %v431
        %v1218 = vpop.f32.mrf.mxu0
        %v1219 = vadd.f32 %v483, %v1218
        %1220 = vmatmul.f32.gmra.mxu0 %v432
        %v1221 = vpop.f32.mrf.mxu0
        %v1222 = vadd.f32 %v483, %v1221
        %1223 = vmatmul.f32.gmra.mxu0 %v433
        %v1224 = vpop.f32.mrf.mxu0
        %v1225 = vadd.f32 %v483, %v1224
        %1226 = vmatmul.f32.gmra.mxu0 %v434
        %v1227 = vpop.f32.mrf.mxu0
        %v1228 = vadd.f32 %v483, %v1227
        %1229 = vmatmul.f32.gmra.mxu0 %v435
        %v1230 = vpop.f32.mrf.mxu0
        %v1231 = vadd.f32 %v483, %v1230
        %1232 = vmatmul.f32.gmra.mxu0 %v436
        %v1233 = vpop.f32.mrf.mxu0
        %v1234 = vadd.f32 %v483, %v1233
        %1235 = vmatmul.f32.gmra.mxu0 %v437
        %v1236 = vpop.f32.mrf.mxu0
        %v1237 = vadd.f32 %v483, %v1236
        %1238 = vmatmul.f32.gmra.mxu0 %v438
        %v1239 = vpop.f32.mrf.mxu0
        %v1240 = vadd.f32 %v483, %v1239
        %1241 = vmatmul.f32.gmra.mxu0 %v439
        %v1242 = vpop.f32.mrf.mxu0
        %v1243 = vadd.f32 %v483, %v1242
        %1244 = vmatmul.f32.gmra.mxu0 %v440
        %v1245 = vpop.f32.mrf.mxu0
        %v1246 = vadd.f32 %v483, %v1245
        %1247 = vmatmul.f32.gmra.mxu0 %v441
        %v1248 = vpop.f32.mrf.mxu0
        %v1249 = vadd.f32 %v483, %v1248
        %1250 = vmatmul.f32.gmra.mxu0 %v442
        %v1251 = vpop.f32.mrf.mxu0
        %v1252 = vadd.f32 %v483, %v1251
        %1253 = vmatmul.f32.gmra.mxu0 %v443
        %v1254 = vpop.f32.mrf.mxu0
        %v1255 = vadd.f32 %v483, %v1254
        %1256 = vmatmul.f32.gmra.mxu0 %v444
        %v1257 = vpop.f32.mrf.mxu0
        %v1258 = vadd.f32 %v483, %v1257
        %1259 = vmatmul.f32.gmra.mxu0 %v445
        %v1260 = vpop.f32.mrf.mxu0
        %v1261 = vadd.f32 %v483, %v1260
        %1262 = vmatmul.f32.gmra.mxu0 %v446
        %v1263 = vpop.f32.mrf.mxu0
        %v1264 = vadd.f32 %v483, %v1263
        %1265 = vmatmul.f32.gmra.mxu0 %v447
        %v1266 = vpop.f32.mrf.mxu0
        %v1267 = vadd.f32 %v483, %v1266
        %1268 = vmatmul.f32.gmra.mxu0 %v448
        %v1269 = vpop.f32.mrf.mxu0
        %v1270 = vadd.f32 %v483, %v1269
        %1271 = vdwg.mxu0
        %1272 = vmatpush.xpose.msra.mxu0 %v480
        %1273 = vmatpush.xpose.msra.mxu0 %v479
        %1274 = vmatpush.xpose.msra.mxu0 %v478
        %1275 = vmatpush.xpose.msra.mxu0 %v477
        %1276 = vmatpush.xpose.msra.mxu0 %v476
        %1277 = vmatpush.xpose.msra.mxu0 %v475
        %1278 = vmatpush.xpose.msra.mxu0 %v474
        %1279 = vmatpush.xpose.msra.mxu0 %v473
        %1280 = vmatpush.xpose.msra.mxu0 %v472
        %1281 = vmatpush.xpose.msra.mxu0 %v471
        %1282 = vmatpush.xpose.msra.mxu0 %v470
        %1283 = vmatpush.xpose.msra.mxu0 %v469
        %1284 = vmatpush.xpose.msra.mxu0 %v468
        %1285 = vmatpush.xpose.msra.mxu0 %v467
        %1286 = vmatpush.xpose.msra.mxu0 %v466
        %1287 = vmatpush.xpose.msra.mxu0 %v465
        %1288 = vmatmul.f32.gmra.mxu0 %v193
        %v1289 = vpop.f32.mrf.mxu0
        %v1290 = vadd.f32 %v484, %v1289
        %1291 = vmatmul.f32.gmra.mxu0 %v194
        %v1292 = vpop.f32.mrf.mxu0
        %v1293 = vadd.f32 %v484, %v1292
        %1294 = vmatmul.f32.gmra.mxu0 %v195
        %v1295 = vpop.f32.mrf.mxu0
        %v1296 = vadd.f32 %v484, %v1295
        %1297 = vmatmul.f32.gmra.mxu0 %v196
        %v1298 = vpop.f32.mrf.mxu0
        %v1299 = vadd.f32 %v484, %v1298
        %1300 = vmatmul.f32.gmra.mxu0 %v197
        %v1301 = vpop.f32.mrf.mxu0
        %v1302 = vadd.f32 %v484, %v1301
        %1303 = vmatmul.f32.gmra.mxu0 %v198
        %v1304 = vpop.f32.mrf.mxu0
        %v1305 = vadd.f32 %v484, %v1304
        %1306 = vmatmul.f32.gmra.mxu0 %v199
        %v1307 = vpop.f32.mrf.mxu0
        %v1308 = vadd.f32 %v484, %v1307
        %1309 = vmatmul.f32.gmra.mxu0 %v200
        %v1310 = vpop.f32.mrf.mxu0
        %v1311 = vadd.f32 %v484, %v1310
        %1312 = vmatmul.f32.gmra.mxu0 %v201
        %v1313 = vpop.f32.mrf.mxu0
        %v1314 = vadd.f32 %v484, %v1313
        %1315 = vmatmul.f32.gmra.mxu0 %v202
        %v1316 = vpop.f32.mrf.mxu0
        %v1317 = vadd.f32 %v484, %v1316
        %1318 = vmatmul.f32.gmra.mxu0 %v203
        %v1319 = vpop.f32.mrf.mxu0
        %v1320 = vadd.f32 %v484, %v1319
        %1321 = vmatmul.f32.gmra.mxu0 %v204
        %v1322 = vpop.f32.mrf.mxu0
        %v1323 = vadd.f32 %v484, %v1322
        %1324 = vmatmul.f32.gmra.mxu0 %v205
        %v1325 = vpop.f32.mrf.mxu0
        %v1326 = vadd.f32 %v484, %v1325
        %1327 = vmatmul.f32.gmra.mxu0 %v206
        %v1328 = vpop.f32.mrf.mxu0
        %v1329 = vadd.f32 %v484, %v1328
        %1330 = vmatmul.f32.gmra.mxu0 %v207
        %v1331 = vpop.f32.mrf.mxu0
        %v1332 = vadd.f32 %v484, %v1331
        %1333 = vmatmul.f32.gmra.mxu0 %v208
        %v1334 = vpop.f32.mrf.mxu0
        %v1335 = vadd.f32 %v484, %v1334
        %1336 = vmatmul.f32.gmra.mxu0 %v209
        %v1337 = vpop.f32.mrf.mxu0
        %v1338 = vadd.f32 %v484, %v1337
        %1339 = vmatmul.f32.gmra.mxu0 %v210
        %v1340 = vpop.f32.mrf.mxu0
        %v1341 = vadd.f32 %v484, %v1340
        %1342 = vmatmul.f32.gmra.mxu0 %v211
        %v1343 = vpop.f32.mrf.mxu0
        %v1344 = vadd.f32 %v484, %v1343
        %1345 = vmatmul.f32.gmra.mxu0 %v212
        %v1346 = vpop.f32.mrf.mxu0
        %v1347 = vadd.f32 %v484, %v1346
        %1348 = vmatmul.f32.gmra.mxu0 %v213
        %v1349 = vpop.f32.mrf.mxu0
        %v1350 = vadd.f32 %v484, %v1349
        %1351 = vmatmul.f32.gmra.mxu0 %v214
        %v1352 = vpop.f32.mrf.mxu0
        %v1353 = vadd.f32 %v484, %v1352
        %1354 = vmatmul.f32.gmra.mxu0 %v215
        %v1355 = vpop.f32.mrf.mxu0
        %v1356 = vadd.f32 %v484, %v1355
        %1357 = vmatmul.f32.gmra.mxu0 %v216
        %v1358 = vpop.f32.mrf.mxu0
        %v1359 = vadd.f32 %v484, %v1358
        %1360 = vmatmul.f32.gmra.mxu0 %v217
        %v1361 = vpop.f32.mrf.mxu0
        %v1362 = vadd.f32 %v484, %v1361
        %1363 = vmatmul.f32.gmra.mxu0 %v218
        %v1364 = vpop.f32.mrf.mxu0
        %v1365 = vadd.f32 %v484, %v1364
        %1366 = vmatmul.f32.gmra.mxu0 %v219
        %v1367 = vpop.f32.mrf.mxu0
        %v1368 = vadd.f32 %v484, %v1367
        %1369 = vmatmul.f32.gmra.mxu0 %v220
        %v1370 = vpop.f32.mrf.mxu0
        %v1371 = vadd.f32 %v484, %v1370
        %1372 = vmatmul.f32.gmra.mxu0 %v221
        %v1373 = vpop.f32.mrf.mxu0
        %v1374 = vadd.f32 %v484, %v1373
        %1375 = vmatmul.f32.gmra.mxu0 %v222
        %v1376 = vpop.f32.mrf.mxu0
        %v1377 = vadd.f32 %v484, %v1376
        %1378 = vmatmul.f32.gmra.mxu0 %v223
        %v1379 = vpop.f32.mrf.mxu0
        %v1380 = vadd.f32 %v484, %v1379
        %1381 = vmatmul.f32.gmra.mxu0 %v224
        %v1382 = vpop.f32.mrf.mxu0
        %v1383 = vadd.f32 %v484, %v1382
        %1384 = vmatmul.f32.gmra.mxu0 %v225
        %v1385 = vpop.f32.mrf.mxu0
        %v1386 = vadd.f32 %v484, %v1385
        %1387 = vmatmul.f32.gmra.mxu0 %v226
        %v1388 = vpop.f32.mrf.mxu0
        %v1389 = vadd.f32 %v484, %v1388
        %1390 = vmatmul.f32.gmra.mxu0 %v227
        %v1391 = vpop.f32.mrf.mxu0
        %v1392 = vadd.f32 %v484, %v1391
        %1393 = vmatmul.f32.gmra.mxu0 %v228
        %v1394 = vpop.f32.mrf.mxu0
        %v1395 = vadd.f32 %v484, %v1394
        %1396 = vmatmul.f32.gmra.mxu0 %v229
        %v1397 = vpop.f32.mrf.mxu0
        %v1398 = vadd.f32 %v484, %v1397
        %1399 = vmatmul.f32.gmra.mxu0 %v230
        %v1400 = vpop.f32.mrf.mxu0
        %v1401 = vadd.f32 %v484, %v1400
        %1402 = vmatmul.f32.gmra.mxu0 %v231
        %v1403 = vpop.f32.mrf.mxu0
        %v1404 = vadd.f32 %v484, %v1403
        %1405 = vmatmul.f32.gmra.mxu0 %v232
        %v1406 = vpop.f32.mrf.mxu0
        %v1407 = vadd.f32 %v484, %v1406
        %1408 = vmatmul.f32.gmra.mxu0 %v233
        %v1409 = vpop.f32.mrf.mxu0
        %v1410 = vadd.f32 %v484, %v1409
        %1411 = vmatmul.f32.gmra.mxu0 %v234
        %v1412 = vpop.f32.mrf.mxu0
        %v1413 = vadd.f32 %v484, %v1412
        %1414 = vmatmul.f32.gmra.mxu0 %v235
        %v1415 = vpop.f32.mrf.mxu0
        %v1416 = vadd.f32 %v484, %v1415
        %1417 = vmatmul.f32.gmra.mxu0 %v236
        %v1418 = vpop.f32.mrf.mxu0
        %v1419 = vadd.f32 %v484, %v1418
        %1420 = vmatmul.f32.gmra.mxu0 %v237
        %v1421 = vpop.f32.mrf.mxu0
        %v1422 = vadd.f32 %v484, %v1421
        %1423 = vmatmul.f32.gmra.mxu0 %v238
        %v1424 = vpop.f32.mrf.mxu0
        %v1425 = vadd.f32 %v484, %v1424
        %1426 = vmatmul.f32.gmra.mxu0 %v239
        %v1427 = vpop.f32.mrf.mxu0
        %v1428 = vadd.f32 %v484, %v1427
        %1429 = vmatmul.f32.gmra.mxu0 %v240
        %v1430 = vpop.f32.mrf.mxu0
        %v1431 = vadd.f32 %v484, %v1430
        %1432 = vmatmul.f32.gmra.mxu0 %v241
        %v1433 = vpop.f32.mrf.mxu0
        %v1434 = vadd.f32 %v484, %v1433
        %1435 = vmatmul.f32.gmra.mxu0 %v242
        %v1436 = vpop.f32.mrf.mxu0
        %v1437 = vadd.f32 %v484, %v1436
        %1438 = vmatmul.f32.gmra.mxu0 %v243
        %v1439 = vpop.f32.mrf.mxu0
        %v1440 = vadd.f32 %v484, %v1439
        %1441 = vmatmul.f32.gmra.mxu0 %v244
        %v1442 = vpop.f32.mrf.mxu0
        %v1443 = vadd.f32 %v484, %v1442
        %1444 = vmatmul.f32.gmra.mxu0 %v245
        %v1445 = vpop.f32.mrf.mxu0
        %v1446 = vadd.f32 %v484, %v1445
        %1447 = vmatmul.f32.gmra.mxu0 %v246
        %v1448 = vpop.f32.mrf.mxu0
        %v1449 = vadd.f32 %v484, %v1448
        %1450 = vmatmul.f32.gmra.mxu0 %v247
        %v1451 = vpop.f32.mrf.mxu0
        %v1452 = vadd.f32 %v484, %v1451
        %1453 = vmatmul.f32.gmra.mxu0 %v248
        %v1454 = vpop.f32.mrf.mxu0
        %v1455 = vadd.f32 %v484, %v1454
        %1456 = vmatmul.f32.gmra.mxu0 %v249
        %v1457 = vpop.f32.mrf.mxu0
        %v1458 = vadd.f32 %v484, %v1457
        %1459 = vmatmul.f32.gmra.mxu0 %v250
        %v1460 = vpop.f32.mrf.mxu0
        %v1461 = vadd.f32 %v484, %v1460
        %1462 = vmatmul.f32.gmra.mxu0 %v251
        %v1463 = vpop.f32.mrf.mxu0
        %v1464 = vadd.f32 %v484, %v1463
        %1465 = vmatmul.f32.gmra.mxu0 %v252
        %v1466 = vpop.f32.mrf.mxu0
        %v1467 = vadd.f32 %v484, %v1466
        %1468 = vmatmul.f32.gmra.mxu0 %v253
        %v1469 = vpop.f32.mrf.mxu0
        %v1470 = vadd.f32 %v484, %v1469
        %1471 = vmatmul.f32.gmra.mxu0 %v254
        %v1472 = vpop.f32.mrf.mxu0
        %v1473 = vadd.f32 %v484, %v1472
        %1474 = vmatmul.f32.gmra.mxu0 %v255
        %v1475 = vpop.f32.mrf.mxu0
        %v1476 = vadd.f32 %v484, %v1475
        %1477 = vmatmul.f32.gmra.mxu0 %v256
        %v1478 = vpop.f32.mrf.mxu0
        %v1479 = vadd.f32 %v484, %v1478
        %1480 = vmatmul.f32.gmra.mxu0 %v257
        %v1481 = vpop.f32.mrf.mxu0
        %v1482 = vadd.f32 %v484, %v1481
        %1483 = vmatmul.f32.gmra.mxu0 %v258
        %v1484 = vpop.f32.mrf.mxu0
        %v1485 = vadd.f32 %v484, %v1484
        %1486 = vmatmul.f32.gmra.mxu0 %v259
        %v1487 = vpop.f32.mrf.mxu0
        %v1488 = vadd.f32 %v484, %v1487
        %1489 = vmatmul.f32.gmra.mxu0 %v260
        %v1490 = vpop.f32.mrf.mxu0
        %v1491 = vadd.f32 %v484, %v1490
        %1492 = vmatmul.f32.gmra.mxu0 %v261
        %v1493 = vpop.f32.mrf.mxu0
        %v1494 = vadd.f32 %v484, %v1493
        %1495 = vmatmul.f32.gmra.mxu0 %v262
        %v1496 = vpop.f32.mrf.mxu0
        %v1497 = vadd.f32 %v484, %v1496
        %1498 = vmatmul.f32.gmra.mxu0 %v263
        %v1499 = vpop.f32.mrf.mxu0
        %v1500 = vadd.f32 %v484, %v1499
        %1501 = vmatmul.f32.gmra.mxu0 %v264
        %v1502 = vpop.f32.mrf.mxu0
        %v1503 = vadd.f32 %v484, %v1502
        %1504 = vmatmul.f32.gmra.mxu0 %v265
        %v1505 = vpop.f32.mrf.mxu0
        %v1506 = vadd.f32 %v484, %v1505
        %1507 = vmatmul.f32.gmra.mxu0 %v266
        %v1508 = vpop.f32.mrf.mxu0
        %v1509 = vadd.f32 %v484, %v1508
        %1510 = vmatmul.f32.gmra.mxu0 %v267
        %v1511 = vpop.f32.mrf.mxu0
        %v1512 = vadd.f32 %v484, %v1511
        %1513 = vmatmul.f32.gmra.mxu0 %v268
        %v1514 = vpop.f32.mrf.mxu0
        %v1515 = vadd.f32 %v484, %v1514
        %1516 = vmatmul.f32.gmra.mxu0 %v269
        %v1517 = vpop.f32.mrf.mxu0
        %v1518 = vadd.f32 %v484, %v1517
        %1519 = vmatmul.f32.gmra.mxu0 %v270
        %v1520 = vpop.f32.mrf.mxu0
        %v1521 = vadd.f32 %v484, %v1520
        %1522 = vmatmul.f32.gmra.mxu0 %v271
        %v1523 = vpop.f32.mrf.mxu0
        %v1524 = vadd.f32 %v484, %v1523
        %1525 = vmatmul.f32.gmra.mxu0 %v272
        %v1526 = vpop.f32.mrf.mxu0
        %v1527 = vadd.f32 %v484, %v1526
        %1528 = vmatmul.f32.gmra.mxu0 %v273
        %v1529 = vpop.f32.mrf.mxu0
        %v1530 = vadd.f32 %v484, %v1529
        %1531 = vmatmul.f32.gmra.mxu0 %v274
        %v1532 = vpop.f32.mrf.mxu0
        %v1533 = vadd.f32 %v484, %v1532
        %1534 = vmatmul.f32.gmra.mxu0 %v275
        %v1535 = vpop.f32.mrf.mxu0
        %v1536 = vadd.f32 %v484, %v1535
        %1537 = vmatmul.f32.gmra.mxu0 %v276
        %v1538 = vpop.f32.mrf.mxu0
        %v1539 = vadd.f32 %v484, %v1538
        %1540 = vmatmul.f32.gmra.mxu0 %v277
        %v1541 = vpop.f32.mrf.mxu0
        %v1542 = vadd.f32 %v484, %v1541
        %1543 = vmatmul.f32.gmra.mxu0 %v278
        %v1544 = vpop.f32.mrf.mxu0
        %v1545 = vadd.f32 %v484, %v1544
        %1546 = vmatmul.f32.gmra.mxu0 %v279
        %v1547 = vpop.f32.mrf.mxu0
        %v1548 = vadd.f32 %v484, %v1547
        %1549 = vmatmul.f32.gmra.mxu0 %v280
        %v1550 = vpop.f32.mrf.mxu0
        %v1551 = vadd.f32 %v484, %v1550
        %1552 = vmatmul.f32.gmra.mxu0 %v281
        %v1553 = vpop.f32.mrf.mxu0
        %v1554 = vadd.f32 %v484, %v1553
        %1555 = vmatmul.f32.gmra.mxu0 %v282
        %v1556 = vpop.f32.mrf.mxu0
        %v1557 = vadd.f32 %v484, %v1556
        %1558 = vmatmul.f32.gmra.mxu0 %v283
        %v1559 = vpop.f32.mrf.mxu0
        %v1560 = vadd.f32 %v484, %v1559
        %1561 = vmatmul.f32.gmra.mxu0 %v284
        %v1562 = vpop.f32.mrf.mxu0
        %v1563 = vadd.f32 %v484, %v1562
        %1564 = vmatmul.f32.gmra.mxu0 %v285
        %v1565 = vpop.f32.mrf.mxu0
        %v1566 = vadd.f32 %v484, %v1565
        %1567 = vmatmul.f32.gmra.mxu0 %v286
        %v1568 = vpop.f32.mrf.mxu0
        %v1569 = vadd.f32 %v484, %v1568
        %1570 = vmatmul.f32.gmra.mxu0 %v287
        %v1571 = vpop.f32.mrf.mxu0
        %v1572 = vadd.f32 %v484, %v1571
        %1573 = vmatmul.f32.gmra.mxu0 %v288
        %v1574 = vpop.f32.mrf.mxu0
        %v1575 = vadd.f32 %v484, %v1574
        %1576 = vmatmul.f32.gmra.mxu0 %v289
        %v1577 = vpop.f32.mrf.mxu0
        %v1578 = vadd.f32 %v484, %v1577
        %1579 = vmatmul.f32.gmra.mxu0 %v290
        %v1580 = vpop.f32.mrf.mxu0
        %v1581 = vadd.f32 %v484, %v1580
        %1582 = vmatmul.f32.gmra.mxu0 %v291
        %v1583 = vpop.f32.mrf.mxu0
        %v1584 = vadd.f32 %v484, %v1583
        %1585 = vmatmul.f32.gmra.mxu0 %v292
        %v1586 = vpop.f32.mrf.mxu0
        %v1587 = vadd.f32 %v484, %v1586
        %1588 = vmatmul.f32.gmra.mxu0 %v293
        %v1589 = vpop.f32.mrf.mxu0
        %v1590 = vadd.f32 %v484, %v1589
        %1591 = vmatmul.f32.gmra.mxu0 %v294
        %v1592 = vpop.f32.mrf.mxu0
        %v1593 = vadd.f32 %v484, %v1592
        %1594 = vmatmul.f32.gmra.mxu0 %v295
        %v1595 = vpop.f32.mrf.mxu0
        %v1596 = vadd.f32 %v484, %v1595
        %1597 = vmatmul.f32.gmra.mxu0 %v296
        %v1598 = vpop.f32.mrf.mxu0
        %v1599 = vadd.f32 %v484, %v1598
        %1600 = vmatmul.f32.gmra.mxu0 %v297
        %v1601 = vpop.f32.mrf.mxu0
        %v1602 = vadd.f32 %v484, %v1601
        %1603 = vmatmul.f32.gmra.mxu0 %v298
        %v1604 = vpop.f32.mrf.mxu0
        %v1605 = vadd.f32 %v484, %v1604
        %1606 = vmatmul.f32.gmra.mxu0 %v299
        %v1607 = vpop.f32.mrf.mxu0
        %v1608 = vadd.f32 %v484, %v1607
        %1609 = vmatmul.f32.gmra.mxu0 %v300
        %v1610 = vpop.f32.mrf.mxu0
        %v1611 = vadd.f32 %v484, %v1610
        %1612 = vmatmul.f32.gmra.mxu0 %v301
        %v1613 = vpop.f32.mrf.mxu0
        %v1614 = vadd.f32 %v484, %v1613
        %1615 = vmatmul.f32.gmra.mxu0 %v302
        %v1616 = vpop.f32.mrf.mxu0
        %v1617 = vadd.f32 %v484, %v1616
        %1618 = vmatmul.f32.gmra.mxu0 %v303
        %v1619 = vpop.f32.mrf.mxu0
        %v1620 = vadd.f32 %v484, %v1619
        %1621 = vmatmul.f32.gmra.mxu0 %v304
        %v1622 = vpop.f32.mrf.mxu0
        %v1623 = vadd.f32 %v484, %v1622
        %1624 = vmatmul.f32.gmra.mxu0 %v305
        %v1625 = vpop.f32.mrf.mxu0
        %v1626 = vadd.f32 %v484, %v1625
        %1627 = vmatmul.f32.gmra.mxu0 %v306
        %v1628 = vpop.f32.mrf.mxu0
        %v1629 = vadd.f32 %v484, %v1628
        %1630 = vmatmul.f32.gmra.mxu0 %v307
        %v1631 = vpop.f32.mrf.mxu0
        %v1632 = vadd.f32 %v484, %v1631
        %1633 = vmatmul.f32.gmra.mxu0 %v308
        %v1634 = vpop.f32.mrf.mxu0
        %v1635 = vadd.f32 %v484, %v1634
        %1636 = vmatmul.f32.gmra.mxu0 %v309
        %v1637 = vpop.f32.mrf.mxu0
        %v1638 = vadd.f32 %v484, %v1637
        %1639 = vmatmul.f32.gmra.mxu0 %v310
        %v1640 = vpop.f32.mrf.mxu0
        %v1641 = vadd.f32 %v484, %v1640
        %1642 = vmatmul.f32.gmra.mxu0 %v311
        %v1643 = vpop.f32.mrf.mxu0
        %v1644 = vadd.f32 %v484, %v1643
        %1645 = vmatmul.f32.gmra.mxu0 %v312
        %v1646 = vpop.f32.mrf.mxu0
        %v1647 = vadd.f32 %v484, %v1646
        %1648 = vmatmul.f32.gmra.mxu0 %v313
        %v1649 = vpop.f32.mrf.mxu0
        %v1650 = vadd.f32 %v484, %v1649
        %1651 = vmatmul.f32.gmra.mxu0 %v314
        %v1652 = vpop.f32.mrf.mxu0
        %v1653 = vadd.f32 %v484, %v1652
        %1654 = vmatmul.f32.gmra.mxu0 %v315
        %v1655 = vpop.f32.mrf.mxu0
        %v1656 = vadd.f32 %v484, %v1655
        %1657 = vmatmul.f32.gmra.mxu0 %v316
        %v1658 = vpop.f32.mrf.mxu0
        %v1659 = vadd.f32 %v484, %v1658
        %1660 = vmatmul.f32.gmra.mxu0 %v317
        %v1661 = vpop.f32.mrf.mxu0
        %v1662 = vadd.f32 %v484, %v1661
        %1663 = vmatmul.f32.gmra.mxu0 %v318
        %v1664 = vpop.f32.mrf.mxu0
        %v1665 = vadd.f32 %v484, %v1664
        %1666 = vmatmul.f32.gmra.mxu0 %v319
        %v1667 = vpop.f32.mrf.mxu0
        %v1668 = vadd.f32 %v484, %v1667
        %1669 = vmatmul.f32.gmra.mxu0 %v320
        %v1670 = vpop.f32.mrf.mxu0
        %v1671 = vadd.f32 %v484, %v1670
        %1672 = vmatmul.f32.gmra.mxu0 %v321
        %v1673 = vpop.f32.mrf.mxu0
        %v1674 = vadd.f32 %v484, %v1673
        %1675 = vmatmul.f32.gmra.mxu0 %v322
        %v1676 = vpop.f32.mrf.mxu0
        %v1677 = vadd.f32 %v484, %v1676
        %1678 = vmatmul.f32.gmra.mxu0 %v323
        %v1679 = vpop.f32.mrf.mxu0
        %v1680 = vadd.f32 %v484, %v1679
        %1681 = vmatmul.f32.gmra.mxu0 %v324
        %v1682 = vpop.f32.mrf.mxu0
        %v1683 = vadd.f32 %v484, %v1682
        %1684 = vmatmul.f32.gmra.mxu0 %v325
        %v1685 = vpop.f32.mrf.mxu0
        %v1686 = vadd.f32 %v484, %v1685
        %1687 = vmatmul.f32.gmra.mxu0 %v326
        %v1688 = vpop.f32.mrf.mxu0
        %v1689 = vadd.f32 %v484, %v1688
        %1690 = vmatmul.f32.gmra.mxu0 %v327
        %v1691 = vpop.f32.mrf.mxu0
        %v1692 = vadd.f32 %v484, %v1691
        %1693 = vmatmul.f32.gmra.mxu0 %v328
        %v1694 = vpop.f32.mrf.mxu0
        %v1695 = vadd.f32 %v484, %v1694
        %1696 = vmatmul.f32.gmra.mxu0 %v329
        %v1697 = vpop.f32.mrf.mxu0
        %v1698 = vadd.f32 %v484, %v1697
        %1699 = vmatmul.f32.gmra.mxu0 %v330
        %v1700 = vpop.f32.mrf.mxu0
        %v1701 = vadd.f32 %v484, %v1700
        %1702 = vmatmul.f32.gmra.mxu0 %v331
        %v1703 = vpop.f32.mrf.mxu0
        %v1704 = vadd.f32 %v484, %v1703
        %1705 = vmatmul.f32.gmra.mxu0 %v332
        %v1706 = vpop.f32.mrf.mxu0
        %v1707 = vadd.f32 %v484, %v1706
        %1708 = vmatmul.f32.gmra.mxu0 %v333
        %v1709 = vpop.f32.mrf.mxu0
        %v1710 = vadd.f32 %v484, %v1709
        %1711 = vmatmul.f32.gmra.mxu0 %v334
        %v1712 = vpop.f32.mrf.mxu0
        %v1713 = vadd.f32 %v484, %v1712
        %1714 = vmatmul.f32.gmra.mxu0 %v335
        %v1715 = vpop.f32.mrf.mxu0
        %v1716 = vadd.f32 %v484, %v1715
        %1717 = vmatmul.f32.gmra.mxu0 %v336
        %v1718 = vpop.f32.mrf.mxu0
        %v1719 = vadd.f32 %v484, %v1718
        %1720 = vmatmul.f32.gmra.mxu0 %v337
        %v1721 = vpop.f32.mrf.mxu0
        %v1722 = vadd.f32 %v484, %v1721
        %1723 = vmatmul.f32.gmra.mxu0 %v338
        %v1724 = vpop.f32.mrf.mxu0
        %v1725 = vadd.f32 %v484, %v1724
        %1726 = vmatmul.f32.gmra.mxu0 %v339
        %v1727 = vpop.f32.mrf.mxu0
        %v1728 = vadd.f32 %v484, %v1727
        %1729 = vmatmul.f32.gmra.mxu0 %v340
        %v1730 = vpop.f32.mrf.mxu0
        %v1731 = vadd.f32 %v484, %v1730
        %1732 = vmatmul.f32.gmra.mxu0 %v341
        %v1733 = vpop.f32.mrf.mxu0
        %v1734 = vadd.f32 %v484, %v1733
        %1735 = vmatmul.f32.gmra.mxu0 %v342
        %v1736 = vpop.f32.mrf.mxu0
        %v1737 = vadd.f32 %v484, %v1736
        %1738 = vmatmul.f32.gmra.mxu0 %v343
        %v1739 = vpop.f32.mrf.mxu0
        %v1740 = vadd.f32 %v484, %v1739
        %1741 = vmatmul.f32.gmra.mxu0 %v344
        %v1742 = vpop.f32.mrf.mxu0
        %v1743 = vadd.f32 %v484, %v1742
        %1744 = vmatmul.f32.gmra.mxu0 %v345
        %v1745 = vpop.f32.mrf.mxu0
        %v1746 = vadd.f32 %v484, %v1745
        %1747 = vmatmul.f32.gmra.mxu0 %v346
        %v1748 = vpop.f32.mrf.mxu0
        %v1749 = vadd.f32 %v484, %v1748
        %1750 = vmatmul.f32.gmra.mxu0 %v347
        %v1751 = vpop.f32.mrf.mxu0
        %v1752 = vadd.f32 %v484, %v1751
        %1753 = vmatmul.f32.gmra.mxu0 %v348
        %v1754 = vpop.f32.mrf.mxu0
        %v1755 = vadd.f32 %v484, %v1754
        %1756 = vmatmul.f32.gmra.mxu0 %v349
        %v1757 = vpop.f32.mrf.mxu0
        %v1758 = vadd.f32 %v484, %v1757
        %1759 = vmatmul.f32.gmra.mxu0 %v350
        %v1760 = vpop.f32.mrf.mxu0
        %v1761 = vadd.f32 %v484, %v1760
        %1762 = vmatmul.f32.gmra.mxu0 %v351
        %v1763 = vpop.f32.mrf.mxu0
        %v1764 = vadd.f32 %v484, %v1763
        %1765 = vmatmul.f32.gmra.mxu0 %v352
        %v1766 = vpop.f32.mrf.mxu0
        %v1767 = vadd.f32 %v484, %v1766
        %1768 = vmatmul.f32.gmra.mxu0 %v353
        %v1769 = vpop.f32.mrf.mxu0
        %v1770 = vadd.f32 %v484, %v1769
        %1771 = vmatmul.f32.gmra.mxu0 %v354
        %v1772 = vpop.f32.mrf.mxu0
        %v1773 = vadd.f32 %v484, %v1772
        %1774 = vmatmul.f32.gmra.mxu0 %v355
        %v1775 = vpop.f32.mrf.mxu0
        %v1776 = vadd.f32 %v484, %v1775
        %1777 = vmatmul.f32.gmra.mxu0 %v356
        %v1778 = vpop.f32.mrf.mxu0
        %v1779 = vadd.f32 %v484, %v1778
        %1780 = vmatmul.f32.gmra.mxu0 %v357
        %v1781 = vpop.f32.mrf.mxu0
        %v1782 = vadd.f32 %v484, %v1781
        %1783 = vmatmul.f32.gmra.mxu0 %v358
        %v1784 = vpop.f32.mrf.mxu0
        %v1785 = vadd.f32 %v484, %v1784
        %1786 = vmatmul.f32.gmra.mxu0 %v359
        %v1787 = vpop.f32.mrf.mxu0
        %v1788 = vadd.f32 %v484, %v1787
        %1789 = vmatmul.f32.gmra.mxu0 %v360
        %v1790 = vpop.f32.mrf.mxu0
        %v1791 = vadd.f32 %v484, %v1790
        %1792 = vmatmul.f32.gmra.mxu0 %v361
        %v1793 = vpop.f32.mrf.mxu0
        %v1794 = vadd.f32 %v484, %v1793
        %1795 = vmatmul.f32.gmra.mxu0 %v362
        %v1796 = vpop.f32.mrf.mxu0
        %v1797 = vadd.f32 %v484, %v1796
        %1798 = vmatmul.f32.gmra.mxu0 %v363
        %v1799 = vpop.f32.mrf.mxu0
        %v1800 = vadd.f32 %v484, %v1799
        %1801 = vmatmul.f32.gmra.mxu0 %v364
        %v1802 = vpop.f32.mrf.mxu0
        %v1803 = vadd.f32 %v484, %v1802
        %1804 = vmatmul.f32.gmra.mxu0 %v365
        %v1805 = vpop.f32.mrf.mxu0
        %v1806 = vadd.f32 %v484, %v1805
        %1807 = vmatmul.f32.gmra.mxu0 %v366
        %v1808 = vpop.f32.mrf.mxu0
        %v1809 = vadd.f32 %v484, %v1808
        %1810 = vmatmul.f32.gmra.mxu0 %v367
        %v1811 = vpop.f32.mrf.mxu0
        %v1812 = vadd.f32 %v484, %v1811
        %1813 = vmatmul.f32.gmra.mxu0 %v368
        %v1814 = vpop.f32.mrf.mxu0
        %v1815 = vadd.f32 %v484, %v1814
        %1816 = vmatmul.f32.gmra.mxu0 %v369
        %v1817 = vpop.f32.mrf.mxu0
        %v1818 = vadd.f32 %v484, %v1817
        %1819 = vmatmul.f32.gmra.mxu0 %v370
        %v1820 = vpop.f32.mrf.mxu0
        %v1821 = vadd.f32 %v484, %v1820
        %1822 = vmatmul.f32.gmra.mxu0 %v371
        %v1823 = vpop.f32.mrf.mxu0
        %v1824 = vadd.f32 %v484, %v1823
        %1825 = vmatmul.f32.gmra.mxu0 %v372
        %v1826 = vpop.f32.mrf.mxu0
        %v1827 = vadd.f32 %v484, %v1826
        %1828 = vmatmul.f32.gmra.mxu0 %v373
        %v1829 = vpop.f32.mrf.mxu0
        %v1830 = vadd.f32 %v484, %v1829
        %1831 = vmatmul.f32.gmra.mxu0 %v374
        %v1832 = vpop.f32.mrf.mxu0
        %v1833 = vadd.f32 %v484, %v1832
        %1834 = vmatmul.f32.gmra.mxu0 %v375
        %v1835 = vpop.f32.mrf.mxu0
        %v1836 = vadd.f32 %v484, %v1835
        %1837 = vmatmul.f32.gmra.mxu0 %v376
        %v1838 = vpop.f32.mrf.mxu0
        %v1839 = vadd.f32 %v484, %v1838
        %1840 = vmatmul.f32.gmra.mxu0 %v377
        %v1841 = vpop.f32.mrf.mxu0
        %v1842 = vadd.f32 %v484, %v1841
        %1843 = vmatmul.f32.gmra.mxu0 %v378
        %v1844 = vpop.f32.mrf.mxu0
        %v1845 = vadd.f32 %v484, %v1844
        %1846 = vmatmul.f32.gmra.mxu0 %v379
        %v1847 = vpop.f32.mrf.mxu0
        %v1848 = vadd.f32 %v484, %v1847
        %1849 = vmatmul.f32.gmra.mxu0 %v380
        %v1850 = vpop.f32.mrf.mxu0
        %v1851 = vadd.f32 %v484, %v1850
        %1852 = vmatmul.f32.gmra.mxu0 %v381
        %v1853 = vpop.f32.mrf.mxu0
        %v1854 = vadd.f32 %v484, %v1853
        %1855 = vmatmul.f32.gmra.mxu0 %v382
        %v1856 = vpop.f32.mrf.mxu0
        %v1857 = vadd.f32 %v484, %v1856
        %1858 = vmatmul.f32.gmra.mxu0 %v383
        %v1859 = vpop.f32.mrf.mxu0
        %v1860 = vadd.f32 %v484, %v1859
        %1861 = vmatmul.f32.gmra.mxu0 %v384
        %v1862 = vpop.f32.mrf.mxu0
        %v1863 = vadd.f32 %v484, %v1862
        %1864 = vmatmul.f32.gmra.mxu0 %v385
        %v1865 = vpop.f32.mrf.mxu0
        %v1866 = vadd.f32 %v484, %v1865
        %1867 = vmatmul.f32.gmra.mxu0 %v386
        %v1868 = vpop.f32.mrf.mxu0
        %v1869 = vadd.f32 %v484, %v1868
        %1870 = vmatmul.f32.gmra.mxu0 %v387
        %v1871 = vpop.f32.mrf.mxu0
        %v1872 = vadd.f32 %v484, %v1871
        %1873 = vmatmul.f32.gmra.mxu0 %v388
        %v1874 = vpop.f32.mrf.mxu0
        %v1875 = vadd.f32 %v484, %v1874
        %1876 = vmatmul.f32.gmra.mxu0 %v389
        %v1877 = vpop.f32.mrf.mxu0
        %v1878 = vadd.f32 %v484, %v1877
        %1879 = vmatmul.f32.gmra.mxu0 %v390
        %v1880 = vpop.f32.mrf.mxu0
        %v1881 = vadd.f32 %v484, %v1880
        %1882 = vmatmul.f32.gmra.mxu0 %v391
        %v1883 = vpop.f32.mrf.mxu0
        %v1884 = vadd.f32 %v484, %v1883
        %1885 = vmatmul.f32.gmra.mxu0 %v392
        %v1886 = vpop.f32.mrf.mxu0
        %v1887 = vadd.f32 %v484, %v1886
        %1888 = vmatmul.f32.gmra.mxu0 %v393
        %v1889 = vpop.f32.mrf.mxu0
        %v1890 = vadd.f32 %v484, %v1889
        %1891 = vmatmul.f32.gmra.mxu0 %v394
        %v1892 = vpop.f32.mrf.mxu0
        %v1893 = vadd.f32 %v484, %v1892
        %1894 = vmatmul.f32.gmra.mxu0 %v395
        %v1895 = vpop.f32.mrf.mxu0
        %v1896 = vadd.f32 %v484, %v1895
        %1897 = vmatmul.f32.gmra.mxu0 %v396
        %v1898 = vpop.f32.mrf.mxu0
        %v1899 = vadd.f32 %v484, %v1898
        %1900 = vmatmul.f32.gmra.mxu0 %v397
        %v1901 = vpop.f32.mrf.mxu0
        %v1902 = vadd.f32 %v484, %v1901
        %1903 = vmatmul.f32.gmra.mxu0 %v398
        %v1904 = vpop.f32.mrf.mxu0
        %v1905 = vadd.f32 %v484, %v1904
        %1906 = vmatmul.f32.gmra.mxu0 %v399
        %v1907 = vpop.f32.mrf.mxu0
        %v1908 = vadd.f32 %v484, %v1907
        %1909 = vmatmul.f32.gmra.mxu0 %v400
        %v1910 = vpop.f32.mrf.mxu0
        %v1911 = vadd.f32 %v484, %v1910
        %1912 = vmatmul.f32.gmra.mxu0 %v401
        %v1913 = vpop.f32.mrf.mxu0
        %v1914 = vadd.f32 %v484, %v1913
        %1915 = vmatmul.f32.gmra.mxu0 %v402
        %v1916 = vpop.f32.mrf.mxu0
        %v1917 = vadd.f32 %v484, %v1916
        %1918 = vmatmul.f32.gmra.mxu0 %v403
        %v1919 = vpop.f32.mrf.mxu0
        %v1920 = vadd.f32 %v484, %v1919
        %1921 = vmatmul.f32.gmra.mxu0 %v404
        %v1922 = vpop.f32.mrf.mxu0
        %v1923 = vadd.f32 %v484, %v1922
        %1924 = vmatmul.f32.gmra.mxu0 %v405
        %v1925 = vpop.f32.mrf.mxu0
        %v1926 = vadd.f32 %v484, %v1925
        %1927 = vmatmul.f32.gmra.mxu0 %v406
        %v1928 = vpop.f32.mrf.mxu0
        %v1929 = vadd.f32 %v484, %v1928
        %1930 = vmatmul.f32.gmra.mxu0 %v407
        %v1931 = vpop.f32.mrf.mxu0
        %v1932 = vadd.f32 %v484, %v1931
        %1933 = vmatmul.f32.gmra.mxu0 %v408
        %v1934 = vpop.f32.mrf.mxu0
        %v1935 = vadd.f32 %v484, %v1934
        %1936 = vmatmul.f32.gmra.mxu0 %v409
        %v1937 = vpop.f32.mrf.mxu0
        %v1938 = vadd.f32 %v484, %v1937
        %1939 = vmatmul.f32.gmra.mxu0 %v410
        %v1940 = vpop.f32.mrf.mxu0
        %v1941 = vadd.f32 %v484, %v1940
        %1942 = vmatmul.f32.gmra.mxu0 %v411
        %v1943 = vpop.f32.mrf.mxu0
        %v1944 = vadd.f32 %v484, %v1943
        %1945 = vmatmul.f32.gmra.mxu0 %v412
        %v1946 = vpop.f32.mrf.mxu0
        %v1947 = vadd.f32 %v484, %v1946
        %1948 = vmatmul.f32.gmra.mxu0 %v413
        %v1949 = vpop.f32.mrf.mxu0
        %v1950 = vadd.f32 %v484, %v1949
        %1951 = vmatmul.f32.gmra.mxu0 %v414
        %v1952 = vpop.f32.mrf.mxu0
        %v1953 = vadd.f32 %v484, %v1952
        %1954 = vmatmul.f32.gmra.mxu0 %v415
        %v1955 = vpop.f32.mrf.mxu0
        %v1956 = vadd.f32 %v484, %v1955
        %1957 = vmatmul.f32.gmra.mxu0 %v416
        %v1958 = vpop.f32.mrf.mxu0
        %v1959 = vadd.f32 %v484, %v1958
        %1960 = vmatmul.f32.gmra.mxu0 %v417
        %v1961 = vpop.f32.mrf.mxu0
        %v1962 = vadd.f32 %v484, %v1961
        %1963 = vmatmul.f32.gmra.mxu0 %v418
        %v1964 = vpop.f32.mrf.mxu0
        %v1965 = vadd.f32 %v484, %v1964
        %1966 = vmatmul.f32.gmra.mxu0 %v419
        %v1967 = vpop.f32.mrf.mxu0
        %v1968 = vadd.f32 %v484, %v1967
        %1969 = vmatmul.f32.gmra.mxu0 %v420
        %v1970 = vpop.f32.mrf.mxu0
        %v1971 = vadd.f32 %v484, %v1970
        %1972 = vmatmul.f32.gmra.mxu0 %v421
        %v1973 = vpop.f32.mrf.mxu0
        %v1974 = vadd.f32 %v484, %v1973
        %1975 = vmatmul.f32.gmra.mxu0 %v422
        %v1976 = vpop.f32.mrf.mxu0
        %v1977 = vadd.f32 %v484, %v1976
        %1978 = vmatmul.f32.gmra.mxu0 %v423
        %v1979 = vpop.f32.mrf.mxu0
        %v1980 = vadd.f32 %v484, %v1979
        %1981 = vmatmul.f32.gmra.mxu0 %v424
        %v1982 = vpop.f32.mrf.mxu0
        %v1983 = vadd.f32 %v484, %v1982
        %1984 = vmatmul.f32.gmra.mxu0 %v425
        %v1985 = vpop.f32.mrf.mxu0
        %v1986 = vadd.f32 %v484, %v1985
        %1987 = vmatmul.f32.gmra.mxu0 %v426
        %v1988 = vpop.f32.mrf.mxu0
        %v1989 = vadd.f32 %v484, %v1988
        %1990 = vmatmul.f32.gmra.mxu0 %v427
        %v1991 = vpop.f32.mrf.mxu0
        %v1992 = vadd.f32 %v484, %v1991
        %1993 = vmatmul.f32.gmra.mxu0 %v428
        %v1994 = vpop.f32.mrf.mxu0
        %v1995 = vadd.f32 %v484, %v1994
        %1996 = vmatmul.f32.gmra.mxu0 %v429
        %v1997 = vpop.f32.mrf.mxu0
        %v1998 = vadd.f32 %v484, %v1997
        %1999 = vmatmul.f32.gmra.mxu0 %v430
        %v2000 = vpop.f32.mrf.mxu0
        %v2001 = vadd.f32 %v484, %v2000
        %2002 = vmatmul.f32.gmra.mxu0 %v431
        %v2003 = vpop.f32.mrf.mxu0
        %v2004 = vadd.f32 %v484, %v2003
        %2005 = vmatmul.f32.gmra.mxu0 %v432
        %v2006 = vpop.f32.mrf.mxu0
        %v2007 = vadd.f32 %v484, %v2006
        %2008 = vmatmul.f32.gmra.mxu0 %v433
        %v2009 = vpop.f32.mrf.mxu0
        %v2010 = vadd.f32 %v484, %v2009
        %2011 = vmatmul.f32.gmra.mxu0 %v434
        %v2012 = vpop.f32.mrf.mxu0
        %v2013 = vadd.f32 %v484, %v2012
        %2014 = vmatmul.f32.gmra.mxu0 %v435
        %v2015 = vpop.f32.mrf.mxu0
        %v2016 = vadd.f32 %v484, %v2015
        %2017 = vmatmul.f32.gmra.mxu0 %v436
        %v2018 = vpop.f32.mrf.mxu0
        %v2019 = vadd.f32 %v484, %v2018
        %2020 = vmatmul.f32.gmra.mxu0 %v437
        %v2021 = vpop.f32.mrf.mxu0
        %v2022 = vadd.f32 %v484, %v2021
        %2023 = vmatmul.f32.gmra.mxu0 %v438
        %v2024 = vpop.f32.mrf.mxu0
        %v2025 = vadd.f32 %v484, %v2024
        %2026 = vmatmul.f32.gmra.mxu0 %v439
        %v2027 = vpop.f32.mrf.mxu0
        %v2028 = vadd.f32 %v484, %v2027
        %2029 = vmatmul.f32.gmra.mxu0 %v440
        %v2030 = vpop.f32.mrf.mxu0
        %v2031 = vadd.f32 %v484, %v2030
        %2032 = vmatmul.f32.gmra.mxu0 %v441
        %v2033 = vpop.f32.mrf.mxu0
        %v2034 = vadd.f32 %v484, %v2033
        %2035 = vmatmul.f32.gmra.mxu0 %v442
        %v2036 = vpop.f32.mrf.mxu0
        %v2037 = vadd.f32 %v484, %v2036
        %2038 = vmatmul.f32.gmra.mxu0 %v443
        %v2039 = vpop.f32.mrf.mxu0
        %v2040 = vadd.f32 %v484, %v2039
        %2041 = vmatmul.f32.gmra.mxu0 %v444
        %v2042 = vpop.f32.mrf.mxu0
        %v2043 = vadd.f32 %v484, %v2042
        %2044 = vmatmul.f32.gmra.mxu0 %v445
        %v2045 = vpop.f32.mrf.mxu0
        %v2046 = vadd.f32 %v484, %v2045
        %2047 = vmatmul.f32.gmra.mxu0 %v446
        %v2048 = vpop.f32.mrf.mxu0
        %v2049 = vadd.f32 %v484, %v2048
        %2050 = vmatmul.f32.gmra.mxu0 %v447
        %v2051 = vpop.f32.mrf.mxu0
        %v2052 = vadd.f32 %v484, %v2051
        %2053 = vmatmul.f32.gmra.mxu0 %v448
        %v2054 = vpop.f32.mrf.mxu0
        %v2055 = vadd.f32 %v484, %v2054
        %2056 = vdwg.mxu0
        %2057 = vst [vmem:[%s172] sm:$0xff] %v505
        %2058 = vst [vmem:[%s172 + $0x8] sm:$0xff] %v1290
        %2059 = vst [vmem:[%s172 + $0x10] sm:$0xff] %v508
        %2060 = vst [vmem:[%s172 + $0x18] sm:$0xff] %v1293
        %2061 = vst [vmem:[%s172 + $0x20] sm:$0xff] %v511
        %2062 = vst [vmem:[%s172 + $0x28] sm:$0xff] %v1296
        %2063 = vst [vmem:[%s172 + $0x30] sm:$0xff] %v514
        %2064 = vst [vmem:[%s172 + $0x38] sm:$0xff] %v1299
        %2065 = vst [vmem:[%s172 + $0x40] sm:$0xff] %v517
        %2066 = vst [vmem:[%s172 + $0x48] sm:$0xff] %v1302
        %2067 = vst [vmem:[%s172 + $0x50] sm:$0xff] %v520
        %2068 = vst [vmem:[%s172 + $0x58] sm:$0xff] %v1305
        %2069 = vst [vmem:[%s172 + $0x60] sm:$0xff] %v523
        %2070 = vst [vmem:[%s172 + $0x68] sm:$0xff] %v1308
        %2071 = vst [vmem:[%s172 + $0x70] sm:$0xff] %v526
        %2072 = vst [vmem:[%s172 + $0x78] sm:$0xff] %v1311
        %2073 = vst [vmem:[%s172 + $0x80] sm:$0xff] %v529
        %2074 = vst [vmem:[%s172 + $0x88] sm:$0xff] %v1314
        %2075 = vst [vmem:[%s172 + $0x90] sm:$0xff] %v532
        %2076 = vst [vmem:[%s172 + $0x98] sm:$0xff] %v1317
        %2077 = vst [vmem:[%s172 + $0xa0] sm:$0xff] %v535
        %2078 = vst [vmem:[%s172 + $0xa8] sm:$0xff] %v1320
        %2079 = vst [vmem:[%s172 + $0xb0] sm:$0xff] %v538
        %2080 = vst [vmem:[%s172 + $0xb8] sm:$0xff] %v1323
        %2081 = vst [vmem:[%s172 + $0xc0] sm:$0xff] %v541
        %2082 = vst [vmem:[%s172 + $0xc8] sm:$0xff] %v1326
        %2083 = vst [vmem:[%s172 + $0xd0] sm:$0xff] %v544
        %2084 = vst [vmem:[%s172 + $0xd8] sm:$0xff] %v1329
        %2085 = vst [vmem:[%s172 + $0xe0] sm:$0xff] %v547
        %2086 = vst [vmem:[%s172 + $0xe8] sm:$0xff] %v1332
        %2087 = vst [vmem:[%s172 + $0xf0] sm:$0xff] %v550
        %2088 = vst [vmem:[%s172 + $0xf8] sm:$0xff] %v1335
        %2089 = vst [vmem:[%s172 + $0x100] sm:$0xff] %v553
        %2090 = vst [vmem:[%s172 + $0x108] sm:$0xff] %v1338
        %2091 = vst [vmem:[%s172 + $0x110] sm:$0xff] %v556
        %2092 = vst [vmem:[%s172 + $0x118] sm:$0xff] %v1341
        %2093 = vst [vmem:[%s172 + $0x120] sm:$0xff] %v559
        %2094 = vst [vmem:[%s172 + $0x128] sm:$0xff] %v1344
        %2095 = vst [vmem:[%s172 + $0x130] sm:$0xff] %v562
        %2096 = vst [vmem:[%s172 + $0x138] sm:$0xff] %v1347
        %2097 = vst [vmem:[%s172 + $0x140] sm:$0xff] %v565
        %2098 = vst [vmem:[%s172 + $0x148] sm:$0xff] %v1350
        %2099 = vst [vmem:[%s172 + $0x150] sm:$0xff] %v568
        %2100 = vst [vmem:[%s172 + $0x158] sm:$0xff] %v1353
        %2101 = vst [vmem:[%s172 + $0x160] sm:$0xff] %v571
        %2102 = vst [vmem:[%s172 + $0x168] sm:$0xff] %v1356
        %2103 = vst [vmem:[%s172 + $0x170] sm:$0xff] %v574
        %2104 = vst [vmem:[%s172 + $0x178] sm:$0xff] %v1359
        %2105 = vst [vmem:[%s172 + $0x180] sm:$0xff] %v577
        %2106 = vst [vmem:[%s172 + $0x188] sm:$0xff] %v1362
        %2107 = vst [vmem:[%s172 + $0x190] sm:$0xff] %v580
        %2108 = vst [vmem:[%s172 + $0x198] sm:$0xff] %v1365
        %2109 = vst [vmem:[%s172 + $0x1a0] sm:$0xff] %v583
        %2110 = vst [vmem:[%s172 + $0x1a8] sm:$0xff] %v1368
        %2111 = vst [vmem:[%s172 + $0x1b0] sm:$0xff] %v586
        %2112 = vst [vmem:[%s172 + $0x1b8] sm:$0xff] %v1371
        %2113 = vst [vmem:[%s172 + $0x1c0] sm:$0xff] %v589
        %2114 = vst [vmem:[%s172 + $0x1c8] sm:$0xff] %v1374
        %2115 = vst [vmem:[%s172 + $0x1d0] sm:$0xff] %v592
        %2116 = vst [vmem:[%s172 + $0x1d8] sm:$0xff] %v1377
        %2117 = vst [vmem:[%s172 + $0x1e0] sm:$0xff] %v595
        %2118 = vst [vmem:[%s172 + $0x1e8] sm:$0xff] %v1380
        %2119 = vst [vmem:[%s172 + $0x1f0] sm:$0xff] %v598
        %2120 = vst [vmem:[%s172 + $0x1f8] sm:$0xff] %v1383
        %2121 = vst [vmem:[%s172 + $0x200] sm:$0xff] %v601
        %2122 = vst [vmem:[%s172 + $0x208] sm:$0xff] %v1386
        %2123 = vst [vmem:[%s172 + $0x210] sm:$0xff] %v604
        %2124 = vst [vmem:[%s172 + $0x218] sm:$0xff] %v1389
        %2125 = vst [vmem:[%s172 + $0x220] sm:$0xff] %v607
        %2126 = vst [vmem:[%s172 + $0x228] sm:$0xff] %v1392
        %2127 = vst [vmem:[%s172 + $0x230] sm:$0xff] %v610
        %2128 = vst [vmem:[%s172 + $0x238] sm:$0xff] %v1395
        %2129 = vst [vmem:[%s172 + $0x240] sm:$0xff] %v613
        %2130 = vst [vmem:[%s172 + $0x248] sm:$0xff] %v1398
        %2131 = vst [vmem:[%s172 + $0x250] sm:$0xff] %v616
        %2132 = vst [vmem:[%s172 + $0x258] sm:$0xff] %v1401
        %2133 = vst [vmem:[%s172 + $0x260] sm:$0xff] %v619
        %2134 = vst [vmem:[%s172 + $0x268] sm:$0xff] %v1404
        %2135 = vst [vmem:[%s172 + $0x270] sm:$0xff] %v622
        %2136 = vst [vmem:[%s172 + $0x278] sm:$0xff] %v1407
        %2137 = vst [vmem:[%s172 + $0x280] sm:$0xff] %v625
        %2138 = vst [vmem:[%s172 + $0x288] sm:$0xff] %v1410
        %2139 = vst [vmem:[%s172 + $0x290] sm:$0xff] %v628
        %2140 = vst [vmem:[%s172 + $0x298] sm:$0xff] %v1413
        %2141 = vst [vmem:[%s172 + $0x2a0] sm:$0xff] %v631
        %2142 = vst [vmem:[%s172 + $0x2a8] sm:$0xff] %v1416
        %2143 = vst [vmem:[%s172 + $0x2b0] sm:$0xff] %v634
        %2144 = vst [vmem:[%s172 + $0x2b8] sm:$0xff] %v1419
        %2145 = vst [vmem:[%s172 + $0x2c0] sm:$0xff] %v637
        %2146 = vst [vmem:[%s172 + $0x2c8] sm:$0xff] %v1422
        %2147 = vst [vmem:[%s172 + $0x2d0] sm:$0xff] %v640
        %2148 = vst [vmem:[%s172 + $0x2d8] sm:$0xff] %v1425
        %2149 = vst [vmem:[%s172 + $0x2e0] sm:$0xff] %v643
        %2150 = vst [vmem:[%s172 + $0x2e8] sm:$0xff] %v1428
        %2151 = vst [vmem:[%s172 + $0x2f0] sm:$0xff] %v646
        %2152 = vst [vmem:[%s172 + $0x2f8] sm:$0xff] %v1431
        %2153 = vst [vmem:[%s172 + $0x300] sm:$0xff] %v649
        %2154 = vst [vmem:[%s172 + $0x308] sm:$0xff] %v1434
        %2155 = vst [vmem:[%s172 + $0x310] sm:$0xff] %v652
        %2156 = vst [vmem:[%s172 + $0x318] sm:$0xff] %v1437
        %2157 = vst [vmem:[%s172 + $0x320] sm:$0xff] %v655
        %2158 = vst [vmem:[%s172 + $0x328] sm:$0xff] %v1440
        %2159 = vst [vmem:[%s172 + $0x330] sm:$0xff] %v658
        %2160 = vst [vmem:[%s172 + $0x338] sm:$0xff] %v1443
        %2161 = vst [vmem:[%s172 + $0x340] sm:$0xff] %v661
        %2162 = vst [vmem:[%s172 + $0x348] sm:$0xff] %v1446
        %2163 = vst [vmem:[%s172 + $0x350] sm:$0xff] %v664
        %2164 = vst [vmem:[%s172 + $0x358] sm:$0xff] %v1449
        %2165 = vst [vmem:[%s172 + $0x360] sm:$0xff] %v667
        %2166 = vst [vmem:[%s172 + $0x368] sm:$0xff] %v1452
        %2167 = vst [vmem:[%s172 + $0x370] sm:$0xff] %v670
        %2168 = vst [vmem:[%s172 + $0x378] sm:$0xff] %v1455
        %2169 = vst [vmem:[%s172 + $0x380] sm:$0xff] %v673
        %2170 = vst [vmem:[%s172 + $0x388] sm:$0xff] %v1458
        %2171 = vst [vmem:[%s172 + $0x390] sm:$0xff] %v676
        %2172 = vst [vmem:[%s172 + $0x398] sm:$0xff] %v1461
        %2173 = vst [vmem:[%s172 + $0x3a0] sm:$0xff] %v679
        %2174 = vst [vmem:[%s172 + $0x3a8] sm:$0xff] %v1464
        %2175 = vst [vmem:[%s172 + $0x3b0] sm:$0xff] %v682
        %2176 = vst [vmem:[%s172 + $0x3b8] sm:$0xff] %v1467
        %2177 = vst [vmem:[%s172 + $0x3c0] sm:$0xff] %v685
        %2178 = vst [vmem:[%s172 + $0x3c8] sm:$0xff] %v1470
        %2179 = vst [vmem:[%s172 + $0x3d0] sm:$0xff] %v688
        %2180 = vst [vmem:[%s172 + $0x3d8] sm:$0xff] %v1473
        %2181 = vst [vmem:[%s172 + $0x3e0] sm:$0xff] %v691
        %2182 = vst [vmem:[%s172 + $0x3e8] sm:$0xff] %v1476
        %2183 = vst [vmem:[%s172 + $0x3f0] sm:$0xff] %v694
        %2184 = vst [vmem:[%s172 + $0x3f8] sm:$0xff] %v1479
        %2185 = vst [vmem:[%s172 + $0x400] sm:$0xff] %v697
        %2186 = vst [vmem:[%s172 + $0x408] sm:$0xff] %v1482
        %2187 = vst [vmem:[%s172 + $0x410] sm:$0xff] %v700
        %2188 = vst [vmem:[%s172 + $0x418] sm:$0xff] %v1485
        %2189 = vst [vmem:[%s172 + $0x420] sm:$0xff] %v703
        %2190 = vst [vmem:[%s172 + $0x428] sm:$0xff] %v1488
        %2191 = vst [vmem:[%s172 + $0x430] sm:$0xff] %v706
        %2192 = vst [vmem:[%s172 + $0x438] sm:$0xff] %v1491
        %2193 = vst [vmem:[%s172 + $0x440] sm:$0xff] %v709
        %2194 = vst [vmem:[%s172 + $0x448] sm:$0xff] %v1494
        %2195 = vst [vmem:[%s172 + $0x450] sm:$0xff] %v712
        %2196 = vst [vmem:[%s172 + $0x458] sm:$0xff] %v1497
        %2197 = vst [vmem:[%s172 + $0x460] sm:$0xff] %v715
        %2198 = vst [vmem:[%s172 + $0x468] sm:$0xff] %v1500
        %2199 = vst [vmem:[%s172 + $0x470] sm:$0xff] %v718
        %2200 = vst [vmem:[%s172 + $0x478] sm:$0xff] %v1503
        %2201 = vst [vmem:[%s172 + $0x480] sm:$0xff] %v721
        %2202 = vst [vmem:[%s172 + $0x488] sm:$0xff] %v1506
        %2203 = vst [vmem:[%s172 + $0x490] sm:$0xff] %v724
        %2204 = vst [vmem:[%s172 + $0x498] sm:$0xff] %v1509
        %2205 = vst [vmem:[%s172 + $0x4a0] sm:$0xff] %v727
        %2206 = vst [vmem:[%s172 + $0x4a8] sm:$0xff] %v1512
        %2207 = vst [vmem:[%s172 + $0x4b0] sm:$0xff] %v730
        %2208 = vst [vmem:[%s172 + $0x4b8] sm:$0xff] %v1515
        %2209 = vst [vmem:[%s172 + $0x4c0] sm:$0xff] %v733
        %2210 = vst [vmem:[%s172 + $0x4c8] sm:$0xff] %v1518
        %2211 = vst [vmem:[%s172 + $0x4d0] sm:$0xff] %v736
        %2212 = vst [vmem:[%s172 + $0x4d8] sm:$0xff] %v1521
        %2213 = vst [vmem:[%s172 + $0x4e0] sm:$0xff] %v739
        %2214 = vst [vmem:[%s172 + $0x4e8] sm:$0xff] %v1524
        %2215 = vst [vmem:[%s172 + $0x4f0] sm:$0xff] %v742
        %2216 = vst [vmem:[%s172 + $0x4f8] sm:$0xff] %v1527
        %2217 = vst [vmem:[%s172 + $0x500] sm:$0xff] %v745
        %2218 = vst [vmem:[%s172 + $0x508] sm:$0xff] %v1530
        %2219 = vst [vmem:[%s172 + $0x510] sm:$0xff] %v748
        %2220 = vst [vmem:[%s172 + $0x518] sm:$0xff] %v1533
        %2221 = vst [vmem:[%s172 + $0x520] sm:$0xff] %v751
        %2222 = vst [vmem:[%s172 + $0x528] sm:$0xff] %v1536
        %2223 = vst [vmem:[%s172 + $0x530] sm:$0xff] %v754
        %2224 = vst [vmem:[%s172 + $0x538] sm:$0xff] %v1539
        %2225 = vst [vmem:[%s172 + $0x540] sm:$0xff] %v757
        %2226 = vst [vmem:[%s172 + $0x548] sm:$0xff] %v1542
        %2227 = vst [vmem:[%s172 + $0x550] sm:$0xff] %v760
        %2228 = vst [vmem:[%s172 + $0x558] sm:$0xff] %v1545
        %2229 = vst [vmem:[%s172 + $0x560] sm:$0xff] %v763
        %2230 = vst [vmem:[%s172 + $0x568] sm:$0xff] %v1548
        %2231 = vst [vmem:[%s172 + $0x570] sm:$0xff] %v766
        %2232 = vst [vmem:[%s172 + $0x578] sm:$0xff] %v1551
        %2233 = vst [vmem:[%s172 + $0x580] sm:$0xff] %v769
        %2234 = vst [vmem:[%s172 + $0x588] sm:$0xff] %v1554
        %2235 = vst [vmem:[%s172 + $0x590] sm:$0xff] %v772
        %2236 = vst [vmem:[%s172 + $0x598] sm:$0xff] %v1557
        %2237 = vst [vmem:[%s172 + $0x5a0] sm:$0xff] %v775
        %2238 = vst [vmem:[%s172 + $0x5a8] sm:$0xff] %v1560
        %2239 = vst [vmem:[%s172 + $0x5b0] sm:$0xff] %v778
        %2240 = vst [vmem:[%s172 + $0x5b8] sm:$0xff] %v1563
        %2241 = vst [vmem:[%s172 + $0x5c0] sm:$0xff] %v781
        %2242 = vst [vmem:[%s172 + $0x5c8] sm:$0xff] %v1566
        %2243 = vst [vmem:[%s172 + $0x5d0] sm:$0xff] %v784
        %2244 = vst [vmem:[%s172 + $0x5d8] sm:$0xff] %v1569
        %2245 = vst [vmem:[%s172 + $0x5e0] sm:$0xff] %v787
        %2246 = vst [vmem:[%s172 + $0x5e8] sm:$0xff] %v1572
        %2247 = vst [vmem:[%s172 + $0x5f0] sm:$0xff] %v790
        %2248 = vst [vmem:[%s172 + $0x5f8] sm:$0xff] %v1575
        %2249 = vst [vmem:[%s172 + $0x600] sm:$0xff] %v793
        %2250 = vst [vmem:[%s172 + $0x608] sm:$0xff] %v1578
        %2251 = vst [vmem:[%s172 + $0x610] sm:$0xff] %v796
        %2252 = vst [vmem:[%s172 + $0x618] sm:$0xff] %v1581
        %2253 = vst [vmem:[%s172 + $0x620] sm:$0xff] %v799
        %2254 = vst [vmem:[%s172 + $0x628] sm:$0xff] %v1584
        %2255 = vst [vmem:[%s172 + $0x630] sm:$0xff] %v802
        %2256 = vst [vmem:[%s172 + $0x638] sm:$0xff] %v1587
        %2257 = vst [vmem:[%s172 + $0x640] sm:$0xff] %v805
        %2258 = vst [vmem:[%s172 + $0x648] sm:$0xff] %v1590
        %2259 = vst [vmem:[%s172 + $0x650] sm:$0xff] %v808
        %2260 = vst [vmem:[%s172 + $0x658] sm:$0xff] %v1593
        %2261 = vst [vmem:[%s172 + $0x660] sm:$0xff] %v811
        %2262 = vst [vmem:[%s172 + $0x668] sm:$0xff] %v1596
        %2263 = vst [vmem:[%s172 + $0x670] sm:$0xff] %v814
        %2264 = vst [vmem:[%s172 + $0x678] sm:$0xff] %v1599
        %2265 = vst [vmem:[%s172 + $0x680] sm:$0xff] %v817
        %2266 = vst [vmem:[%s172 + $0x688] sm:$0xff] %v1602
        %2267 = vst [vmem:[%s172 + $0x690] sm:$0xff] %v820
        %2268 = vst [vmem:[%s172 + $0x698] sm:$0xff] %v1605
        %2269 = vst [vmem:[%s172 + $0x6a0] sm:$0xff] %v823
        %2270 = vst [vmem:[%s172 + $0x6a8] sm:$0xff] %v1608
        %2271 = vst [vmem:[%s172 + $0x6b0] sm:$0xff] %v826
        %2272 = vst [vmem:[%s172 + $0x6b8] sm:$0xff] %v1611
        %2273 = vst [vmem:[%s172 + $0x6c0] sm:$0xff] %v829
        %2274 = vst [vmem:[%s172 + $0x6c8] sm:$0xff] %v1614
        %2275 = vst [vmem:[%s172 + $0x6d0] sm:$0xff] %v832
        %2276 = vst [vmem:[%s172 + $0x6d8] sm:$0xff] %v1617
        %2277 = vst [vmem:[%s172 + $0x6e0] sm:$0xff] %v835
        %2278 = vst [vmem:[%s172 + $0x6e8] sm:$0xff] %v1620
        %2279 = vst [vmem:[%s172 + $0x6f0] sm:$0xff] %v838
        %2280 = vst [vmem:[%s172 + $0x6f8] sm:$0xff] %v1623
        %2281 = vst [vmem:[%s172 + $0x700] sm:$0xff] %v841
        %2282 = vst [vmem:[%s172 + $0x708] sm:$0xff] %v1626
        %2283 = vst [vmem:[%s172 + $0x710] sm:$0xff] %v844
        %2284 = vst [vmem:[%s172 + $0x718] sm:$0xff] %v1629
        %2285 = vst [vmem:[%s172 + $0x720] sm:$0xff] %v847
        %2286 = vst [vmem:[%s172 + $0x728] sm:$0xff] %v1632
        %2287 = vst [vmem:[%s172 + $0x730] sm:$0xff] %v850
        %2288 = vst [vmem:[%s172 + $0x738] sm:$0xff] %v1635
        %2289 = vst [vmem:[%s172 + $0x740] sm:$0xff] %v853
        %2290 = vst [vmem:[%s172 + $0x748] sm:$0xff] %v1638
        %2291 = vst [vmem:[%s172 + $0x750] sm:$0xff] %v856
        %2292 = vst [vmem:[%s172 + $0x758] sm:$0xff] %v1641
        %2293 = vst [vmem:[%s172 + $0x760] sm:$0xff] %v859
        %2294 = vst [vmem:[%s172 + $0x768] sm:$0xff] %v1644
        %2295 = vst [vmem:[%s172 + $0x770] sm:$0xff] %v862
        %2296 = vst [vmem:[%s172 + $0x778] sm:$0xff] %v1647
        %2297 = vst [vmem:[%s172 + $0x780] sm:$0xff] %v865
        %2298 = vst [vmem:[%s172 + $0x788] sm:$0xff] %v1650
        %2299 = vst [vmem:[%s172 + $0x790] sm:$0xff] %v868
        %2300 = vst [vmem:[%s172 + $0x798] sm:$0xff] %v1653
        %2301 = vst [vmem:[%s172 + $0x7a0] sm:$0xff] %v871
        %2302 = vst [vmem:[%s172 + $0x7a8] sm:$0xff] %v1656
        %2303 = vst [vmem:[%s172 + $0x7b0] sm:$0xff] %v874
        %2304 = vst [vmem:[%s172 + $0x7b8] sm:$0xff] %v1659
        %2305 = vst [vmem:[%s172 + $0x7c0] sm:$0xff] %v877
        %2306 = vst [vmem:[%s172 + $0x7c8] sm:$0xff] %v1662
        %2307 = vst [vmem:[%s172 + $0x7d0] sm:$0xff] %v880
        %2308 = vst [vmem:[%s172 + $0x7d8] sm:$0xff] %v1665
        %2309 = vst [vmem:[%s172 + $0x7e0] sm:$0xff] %v883
        %2310 = vst [vmem:[%s172 + $0x7e8] sm:$0xff] %v1668
        %2311 = vst [vmem:[%s172 + $0x7f0] sm:$0xff] %v886
        %2312 = vst [vmem:[%s172 + $0x7f8] sm:$0xff] %v1671
        %2313 = vst [vmem:[%s172 + $0x800] sm:$0xff] %v889
        %2314 = vst [vmem:[%s172 + $0x808] sm:$0xff] %v1674
        %2315 = vst [vmem:[%s172 + $0x810] sm:$0xff] %v892
        %2316 = vst [vmem:[%s172 + $0x818] sm:$0xff] %v1677
        %2317 = vst [vmem:[%s172 + $0x820] sm:$0xff] %v895
        %2318 = vst [vmem:[%s172 + $0x828] sm:$0xff] %v1680
        %2319 = vst [vmem:[%s172 + $0x830] sm:$0xff] %v898
        %2320 = vst [vmem:[%s172 + $0x838] sm:$0xff] %v1683
        %2321 = vst [vmem:[%s172 + $0x840] sm:$0xff] %v901
        %2322 = vst [vmem:[%s172 + $0x848] sm:$0xff] %v1686
        %2323 = vst [vmem:[%s172 + $0x850] sm:$0xff] %v904
        %2324 = vst [vmem:[%s172 + $0x858] sm:$0xff] %v1689
        %2325 = vst [vmem:[%s172 + $0x860] sm:$0xff] %v907
        %2326 = vst [vmem:[%s172 + $0x868] sm:$0xff] %v1692
        %2327 = vst [vmem:[%s172 + $0x870] sm:$0xff] %v910
        %2328 = vst [vmem:[%s172 + $0x878] sm:$0xff] %v1695
        %2329 = vst [vmem:[%s172 + $0x880] sm:$0xff] %v913
        %2330 = vst [vmem:[%s172 + $0x888] sm:$0xff] %v1698
        %2331 = vst [vmem:[%s172 + $0x890] sm:$0xff] %v916
        %2332 = vst [vmem:[%s172 + $0x898] sm:$0xff] %v1701
        %2333 = vst [vmem:[%s172 + $0x8a0] sm:$0xff] %v919
        %2334 = vst [vmem:[%s172 + $0x8a8] sm:$0xff] %v1704
        %2335 = vst [vmem:[%s172 + $0x8b0] sm:$0xff] %v922
        %2336 = vst [vmem:[%s172 + $0x8b8] sm:$0xff] %v1707
        %2337 = vst [vmem:[%s172 + $0x8c0] sm:$0xff] %v925
        %2338 = vst [vmem:[%s172 + $0x8c8] sm:$0xff] %v1710
        %2339 = vst [vmem:[%s172 + $0x8d0] sm:$0xff] %v928
        %2340 = vst [vmem:[%s172 + $0x8d8] sm:$0xff] %v1713
        %2341 = vst [vmem:[%s172 + $0x8e0] sm:$0xff] %v931
        %2342 = vst [vmem:[%s172 + $0x8e8] sm:$0xff] %v1716
        %2343 = vst [vmem:[%s172 + $0x8f0] sm:$0xff] %v934
        %2344 = vst [vmem:[%s172 + $0x8f8] sm:$0xff] %v1719
        %2345 = vst [vmem:[%s172 + $0x900] sm:$0xff] %v937
        %2346 = vst [vmem:[%s172 + $0x908] sm:$0xff] %v1722
        %2347 = vst [vmem:[%s172 + $0x910] sm:$0xff] %v940
        %2348 = vst [vmem:[%s172 + $0x918] sm:$0xff] %v1725
        %2349 = vst [vmem:[%s172 + $0x920] sm:$0xff] %v943
        %2350 = vst [vmem:[%s172 + $0x928] sm:$0xff] %v1728
        %2351 = vst [vmem:[%s172 + $0x930] sm:$0xff] %v946
        %2352 = vst [vmem:[%s172 + $0x938] sm:$0xff] %v1731
        %2353 = vst [vmem:[%s172 + $0x940] sm:$0xff] %v949
        %2354 = vst [vmem:[%s172 + $0x948] sm:$0xff] %v1734
        %2355 = vst [vmem:[%s172 + $0x950] sm:$0xff] %v952
        %2356 = vst [vmem:[%s172 + $0x958] sm:$0xff] %v1737
        %2357 = vst [vmem:[%s172 + $0x960] sm:$0xff] %v955
        %2358 = vst [vmem:[%s172 + $0x968] sm:$0xff] %v1740
        %2359 = vst [vmem:[%s172 + $0x970] sm:$0xff] %v958
        %2360 = vst [vmem:[%s172 + $0x978] sm:$0xff] %v1743
        %2361 = vst [vmem:[%s172 + $0x980] sm:$0xff] %v961
        %2362 = vst [vmem:[%s172 + $0x988] sm:$0xff] %v1746
        %2363 = vst [vmem:[%s172 + $0x990] sm:$0xff] %v964
        %2364 = vst [vmem:[%s172 + $0x998] sm:$0xff] %v1749
        %2365 = vst [vmem:[%s172 + $0x9a0] sm:$0xff] %v967
        %2366 = vst [vmem:[%s172 + $0x9a8] sm:$0xff] %v1752
        %2367 = vst [vmem:[%s172 + $0x9b0] sm:$0xff] %v970
        %2368 = vst [vmem:[%s172 + $0x9b8] sm:$0xff] %v1755
        %2369 = vst [vmem:[%s172 + $0x9c0] sm:$0xff] %v973
        %2370 = vst [vmem:[%s172 + $0x9c8] sm:$0xff] %v1758
        %2371 = vst [vmem:[%s172 + $0x9d0] sm:$0xff] %v976
        %2372 = vst [vmem:[%s172 + $0x9d8] sm:$0xff] %v1761
        %2373 = vst [vmem:[%s172 + $0x9e0] sm:$0xff] %v979
        %2374 = vst [vmem:[%s172 + $0x9e8] sm:$0xff] %v1764
        %2375 = vst [vmem:[%s172 + $0x9f0] sm:$0xff] %v982
        %2376 = vst [vmem:[%s172 + $0x9f8] sm:$0xff] %v1767
        %2377 = vst [vmem:[%s172 + $0xa00] sm:$0xff] %v985
        %2378 = vst [vmem:[%s172 + $0xa08] sm:$0xff] %v1770
        %2379 = vst [vmem:[%s172 + $0xa10] sm:$0xff] %v988
        %2380 = vst [vmem:[%s172 + $0xa18] sm:$0xff] %v1773
        %2381 = vst [vmem:[%s172 + $0xa20] sm:$0xff] %v991
        %2382 = vst [vmem:[%s172 + $0xa28] sm:$0xff] %v1776
        %2383 = vst [vmem:[%s172 + $0xa30] sm:$0xff] %v994
        %2384 = vst [vmem:[%s172 + $0xa38] sm:$0xff] %v1779
        %2385 = vst [vmem:[%s172 + $0xa40] sm:$0xff] %v997
        %2386 = vst [vmem:[%s172 + $0xa48] sm:$0xff] %v1782
        %2387 = vst [vmem:[%s172 + $0xa50] sm:$0xff] %v1000
        %2388 = vst [vmem:[%s172 + $0xa58] sm:$0xff] %v1785
        %2389 = vst [vmem:[%s172 + $0xa60] sm:$0xff] %v1003
        %2390 = vst [vmem:[%s172 + $0xa68] sm:$0xff] %v1788
        %2391 = vst [vmem:[%s172 + $0xa70] sm:$0xff] %v1006
        %2392 = vst [vmem:[%s172 + $0xa78] sm:$0xff] %v1791
        %2393 = vst [vmem:[%s172 + $0xa80] sm:$0xff] %v1009
        %2394 = vst [vmem:[%s172 + $0xa88] sm:$0xff] %v1794
        %2395 = vst [vmem:[%s172 + $0xa90] sm:$0xff] %v1012
        %2396 = vst [vmem:[%s172 + $0xa98] sm:$0xff] %v1797
        %2397 = vst [vmem:[%s172 + $0xaa0] sm:$0xff] %v1015
        %2398 = vst [vmem:[%s172 + $0xaa8] sm:$0xff] %v1800
        %2399 = vst [vmem:[%s172 + $0xab0] sm:$0xff] %v1018
        %2400 = vst [vmem:[%s172 + $0xab8] sm:$0xff] %v1803
        %2401 = vst [vmem:[%s172 + $0xac0] sm:$0xff] %v1021
        %2402 = vst [vmem:[%s172 + $0xac8] sm:$0xff] %v1806
        %2403 = vst [vmem:[%s172 + $0xad0] sm:$0xff] %v1024
        %2404 = vst [vmem:[%s172 + $0xad8] sm:$0xff] %v1809
        %2405 = vst [vmem:[%s172 + $0xae0] sm:$0xff] %v1027
        %2406 = vst [vmem:[%s172 + $0xae8] sm:$0xff] %v1812
        %2407 = vst [vmem:[%s172 + $0xaf0] sm:$0xff] %v1030
        %2408 = vst [vmem:[%s172 + $0xaf8] sm:$0xff] %v1815
        %2409 = vst [vmem:[%s172 + $0xb00] sm:$0xff] %v1033
        %2410 = vst [vmem:[%s172 + $0xb08] sm:$0xff] %v1818
        %2411 = vst [vmem:[%s172 + $0xb10] sm:$0xff] %v1036
        %2412 = vst [vmem:[%s172 + $0xb18] sm:$0xff] %v1821
        %2413 = vst [vmem:[%s172 + $0xb20] sm:$0xff] %v1039
        %2414 = vst [vmem:[%s172 + $0xb28] sm:$0xff] %v1824
        %2415 = vst [vmem:[%s172 + $0xb30] sm:$0xff] %v1042
        %2416 = vst [vmem:[%s172 + $0xb38] sm:$0xff] %v1827
        %2417 = vst [vmem:[%s172 + $0xb40] sm:$0xff] %v1045
        %2418 = vst [vmem:[%s172 + $0xb48] sm:$0xff] %v1830
        %2419 = vst [vmem:[%s172 + $0xb50] sm:$0xff] %v1048
        %2420 = vst [vmem:[%s172 + $0xb58] sm:$0xff] %v1833
        %2421 = vst [vmem:[%s172 + $0xb60] sm:$0xff] %v1051
        %2422 = vst [vmem:[%s172 + $0xb68] sm:$0xff] %v1836
        %2423 = vst [vmem:[%s172 + $0xb70] sm:$0xff] %v1054
        %2424 = vst [vmem:[%s172 + $0xb78] sm:$0xff] %v1839
        %2425 = vst [vmem:[%s172 + $0xb80] sm:$0xff] %v1057
        %2426 = vst [vmem:[%s172 + $0xb88] sm:$0xff] %v1842
        %2427 = vst [vmem:[%s172 + $0xb90] sm:$0xff] %v1060
        %2428 = vst [vmem:[%s172 + $0xb98] sm:$0xff] %v1845
        %2429 = vst [vmem:[%s172 + $0xba0] sm:$0xff] %v1063
        %2430 = vst [vmem:[%s172 + $0xba8] sm:$0xff] %v1848
        %2431 = vst [vmem:[%s172 + $0xbb0] sm:$0xff] %v1066
        %2432 = vst [vmem:[%s172 + $0xbb8] sm:$0xff] %v1851
        %2433 = vst [vmem:[%s172 + $0xbc0] sm:$0xff] %v1069
        %2434 = vst [vmem:[%s172 + $0xbc8] sm:$0xff] %v1854
        %2435 = vst [vmem:[%s172 + $0xbd0] sm:$0xff] %v1072
        %2436 = vst [vmem:[%s172 + $0xbd8] sm:$0xff] %v1857
        %2437 = vst [vmem:[%s172 + $0xbe0] sm:$0xff] %v1075
        %2438 = vst [vmem:[%s172 + $0xbe8] sm:$0xff] %v1860
        %2439 = vst [vmem:[%s172 + $0xbf0] sm:$0xff] %v1078
        %2440 = vst [vmem:[%s172 + $0xbf8] sm:$0xff] %v1863
        %2441 = vst [vmem:[%s172 + $0xc00] sm:$0xff] %v1081
        %2442 = vst [vmem:[%s172 + $0xc08] sm:$0xff] %v1866
        %2443 = vst [vmem:[%s172 + $0xc10] sm:$0xff] %v1084
        %2444 = vst [vmem:[%s172 + $0xc18] sm:$0xff] %v1869
        %2445 = vst [vmem:[%s172 + $0xc20] sm:$0xff] %v1087
        %2446 = vst [vmem:[%s172 + $0xc28] sm:$0xff] %v1872
        %2447 = vst [vmem:[%s172 + $0xc30] sm:$0xff] %v1090
        %2448 = vst [vmem:[%s172 + $0xc38] sm:$0xff] %v1875
        %2449 = vst [vmem:[%s172 + $0xc40] sm:$0xff] %v1093
        %2450 = vst [vmem:[%s172 + $0xc48] sm:$0xff] %v1878
        %2451 = vst [vmem:[%s172 + $0xc50] sm:$0xff] %v1096
        %2452 = vst [vmem:[%s172 + $0xc58] sm:$0xff] %v1881
        %2453 = vst [vmem:[%s172 + $0xc60] sm:$0xff] %v1099
        %2454 = vst [vmem:[%s172 + $0xc68] sm:$0xff] %v1884
        %2455 = vst [vmem:[%s172 + $0xc70] sm:$0xff] %v1102
        %2456 = vst [vmem:[%s172 + $0xc78] sm:$0xff] %v1887
        %2457 = vst [vmem:[%s172 + $0xc80] sm:$0xff] %v1105
        %2458 = vst [vmem:[%s172 + $0xc88] sm:$0xff] %v1890
        %2459 = vst [vmem:[%s172 + $0xc90] sm:$0xff] %v1108
        %2460 = vst [vmem:[%s172 + $0xc98] sm:$0xff] %v1893
        %2461 = vst [vmem:[%s172 + $0xca0] sm:$0xff] %v1111
        %2462 = vst [vmem:[%s172 + $0xca8] sm:$0xff] %v1896
        %2463 = vst [vmem:[%s172 + $0xcb0] sm:$0xff] %v1114
        %2464 = vst [vmem:[%s172 + $0xcb8] sm:$0xff] %v1899
        %2465 = vst [vmem:[%s172 + $0xcc0] sm:$0xff] %v1117
        %2466 = vst [vmem:[%s172 + $0xcc8] sm:$0xff] %v1902
        %2467 = vst [vmem:[%s172 + $0xcd0] sm:$0xff] %v1120
        %2468 = vst [vmem:[%s172 + $0xcd8] sm:$0xff] %v1905
        %2469 = vst [vmem:[%s172 + $0xce0] sm:$0xff] %v1123
        %2470 = vst [vmem:[%s172 + $0xce8] sm:$0xff] %v1908
        %2471 = vst [vmem:[%s172 + $0xcf0] sm:$0xff] %v1126
        %2472 = vst [vmem:[%s172 + $0xcf8] sm:$0xff] %v1911
        %2473 = vst [vmem:[%s172 + $0xd00] sm:$0xff] %v1129
        %2474 = vst [vmem:[%s172 + $0xd08] sm:$0xff] %v1914
        %2475 = vst [vmem:[%s172 + $0xd10] sm:$0xff] %v1132
        %2476 = vst [vmem:[%s172 + $0xd18] sm:$0xff] %v1917
        %2477 = vst [vmem:[%s172 + $0xd20] sm:$0xff] %v1135
        %2478 = vst [vmem:[%s172 + $0xd28] sm:$0xff] %v1920
        %2479 = vst [vmem:[%s172 + $0xd30] sm:$0xff] %v1138
        %2480 = vst [vmem:[%s172 + $0xd38] sm:$0xff] %v1923
        %2481 = vst [vmem:[%s172 + $0xd40] sm:$0xff] %v1141
        %2482 = vst [vmem:[%s172 + $0xd48] sm:$0xff] %v1926
        %2483 = vst [vmem:[%s172 + $0xd50] sm:$0xff] %v1144
        %2484 = vst [vmem:[%s172 + $0xd58] sm:$0xff] %v1929
        %2485 = vst [vmem:[%s172 + $0xd60] sm:$0xff] %v1147
        %2486 = vst [vmem:[%s172 + $0xd68] sm:$0xff] %v1932
        %2487 = vst [vmem:[%s172 + $0xd70] sm:$0xff] %v1150
        %2488 = vst [vmem:[%s172 + $0xd78] sm:$0xff] %v1935
        %2489 = vst [vmem:[%s172 + $0xd80] sm:$0xff] %v1153
        %2490 = vst [vmem:[%s172 + $0xd88] sm:$0xff] %v1938
        %2491 = vst [vmem:[%s172 + $0xd90] sm:$0xff] %v1156
        %2492 = vst [vmem:[%s172 + $0xd98] sm:$0xff] %v1941
        %2493 = vst [vmem:[%s172 + $0xda0] sm:$0xff] %v1159
        %2494 = vst [vmem:[%s172 + $0xda8] sm:$0xff] %v1944
        %2495 = vst [vmem:[%s172 + $0xdb0] sm:$0xff] %v1162
        %2496 = vst [vmem:[%s172 + $0xdb8] sm:$0xff] %v1947
        %2497 = vst [vmem:[%s172 + $0xdc0] sm:$0xff] %v1165
        %2498 = vst [vmem:[%s172 + $0xdc8] sm:$0xff] %v1950
        %2499 = vst [vmem:[%s172 + $0xdd0] sm:$0xff] %v1168
        %2500 = vst [vmem:[%s172 + $0xdd8] sm:$0xff] %v1953
        %2501 = vst [vmem:[%s172 + $0xde0] sm:$0xff] %v1171
        %2502 = vst [vmem:[%s172 + $0xde8] sm:$0xff] %v1956
        %2503 = vst [vmem:[%s172 + $0xdf0] sm:$0xff] %v1174
        %2504 = vst [vmem:[%s172 + $0xdf8] sm:$0xff] %v1959
        %2505 = vst [vmem:[%s172 + $0xe00] sm:$0xff] %v1177
        %2506 = vst [vmem:[%s172 + $0xe08] sm:$0xff] %v1962
        %2507 = vst [vmem:[%s172 + $0xe10] sm:$0xff] %v1180
        %2508 = vst [vmem:[%s172 + $0xe18] sm:$0xff] %v1965
        %2509 = vst [vmem:[%s172 + $0xe20] sm:$0xff] %v1183
        %2510 = vst [vmem:[%s172 + $0xe28] sm:$0xff] %v1968
        %2511 = vst [vmem:[%s172 + $0xe30] sm:$0xff] %v1186
        %2512 = vst [vmem:[%s172 + $0xe38] sm:$0xff] %v1971
        %2513 = vst [vmem:[%s172 + $0xe40] sm:$0xff] %v1189
        %2514 = vst [vmem:[%s172 + $0xe48] sm:$0xff] %v1974
        %2515 = vst [vmem:[%s172 + $0xe50] sm:$0xff] %v1192
        %2516 = vst [vmem:[%s172 + $0xe58] sm:$0xff] %v1977
        %2517 = vst [vmem:[%s172 + $0xe60] sm:$0xff] %v1195
        %2518 = vst [vmem:[%s172 + $0xe68] sm:$0xff] %v1980
        %2519 = vst [vmem:[%s172 + $0xe70] sm:$0xff] %v1198
        %2520 = vst [vmem:[%s172 + $0xe78] sm:$0xff] %v1983
        %2521 = vst [vmem:[%s172 + $0xe80] sm:$0xff] %v1201
        %2522 = vst [vmem:[%s172 + $0xe88] sm:$0xff] %v1986
        %2523 = vst [vmem:[%s172 + $0xe90] sm:$0xff] %v1204
        %2524 = vst [vmem:[%s172 + $0xe98] sm:$0xff] %v1989
        %2525 = vst [vmem:[%s172 + $0xea0] sm:$0xff] %v1207
        %2526 = vst [vmem:[%s172 + $0xea8] sm:$0xff] %v1992
        %2527 = vst [vmem:[%s172 + $0xeb0] sm:$0xff] %v1210
        %2528 = vst [vmem:[%s172 + $0xeb8] sm:$0xff] %v1995
        %2529 = vst [vmem:[%s172 + $0xec0] sm:$0xff] %v1213
        %2530 = vst [vmem:[%s172 + $0xec8] sm:$0xff] %v1998
        %2531 = vst [vmem:[%s172 + $0xed0] sm:$0xff] %v1216
        %2532 = vst [vmem:[%s172 + $0xed8] sm:$0xff] %v2001
        %2533 = vst [vmem:[%s172 + $0xee0] sm:$0xff] %v1219
        %2534 = vst [vmem:[%s172 + $0xee8] sm:$0xff] %v2004
        %2535 = vst [vmem:[%s172 + $0xef0] sm:$0xff] %v1222
        %2536 = vst [vmem:[%s172 + $0xef8] sm:$0xff] %v2007
        %2537 = vst [vmem:[%s172 + $0xf00] sm:$0xff] %v1225
        %2538 = vst [vmem:[%s172 + $0xf08] sm:$0xff] %v2010
        %2539 = vst [vmem:[%s172 + $0xf10] sm:$0xff] %v1228
        %2540 = vst [vmem:[%s172 + $0xf18] sm:$0xff] %v2013
        %2541 = vst [vmem:[%s172 + $0xf20] sm:$0xff] %v1231
        %2542 = vst [vmem:[%s172 + $0xf28] sm:$0xff] %v2016
        %2543 = vst [vmem:[%s172 + $0xf30] sm:$0xff] %v1234
        %2544 = vst [vmem:[%s172 + $0xf38] sm:$0xff] %v2019
        %2545 = vst [vmem:[%s172 + $0xf40] sm:$0xff] %v1237
        %2546 = vst [vmem:[%s172 + $0xf48] sm:$0xff] %v2022
        %2547 = vst [vmem:[%s172 + $0xf50] sm:$0xff] %v1240
        %2548 = vst [vmem:[%s172 + $0xf58] sm:$0xff] %v2025
        %2549 = vst [vmem:[%s172 + $0xf60] sm:$0xff] %v1243
        %2550 = vst [vmem:[%s172 + $0xf68] sm:$0xff] %v2028
        %2551 = vst [vmem:[%s172 + $0xf70] sm:$0xff] %v1246
        %2552 = vst [vmem:[%s172 + $0xf78] sm:$0xff] %v2031
        %2553 = vst [vmem:[%s172 + $0xf80] sm:$0xff] %v1249
        %2554 = vst [vmem:[%s172 + $0xf88] sm:$0xff] %v2034
        %2555 = vst [vmem:[%s172 + $0xf90] sm:$0xff] %v1252
        %2556 = vst [vmem:[%s172 + $0xf98] sm:$0xff] %v2037
        %2557 = vst [vmem:[%s172 + $0xfa0] sm:$0xff] %v1255
        %2558 = vst [vmem:[%s172 + $0xfa8] sm:$0xff] %v2040
        %2559 = vst [vmem:[%s172 + $0xfb0] sm:$0xff] %v1258
        %2560 = vst [vmem:[%s172 + $0xfb8] sm:$0xff] %v2043
        %2561 = vst [vmem:[%s172 + $0xfc0] sm:$0xff] %v1261
        %2562 = vst [vmem:[%s172 + $0xfc8] sm:$0xff] %v2046
        %2563 = vst [vmem:[%s172 + $0xfd0] sm:$0xff] %v1264
        %2564 = vst [vmem:[%s172 + $0xfd8] sm:$0xff] %v2049
        %2565 = vst [vmem:[%s172 + $0xfe0] sm:$0xff] %v1267
        %2566 = vst [vmem:[%s172 + $0xfe8] sm:$0xff] %v2052
        %2567 = vst [vmem:[%s172 + $0xff0] sm:$0xff] %v1270
        %2568 = vst [vmem:[%s172 + $0xff8] sm:$0xff] %v2055
        %s2569 = sand.u32 %s90, 1
        %s2570 = sand.u32 %s90, 1
        %s2571 = smul.addr %s2570, 4096
        %s2572 = scalar_lea.vmem [#allocation2], %s2571
        // Predicated region
        $region33: #{template_pair_embedder.1} parent=31 // pred_check
          %p2573 = pneg %p100
        $region34: #{template_pair_embedder.1} parent=31 // pred_check_branch
          %2575 = sbr.rel (%p2573) target = $region36
        $region35: #{template_pair_embedder.1} parent=31 // pred_region
          %s2576 = smul.u32 256, %s14
          %s2577 = ssub.s32 320, %s2576
          %p2578 = scmp.lt.s32.totalorder %s2577, 256
          %s2579 = scalar_select %p2578, %s2577, 256
          %s2580 = smul.u32 8, %s2579
          %s2581 = smul.u32 %s2580, 2
          %p2582 = scmp.ne.s32.totalorder 0, %s2581
          %s2583 = smul.addr %s2576, 2
          %s2584 = smul.addr %s2583, 8
          %s2585 = scalar_lea.vmem %s3, %s2584
          // Predicated region
          $region37: #{template_pair_embedder.1} parent=35 // pred_check
            %p2586 = pneg %p2582
          $region38: #{template_pair_embedder.1} parent=35 // pred_check_branch
            %2588 = sbr.rel (%p2586) target = $region40
          $region39: #{template_pair_embedder.1} parent=35 // pred_region
            // Predicated region
            $region41: #{template_pair_embedder.1} parent=39 // pred_check
              _
            $region42: #{template_pair_embedder.1} parent=39 // pred_check_branch
              %2590 = sbr.rel (0) target = $region44
            $region43: #{template_pair_embedder.1} parent=39 // pred_region
              %s2591 = sshrl.u32 %s2579, 4
              // While loop
              $region45: #{template_pair_embedder.1} parent=43 // loop_pre_header
                _
              $region46: #{template_pair_embedder.1} parent=43 // loop_header
                %s2593 = sphi 0, %s2595
                %p2594 = scmp.ge.s32.totalorder %s2593, %s2591
                %s2598 = sphi 0, %s2667
                %s2599 = sphi %s2572, %s2670
                %s2600 = sphi %s2585, %s2671
              $region47: #{template_pair_embedder.1} parent=43 // loop_header_branch
                %2597 = sbr.rel (%p2594) target = $region51
              $region48: #{template_pair_embedder.1} parent=43 // loop_body
                %v2601 = vld [vmem:[%s2599] sm:$0xff]
                %2602 = vst [vmem:[%s2600] sm:$0xff] %v2601
                %v2603 = vld [vmem:[%s2599 + $0x10] sm:$0xff]
                %2604 = vst [vmem:[%s2600 + $0x10] sm:$0xff] %v2603
                %v2605 = vld [vmem:[%s2599 + $0x20] sm:$0xff]
                %2606 = vst [vmem:[%s2600 + $0x20] sm:$0xff] %v2605
                %v2607 = vld [vmem:[%s2599 + $0x30] sm:$0xff]
                %2608 = vst [vmem:[%s2600 + $0x30] sm:$0xff] %v2607
                %v2609 = vld [vmem:[%s2599 + $0x40] sm:$0xff]
                %2610 = vst [vmem:[%s2600 + $0x40] sm:$0xff] %v2609
                %v2611 = vld [vmem:[%s2599 + $0x50] sm:$0xff]
                %2612 = vst [vmem:[%s2600 + $0x50] sm:$0xff] %v2611
                %v2613 = vld [vmem:[%s2599 + $0x60] sm:$0xff]
                %2614 = vst [vmem:[%s2600 + $0x60] sm:$0xff] %v2613
                %v2615 = vld [vmem:[%s2599 + $0x70] sm:$0xff]
                %2616 = vst [vmem:[%s2600 + $0x70] sm:$0xff] %v2615
                %v2617 = vld [vmem:[%s2599 + $0x80] sm:$0xff]
                %2618 = vst [vmem:[%s2600 + $0x80] sm:$0xff] %v2617
                %v2619 = vld [vmem:[%s2599 + $0x90] sm:$0xff]
                %2620 = vst [vmem:[%s2600 + $0x90] sm:$0xff] %v2619
                %v2621 = vld [vmem:[%s2599 + $0xa0] sm:$0xff]
                %2622 = vst [vmem:[%s2600 + $0xa0] sm:$0xff] %v2621
                %v2623 = vld [vmem:[%s2599 + $0xb0] sm:$0xff]
                %2624 = vst [vmem:[%s2600 + $0xb0] sm:$0xff] %v2623
                %v2625 = vld [vmem:[%s2599 + $0xc0] sm:$0xff]
                %2626 = vst [vmem:[%s2600 + $0xc0] sm:$0xff] %v2625
                %v2627 = vld [vmem:[%s2599 + $0xd0] sm:$0xff]
                %2628 = vst [vmem:[%s2600 + $0xd0] sm:$0xff] %v2627
                %v2629 = vld [vmem:[%s2599 + $0xe0] sm:$0xff]
                %2630 = vst [vmem:[%s2600 + $0xe0] sm:$0xff] %v2629
                %v2631 = vld [vmem:[%s2599 + $0xf0] sm:$0xff]
                %2632 = vst [vmem:[%s2600 + $0xf0] sm:$0xff] %v2631
                %v2633 = vld [vmem:[%s2599 + $0x8] sm:$0xff]
                %2634 = vst [vmem:[%s2600 + $0x8] sm:$0xff] %v2633
                %v2635 = vld [vmem:[%s2599 + $0x18] sm:$0xff]
                %2636 = vst [vmem:[%s2600 + $0x18] sm:$0xff] %v2635
                %v2637 = vld [vmem:[%s2599 + $0x28] sm:$0xff]
                %2638 = vst [vmem:[%s2600 + $0x28] sm:$0xff] %v2637
                %v2639 = vld [vmem:[%s2599 + $0x38] sm:$0xff]
                %2640 = vst [vmem:[%s2600 + $0x38] sm:$0xff] %v2639
                %v2641 = vld [vmem:[%s2599 + $0x48] sm:$0xff]
                %2642 = vst [vmem:[%s2600 + $0x48] sm:$0xff] %v2641
                %v2643 = vld [vmem:[%s2599 + $0x58] sm:$0xff]
                %2644 = vst [vmem:[%s2600 + $0x58] sm:$0xff] %v2643
                %v2645 = vld [vmem:[%s2599 + $0x68] sm:$0xff]
                %2646 = vst [vmem:[%s2600 + $0x68] sm:$0xff] %v2645
                %v2647 = vld [vmem:[%s2599 + $0x78] sm:$0xff]
                %2648 = vst [vmem:[%s2600 + $0x78] sm:$0xff] %v2647
                %v2649 = vld [vmem:[%s2599 + $0x88] sm:$0xff]
                %2650 = vst [vmem:[%s2600 + $0x88] sm:$0xff] %v2649
                %v2651 = vld [vmem:[%s2599 + $0x98] sm:$0xff]
                %2652 = vst [vmem:[%s2600 + $0x98] sm:$0xff] %v2651
                %v2653 = vld [vmem:[%s2599 + $0xa8] sm:$0xff]
                %2654 = vst [vmem:[%s2600 + $0xa8] sm:$0xff] %v2653
                %v2655 = vld [vmem:[%s2599 + $0xb8] sm:$0xff]
                %2656 = vst [vmem:[%s2600 + $0xb8] sm:$0xff] %v2655
                %v2657 = vld [vmem:[%s2599 + $0xc8] sm:$0xff]
                %2658 = vst [vmem:[%s2600 + $0xc8] sm:$0xff] %v2657
                %v2659 = vld [vmem:[%s2599 + $0xd8] sm:$0xff]
                %2660 = vst [vmem:[%s2600 + $0xd8] sm:$0xff] %v2659
                %v2661 = vld [vmem:[%s2599 + $0xe8] sm:$0xff]
                %2662 = vst [vmem:[%s2600 + $0xe8] sm:$0xff] %v2661
                %v2663 = vld [vmem:[%s2599 + $0xf8] sm:$0xff]
                %2664 = vst [vmem:[%s2600 + $0xf8] sm:$0xff] %v2663
                %s2665 = sadd.s32 1, %s2598
                %p2666 = scmp.ge.s32.totalorder %s2665, %s2591
                %s2667 = scalar_select %p2666, 0, %s2665
                %s2668 = smul.u32 %s2667, 256
                %s2669 = smul.u32 %s2667, 256
                %s2670 = scalar_lea.vmem %s2572, %s2668 [#allocation2]
                %s2671 = scalar_lea.vmem %s2585, %s2669
              $region49: #{template_pair_embedder.1} parent=43 // loop_footer
                %s2595 = sadd.s32 %s2593, 1
              $region50: #{template_pair_embedder.1} parent=43 // loop_footer_branch
                %2592 = sbr.rel target = $region46
              $region51: #{template_pair_embedder.1} parent=43 // loop_exit
                _
              %s2672 = sshrl.u32 %s2579, 4
              %s2673 = sand.u32 %s2579, 15
              %s2674 = smul.u32 %s2672, 16
              %s2675 = smul.u32 16, %s2674
              %s2676 = scalar_lea.vmem %s2572, %s2675 [#allocation2]
              %s2677 = smul.u32 16, %s2674
              %s2678 = scalar_lea.vmem %s2585, %s2677
              // While loop
              $region52: #{template_pair_embedder.1} parent=43 // loop_pre_header
                _
              $region53: #{template_pair_embedder.1} parent=43 // loop_header
                %s2680 = sphi 0, %s2682
                %p2681 = scmp.ge.s32.totalorder %s2680, %s2673
                %s2685 = sphi 0, %s2694
                %s2686 = sphi %s2676, %s2697
                %s2687 = sphi %s2678, %s2698
              $region54: #{template_pair_embedder.1} parent=43 // loop_header_branch
                %2684 = sbr.rel (%p2681) target = $region58
              $region55: #{template_pair_embedder.1} parent=43 // loop_body
                %v2688 = vld [vmem:[%s2686] sm:$0xff]
                %2689 = vst [vmem:[%s2687] sm:$0xff] %v2688
                %v2690 = vld [vmem:[%s2686 + $0x8] sm:$0xff]
                %2691 = vst [vmem:[%s2687 + $0x8] sm:$0xff] %v2690
                %s2692 = sadd.s32 1, %s2685
                %p2693 = scmp.ge.s32.totalorder %s2692, %s2673
                %s2694 = scalar_select %p2693, 0, %s2692
                %s2695 = smul.u32 %s2694, 16
                %s2696 = smul.u32 %s2694, 16
                %s2697 = scalar_lea.vmem %s2676, %s2695 [#allocation2]
                %s2698 = scalar_lea.vmem %s2678, %s2696
              $region56: #{template_pair_embedder.1} parent=43 // loop_footer
                %s2682 = sadd.s32 %s2680, 1
              $region57: #{template_pair_embedder.1} parent=43 // loop_footer_branch
                %2679 = sbr.rel target = $region53
              $region58: #{template_pair_embedder.1} parent=43 // loop_exit
                _
            $region44: #{template_pair_embedder.1} parent=39 // pred_fallthru
              _
            // Predicated region
            $region59: #{template_pair_embedder.1} parent=39 // pred_check
              _
            $region60: #{template_pair_embedder.1} parent=39 // pred_check_branch
              %2700 = sbr.rel target = $region62
            $region61: #{template_pair_embedder.1} parent=39 // pred_region
              _
            $region62: #{template_pair_embedder.1} parent=39 // pred_fallthru
              _
          $region40: #{template_pair_embedder.1} parent=35 // pred_fallthru
            _
          %2701 = vnop
        $region36: #{template_pair_embedder.1} parent=31 // pred_fallthru
          _
      $region32: #{template_pair_embedder.1} parent=5 // pred_fallthru
        _
      %p2702 = scmp.le.s32.totalorder 2, %s9
      // Predicated region
      $region63: #{template_pair_embedder.1} parent=5 // pred_check
        %p2703 = pneg %p2702
      $region64: #{template_pair_embedder.1} parent=5 // pred_check_branch
        %2705 = sbr.rel (%p2703) target = $region66
      $region65: #{template_pair_embedder.1} parent=5 // pred_region
        %s2706 = ssub.s32 %s9, 2
        // Predicated region
        $region67: #{template_pair_embedder.1} parent=65 // pred_check
          %p2707 = pneg %p106
        $region68: #{template_pair_embedder.1} parent=65 // pred_check_branch
          %2709 = sbr.rel (%p2707) target = $region70
        $region69: #{template_pair_embedder.1} parent=65 // pred_region
          %s2710 = sand.u32 %s91, 1
          %s2711 = sand.u32 %s91, 1
          %s2712 = smul.addr %s2711, 4096
          %s2713 = scalar_lea.vmem [#allocation2], %s2712
        $region70: #{template_pair_embedder.1} parent=65 // pred_fallthru
          _
      $region66: #{template_pair_embedder.1} parent=5 // pred_fallthru
        _
    $region6: #{template_pair_embedder.1} parent=1 // loop_footer
      %s13 = sadd.s32 1, %s9
    $region7: #{template_pair_embedder.1} parent=1 // loop_footer_branch
      %8 = sbr.rel target = $region3
    $region8: #{template_pair_embedder.1} parent=1 // loop_exit
      _

</llo_original>
